<compile_context>
chip_gen: v5e
topology: v5e:2x2
jax: 0.10.0
libtpu: 0.0.40
codegen_flags: <defaults>
</compile_context>

<pallas_src>
import functools

import jax
import jax.numpy as jnp
from jax import lax
from jax.experimental import pallas as pl
from jax.experimental.pallas import tpu as pltpu

EPS = 1e-5  # InstanceNorm2d default eps


def _unet_up_kernel(xcd_ref, w_ref, valid_ref, skip_ref, o_ref,
                    xd_scr, p_scr, z_scr, *,
                    H, W, Cin, Cout, shifts):
    """One grid step = one sample n.

    xcd_ref:   (1, Cin, H+2, 2*(W+2))   f32  column-dilated, zero-padded x
    w_ref:     (Cout, 16*Cin)           f32  per-tap weight matrix (VMEM resident)
    valid_ref: (1, Lout)                f32  1.0 on real output columns, 0.0 on the
                                             4 row-pitch padding columns (resident)
    skip_ref:  (1, Cskip, 2H, 2W)       f32  skip connection
    o_ref:     (1, Cout+Cskip, 2H, 2W)  f32  final fused output (conv || skip)

    xd_scr: (Cin, 2*(H+2)*Wd)  row+column dilated, flattened input
    p_scr:  (16*Cin, Lout)     16-tap patch matrix (matmul RHS)
    z_scr:  (Cout, Lout)       normalized conv output, row pitch Wd
    """
    Wd = 2 * (W + 2)            # dilated / matmul-output row pitch (2W real + 4 pad cols)
    Lout = 2 * H * Wd           # matmul lane extent (all 2H output rows)
    two_w = 2 * W

    # ---- finish the 2x dilation in VMEM (rows) and flatten -------------------
    xd_scr[...] = jnp.zeros_like(xd_scr)
    for r in range(H + 2):
        xd_scr[:, pl.ds(2 * r * Wd, Wd)] = xcd_ref[0, :, r, :]

    # ---- build the 16-tap patch matrix: one static shifted slice per tap -----
    for t, s in enumerate(shifts):
        p_scr[t * Cin:(t + 1) * Cin, :] = xd_scr[:, pl.ds(s, Lout)]

    # ---- one MXU matmul: (Cout, 16*Cin) x (16*Cin, Lout) ---------------------
    z = jnp.dot(w_ref[...], p_scr[...],
                preferred_element_type=jnp.float32)            # (Cout, Lout)

    # ---- InstanceNorm (stats masked over the pad columns) + ReLU -------------
    valid = valid_ref[...]                                     # (1, Lout)
    inv_n = 1.0 / float(2 * H * two_w)                         # true pixel count
    mean = jnp.sum(z * valid, axis=1, keepdims=True) * inv_n   # (Cout, 1)
    d = z - mean
    dm = d * valid
    var = jnp.sum(dm * dm, axis=1, keepdims=True) * inv_n      # (Cout, 1)
    z_scr[...] = jnp.maximum(d * lax.rsqrt(var + EPS), 0.0)

    # ---- store the 2W valid columns of every output row (phase interleave is
    #      already done by the matmul), then copy skip into the channel tail ---
    for oh in range(2 * H):
        o_ref[0, 0:Cout, oh, :] = z_scr[:, pl.ds(oh * Wd, two_w)]
    csk = skip_ref.shape[1]
    o_ref[0, Cout:Cout + csk, :, :] = skip_ref[0]


def unet_up_forward(x, skip, w_t):
    """x: (N, Cin, H, W); skip: (N, Cskip, 2H, 2W); w_t: (Cin, Cout, 4, 4) torch layout."""
    N, Cin, H, W = x.shape
    Cskip = skip.shape[1]
    Cout = w_t.shape[1]
    Wd = 2 * (W + 2)
    Lout = 2 * H * Wd
    Ctot = Cout + Cskip

    x32 = x.astype(jnp.float32)
    skip32 = skip.astype(jnp.float32)
    w32 = w_t.astype(jnp.float32)

    # Column-dilated, zero-padded x (the only pre-kernel HBM intermediate, ~2.3x of x):
    # xcd[n, ci, R, 2*C] = x_pad[n, ci, R, C], odd columns zero.  Row dilation happens
    # inside the kernel.
    xcd = lax.pad(x32, jnp.float32(0.0),
                  ((0, 0, 0), (0, 0, 0), (1, 1, 0), (2, 3, 1)))   # (N, Cin, H+2, Wd)

    # Per-tap weight matrix and matching static flat shifts.  Output phase (ph, pw),
    # tap (a, b): y[2i+ph, 2j+pw] += w_t[ci, co, 3-ph-2a, 3-pw-2b] * x_pad[ci, i+ph+a, j+pw+b].
    shifts, rows = [], []
    for ph in range(2):
        for pw in range(2):
            for a in range(2):
                for b in range(2):
                    shifts.append((ph + 2 * a) * Wd + (pw + 2 * b))
                    rows.append(w32[:, :, 3 - ph - 2 * a, 3 - pw - 2 * b])  # (Cin, Cout)
    w_mat = jnp.concatenate(rows, axis=0).T                     # (Cout, 16*Cin), f32

    # Lane-validity mask: each output row of pitch Wd carries 2W real columns.
    col = jnp.arange(Lout, dtype=jnp.int32) % Wd
    valid = (col < 2 * W).astype(jnp.float32).reshape(1, Lout)

    kernel = functools.partial(_unet_up_kernel, H=H, W=W, Cin=Cin, Cout=Cout,
                               shifts=tuple(shifts))

    out = pl.pallas_call(
        kernel,
        out_shape=jax.ShapeDtypeStruct((N, Ctot, 2 * H, 2 * W), jnp.float32),
        grid_spec=pltpu.PrefetchScalarGridSpec(
            num_scalar_prefetch=0,
            grid=(N,),
            in_specs=[
                pl.BlockSpec((1, Cin, H + 2, Wd), lambda n: (n, 0, 0, 0)),
                pl.BlockSpec((Cout, 16 * Cin), lambda n: (0, 0)),      # resident
                pl.BlockSpec((1, Lout), lambda n: (0, 0)),             # resident
                pl.BlockSpec((1, Cskip, 2 * H, 2 * W), lambda n: (n, 0, 0, 0)),
            ],
            out_specs=pl.BlockSpec((1, Ctot, 2 * H, 2 * W), lambda n: (n, 0, 0, 0)),
            scratch_shapes=[
                pltpu.VMEM((Cin, 2 * (H + 2) * Wd), jnp.float32),  # dilated flat input
                pltpu.VMEM((16 * Cin, Lout), jnp.float32),         # patch matrix
                pltpu.VMEM((Cout, Lout), jnp.float32),             # normalized output
            ],
        ),
        compiler_params=pltpu.CompilerParams(
            dimension_semantics=("parallel",),
            vmem_limit_bytes=48 * 1024 * 1024,   # safe on v5e/v6e/v7x; we use ~1.2 MB/step
        ),
    )(xcd, w_mat, valid, skip32)
    return out


def reference(x, skip, w_t):
    # Independent pure-JAX (f32) reference using XLA's dilated conv.
    w_flip_oihw = jnp.transpose(w_t[:, :, ::-1, ::-1], (1, 0, 2, 3))  # (Cout, Cin, 4, 4)
    y = lax.conv_general_dilated(
        x, w_flip_oihw, window_strides=(1, 1),
        padding=((2, 2), (2, 2)), lhs_dilation=(2, 2),
        dimension_numbers=("NCHW", "OIHW", "NCHW"))
    mean = y.mean(axis=(2, 3), keepdims=True)
    var = ((y - mean) ** 2).mean(axis=(2, 3), keepdims=True)
    y = jnp.maximum((y - mean) * lax.rsqrt(var + EPS), 0.0)
    return jnp.concatenate([y, skip], axis=1)


if __name__ == "__main__":
    # Small deterministic setup: in_size=8, out_size=8, H=W=16, skip has 8 channels.
    N, Cin, Cout, H, W = 2, 8, 8, 16, 16
    key = jax.random.PRNGKey(0)
    kx, ks, kw = jax.random.split(key, 3)

    x = jax.random.normal(kx, (N, Cin, H, W), dtype=jnp.float32)
    skip = jax.random.normal(ks, (N, Cout, 2 * H, 2 * W), dtype=jnp.float32)
    # ConvTranspose2d weight, PyTorch layout (in_channels, out_channels, kH, kW)
    w_t = 0.1 * jax.random.normal(kw, (Cin, Cout, 4, 4), dtype=jnp.float32)

    out = jax.block_until_ready(unet_up_forward(x, skip, w_t))
    ref = jax.block_until_ready(reference(x, skip, w_t))

    assert out.shape == (N, 2 * Cout, 2 * H, 2 * W), out.shape
    err = float(jnp.max(jnp.abs(out - ref)))
    # All-f32 data path; tolerance covers MXU precision differences vs. XLA's conv.
    assert jnp.allclose(out, ref, atol=5e-2, rtol=5e-2), err

    print("KERNEL_OK")
</pallas_src>

<mosaic_0001>
module attributes {stable_mosaic.version = 11 : i64} {
  func.func @_unet_up_kernel(%arg0: i32, %arg1: memref<1x8x18x36xf32, #tpu.memory_space<vmem>>, %arg2: memref<8x128xf32, #tpu.memory_space<vmem>>, %arg3: memref<1x1152xf32, #tpu.memory_space<vmem>>, %arg4: memref<1x8x32x32xf32, #tpu.memory_space<vmem>>, %arg5: memref<1x16x32x32xf32, #tpu.memory_space<vmem>>, %arg6: memref<8x1296xf32, #tpu.memory_space<vmem>>, %arg7: memref<128x1152xf32, #tpu.memory_space<vmem>>, %arg8: memref<8x1152xf32, #tpu.memory_space<vmem>>) attributes {dimension_semantics = [#tpu.dimension_semantics<parallel>], iteration_bounds = array<i64: 2>, scalar_prefetch = 0 : i64, scratch_operands = 3 : i64, tpu.core_type = #tpu.core_type<tc>, window_params = [{transform_indices = @transform_0, window_bounds = array<i64: 1, 8, 18, 36>}, {pipeline_mode = #tpu.pipeline_mode<synchronous>, transform_indices = @transform_1, window_bounds = array<i64: 8, 128>}, {pipeline_mode = #tpu.pipeline_mode<synchronous>, transform_indices = @transform_2, window_bounds = array<i64: 1, 1152>}, {transform_indices = @transform_3, window_bounds = array<i64: 1, 8, 32, 32>}, {transform_indices = @transform_4, window_bounds = array<i64: 1, 16, 32, 32>}]} {
    %cst = arith.constant 0.000000e+00 : f32
    %0 = vector.broadcast %cst : f32 to vector<8x1296xf32>
    %c0 = arith.constant 0 : index
    %c0_0 = arith.constant 0 : index
    %1 = vector.load %arg6[%c0, %c0_0] : memref<8x1296xf32, #tpu.memory_space<vmem>>, vector<8x1296xf32>
    tpu.vector_store %arg6[%c0, %c0_0], %0 {strides = array<i32>} : memref<8x1296xf32, #tpu.memory_space<vmem>>, vector<8x1296xf32>,
    %c0_1 = arith.constant 0 : index
    %c0_2 = arith.constant 0 : index
    %c0_3 = arith.constant 0 : index
    %c0_4 = arith.constant 0 : index
    %2 = vector.load %arg1[%c0_1, %c0_2, %c0_3, %c0_4] : memref<1x8x18x36xf32, #tpu.memory_space<vmem>>, vector<1x8x1x36xf32>
    %3 = vector.shape_cast %2 : vector<1x8x1x36xf32> to vector<8x36xf32>
    %c0_5 = arith.constant 0 : index
    %c0_6 = arith.constant 0 : index
    %4 = vector.load %arg6[%c0_5, %c0_6] : memref<8x1296xf32, #tpu.memory_space<vmem>>, vector<8x36xf32>
    tpu.vector_store %arg6[%c0_5, %c0_6], %3 {strides = array<i32>} : memref<8x1296xf32, #tpu.memory_space<vmem>>, vector<8x36xf32>,
    %c0_7 = arith.constant 0 : index
    %c0_8 = arith.constant 0 : index
    %c1 = arith.constant 1 : index
    %c0_9 = arith.constant 0 : index
    %5 = vector.load %arg1[%c0_7, %c0_8, %c1, %c0_9] : memref<1x8x18x36xf32, #tpu.memory_space<vmem>>, vector<1x8x1x36xf32>
    %6 = vector.shape_cast %5 : vector<1x8x1x36xf32> to vector<8x36xf32>
    %c0_10 = arith.constant 0 : index
    %c72 = arith.constant 72 : index
    %7 = vector.load %arg6[%c0_10, %c72] : memref<8x1296xf32, #tpu.memory_space<vmem>>, vector<8x36xf32>
    tpu.vector_store %arg6[%c0_10, %c72], %6 {strides = array<i32>} : memref<8x1296xf32, #tpu.memory_space<vmem>>, vector<8x36xf32>,
    %c0_11 = arith.constant 0 : index
    %c0_12 = arith.constant 0 : index
    %c2 = arith.constant 2 : index
    %c0_13 = arith.constant 0 : index
    %8 = vector.load %arg1[%c0_11, %c0_12, %c2, %c0_13] : memref<1x8x18x36xf32, #tpu.memory_space<vmem>>, vector<1x8x1x36xf32>
    %9 = vector.shape_cast %8 : vector<1x8x1x36xf32> to vector<8x36xf32>
    %c0_14 = arith.constant 0 : index
    %c144 = arith.constant 144 : index
    %10 = vector.load %arg6[%c0_14, %c144] : memref<8x1296xf32, #tpu.memory_space<vmem>>, vector<8x36xf32>
    tpu.vector_store %arg6[%c0_14, %c144], %9 {strides = array<i32>} : memref<8x1296xf32, #tpu.memory_space<vmem>>, vector<8x36xf32>,
    %c0_15 = arith.constant 0 : index
    %c0_16 = arith.constant 0 : index
    %c3 = arith.constant 3 : index
    %c0_17 = arith.constant 0 : index
    %11 = vector.load %arg1[%c0_15, %c0_16, %c3, %c0_17] : memref<1x8x18x36xf32, #tpu.memory_space<vmem>>, vector<1x8x1x36xf32>
    %12 = vector.shape_cast %11 : vector<1x8x1x36xf32> to vector<8x36xf32>
    %c0_18 = arith.constant 0 : index
    %c216 = arith.constant 216 : index
    %13 = vector.load %arg6[%c0_18, %c216] : memref<8x1296xf32, #tpu.memory_space<vmem>>, vector<8x36xf32>
    tpu.vector_store %arg6[%c0_18, %c216], %12 {strides = array<i32>} : memref<8x1296xf32, #tpu.memory_space<vmem>>, vector<8x36xf32>,
    %c0_19 = arith.constant 0 : index
    %c0_20 = arith.constant 0 : index
    %c4 = arith.constant 4 : index
    %c0_21 = arith.constant 0 : index
    %14 = vector.load %arg1[%c0_19, %c0_20, %c4, %c0_21] : memref<1x8x18x36xf32, #tpu.memory_space<vmem>>, vector<1x8x1x36xf32>
    %15 = vector.shape_cast %14 : vector<1x8x1x36xf32> to vector<8x36xf32>
    %c0_22 = arith.constant 0 : index
    %c288 = arith.constant 288 : index
    %16 = vector.load %arg6[%c0_22, %c288] : memref<8x1296xf32, #tpu.memory_space<vmem>>, vector<8x36xf32>
    tpu.vector_store %arg6[%c0_22, %c288], %15 {strides = array<i32>} : memref<8x1296xf32, #tpu.memory_space<vmem>>, vector<8x36xf32>,
    %c0_23 = arith.constant 0 : index
    %c0_24 = arith.constant 0 : index
    %c5 = arith.constant 5 : index
    %c0_25 = arith.constant 0 : index
    %17 = vector.load %arg1[%c0_23, %c0_24, %c5, %c0_25] : memref<1x8x18x36xf32, #tpu.memory_space<vmem>>, vector<1x8x1x36xf32>
    %18 = vector.shape_cast %17 : vector<1x8x1x36xf32> to vector<8x36xf32>
    %c0_26 = arith.constant 0 : index
    %c360 = arith.constant 360 : index
    %19 = vector.load %arg6[%c0_26, %c360] : memref<8x1296xf32, #tpu.memory_space<vmem>>, vector<8x36xf32>
    tpu.vector_store %arg6[%c0_26, %c360], %18 {strides = array<i32>} : memref<8x1296xf32, #tpu.memory_space<vmem>>, vector<8x36xf32>,
    %c0_27 = arith.constant 0 : index
    %c0_28 = arith.constant 0 : index
    %c6 = arith.constant 6 : index
    %c0_29 = arith.constant 0 : index
    %20 = vector.load %arg1[%c0_27, %c0_28, %c6, %c0_29] : memref<1x8x18x36xf32, #tpu.memory_space<vmem>>, vector<1x8x1x36xf32>
    %21 = vector.shape_cast %20 : vector<1x8x1x36xf32> to vector<8x36xf32>
    %c0_30 = arith.constant 0 : index
    %c432 = arith.constant 432 : index
    %22 = vector.load %arg6[%c0_30, %c432] : memref<8x1296xf32, #tpu.memory_space<vmem>>, vector<8x36xf32>
    tpu.vector_store %arg6[%c0_30, %c432], %21 {strides = array<i32>} : memref<8x1296xf32, #tpu.memory_space<vmem>>, vector<8x36xf32>,
    %c0_31 = arith.constant 0 : index
    %c0_32 = arith.constant 0 : index
    %c7 = arith.constant 7 : index
    %c0_33 = arith.constant 0 : index
    %23 = vector.load %arg1[%c0_31, %c0_32, %c7, %c0_33] : memref<1x8x18x36xf32, #tpu.memory_space<vmem>>, vector<1x8x1x36xf32>
    %24 = vector.shape_cast %23 : vector<1x8x1x36xf32> to vector<8x36xf32>
    %c0_34 = arith.constant 0 : index
    %c504 = arith.constant 504 : index
    %25 = vector.load %arg6[%c0_34, %c504] : memref<8x1296xf32, #tpu.memory_space<vmem>>, vector<8x36xf32>
    tpu.vector_store %arg6[%c0_34, %c504], %24 {strides = array<i32>} : memref<8x1296xf32, #tpu.memory_space<vmem>>, vector<8x36xf32>,
    %c0_35 = arith.constant 0 : index
    %c0_36 = arith.constant 0 : index
    %c8 = arith.constant 8 : index
    %c0_37 = arith.constant 0 : index
    %26 = vector.load %arg1[%c0_35, %c0_36, %c8, %c0_37] : memref<1x8x18x36xf32, #tpu.memory_space<vmem>>, vector<1x8x1x36xf32>
    %27 = vector.shape_cast %26 : vector<1x8x1x36xf32> to vector<8x36xf32>
    %c0_38 = arith.constant 0 : index
    %c576 = arith.constant 576 : index
    %28 = vector.load %arg6[%c0_38, %c576] : memref<8x1296xf32, #tpu.memory_space<vmem>>, vector<8x36xf32>
    tpu.vector_store %arg6[%c0_38, %c576], %27 {strides = array<i32>} : memref<8x1296xf32, #tpu.memory_space<vmem>>, vector<8x36xf32>,
    %c0_39 = arith.constant 0 : index
    %c0_40 = arith.constant 0 : index
    %c9 = arith.constant 9 : index
    %c0_41 = arith.constant 0 : index
    %29 = vector.load %arg1[%c0_39, %c0_40, %c9, %c0_41] : memref<1x8x18x36xf32, #tpu.memory_space<vmem>>, vector<1x8x1x36xf32>
    %30 = vector.shape_cast %29 : vector<1x8x1x36xf32> to vector<8x36xf32>
    %c0_42 = arith.constant 0 : index
    %c648 = arith.constant 648 : index
    %31 = vector.load %arg6[%c0_42, %c648] : memref<8x1296xf32, #tpu.memory_space<vmem>>, vector<8x36xf32>
    tpu.vector_store %arg6[%c0_42, %c648], %30 {strides = array<i32>} : memref<8x1296xf32, #tpu.memory_space<vmem>>, vector<8x36xf32>,
    %c0_43 = arith.constant 0 : index
    %c0_44 = arith.constant 0 : index
    %c10 = arith.constant 10 : index
    %c0_45 = arith.constant 0 : index
    %32 = vector.load %arg1[%c0_43, %c0_44, %c10, %c0_45] : memref<1x8x18x36xf32, #tpu.memory_space<vmem>>, vector<1x8x1x36xf32>
    %33 = vector.shape_cast %32 : vector<1x8x1x36xf32> to vector<8x36xf32>
    %c0_46 = arith.constant 0 : index
    %c720 = arith.constant 720 : index
    %34 = vector.load %arg6[%c0_46, %c720] : memref<8x1296xf32, #tpu.memory_space<vmem>>, vector<8x36xf32>
    tpu.vector_store %arg6[%c0_46, %c720], %33 {strides = array<i32>} : memref<8x1296xf32, #tpu.memory_space<vmem>>, vector<8x36xf32>,
    %c0_47 = arith.constant 0 : index
    %c0_48 = arith.constant 0 : index
    %c11 = arith.constant 11 : index
    %c0_49 = arith.constant 0 : index
    %35 = vector.load %arg1[%c0_47, %c0_48, %c11, %c0_49] : memref<1x8x18x36xf32, #tpu.memory_space<vmem>>, vector<1x8x1x36xf32>
    %36 = vector.shape_cast %35 : vector<1x8x1x36xf32> to vector<8x36xf32>
    %c0_50 = arith.constant 0 : index
    %c792 = arith.constant 792 : index
    %37 = vector.load %arg6[%c0_50, %c792] : memref<8x1296xf32, #tpu.memory_space<vmem>>, vector<8x36xf32>
    tpu.vector_store %arg6[%c0_50, %c792], %36 {strides = array<i32>} : memref<8x1296xf32, #tpu.memory_space<vmem>>, vector<8x36xf32>,
    %c0_51 = arith.constant 0 : index
    %c0_52 = arith.constant 0 : index
    %c12 = arith.constant 12 : index
    %c0_53 = arith.constant 0 : index
    %38 = vector.load %arg1[%c0_51, %c0_52, %c12, %c0_53] : memref<1x8x18x36xf32, #tpu.memory_space<vmem>>, vector<1x8x1x36xf32>
    %39 = vector.shape_cast %38 : vector<1x8x1x36xf32> to vector<8x36xf32>
    %c0_54 = arith.constant 0 : index
    %c864 = arith.constant 864 : index
    %40 = vector.load %arg6[%c0_54, %c864] : memref<8x1296xf32, #tpu.memory_space<vmem>>, vector<8x36xf32>
    tpu.vector_store %arg6[%c0_54, %c864], %39 {strides = array<i32>} : memref<8x1296xf32, #tpu.memory_space<vmem>>, vector<8x36xf32>,
    %c0_55 = arith.constant 0 : index
    %c0_56 = arith.constant 0 : index
    %c13 = arith.constant 13 : index
    %c0_57 = arith.constant 0 : index
    %41 = vector.load %arg1[%c0_55, %c0_56, %c13, %c0_57] : memref<1x8x18x36xf32, #tpu.memory_space<vmem>>, vector<1x8x1x36xf32>
    %42 = vector.shape_cast %41 : vector<1x8x1x36xf32> to vector<8x36xf32>
    %c0_58 = arith.constant 0 : index
    %c936 = arith.constant 936 : index
    %43 = vector.load %arg6[%c0_58, %c936] : memref<8x1296xf32, #tpu.memory_space<vmem>>, vector<8x36xf32>
    tpu.vector_store %arg6[%c0_58, %c936], %42 {strides = array<i32>} : memref<8x1296xf32, #tpu.memory_space<vmem>>, vector<8x36xf32>,
    %c0_59 = arith.constant 0 : index
    %c0_60 = arith.constant 0 : index
    %c14 = arith.constant 14 : index
    %c0_61 = arith.constant 0 : index
    %44 = vector.load %arg1[%c0_59, %c0_60, %c14, %c0_61] : memref<1x8x18x36xf32, #tpu.memory_space<vmem>>, vector<1x8x1x36xf32>
    %45 = vector.shape_cast %44 : vector<1x8x1x36xf32> to vector<8x36xf32>
    %c0_62 = arith.constant 0 : index
    %c1008 = arith.constant 1008 : index
    %46 = vector.load %arg6[%c0_62, %c1008] : memref<8x1296xf32, #tpu.memory_space<vmem>>, vector<8x36xf32>
    tpu.vector_store %arg6[%c0_62, %c1008], %45 {strides = array<i32>} : memref<8x1296xf32, #tpu.memory_space<vmem>>, vector<8x36xf32>,
    %c0_63 = arith.constant 0 : index
    %c0_64 = arith.constant 0 : index
    %c15 = arith.constant 15 : index
    %c0_65 = arith.constant 0 : index
    %47 = vector.load %arg1[%c0_63, %c0_64, %c15, %c0_65] : memref<1x8x18x36xf32, #tpu.memory_space<vmem>>, vector<1x8x1x36xf32>
    %48 = vector.shape_cast %47 : vector<1x8x1x36xf32> to vector<8x36xf32>
    %c0_66 = arith.constant 0 : index
    %c1080 = arith.constant 1080 : index
    %49 = vector.load %arg6[%c0_66, %c1080] : memref<8x1296xf32, #tpu.memory_space<vmem>>, vector<8x36xf32>
    tpu.vector_store %arg6[%c0_66, %c1080], %48 {strides = array<i32>} : memref<8x1296xf32, #tpu.memory_space<vmem>>, vector<8x36xf32>,
    %c0_67 = arith.constant 0 : index
    %c0_68 = arith.constant 0 : index
    %c16 = arith.constant 16 : index
    %c0_69 = arith.constant 0 : index
    %50 = vector.load %arg1[%c0_67, %c0_68, %c16, %c0_69] : memref<1x8x18x36xf32, #tpu.memory_space<vmem>>, vector<1x8x1x36xf32>
    %51 = vector.shape_cast %50 : vector<1x8x1x36xf32> to vector<8x36xf32>
    %c0_70 = arith.constant 0 : index
    %c1152 = arith.constant 1152 : index
    %52 = vector.load %arg6[%c0_70, %c1152] : memref<8x1296xf32, #tpu.memory_space<vmem>>, vector<8x36xf32>
    tpu.vector_store %arg6[%c0_70, %c1152], %51 {strides = array<i32>} : memref<8x1296xf32, #tpu.memory_space<vmem>>, vector<8x36xf32>,
    %c0_71 = arith.constant 0 : index
    %c0_72 = arith.constant 0 : index
    %c17 = arith.constant 17 : index
    %c0_73 = arith.constant 0 : index
    %53 = vector.load %arg1[%c0_71, %c0_72, %c17, %c0_73] : memref<1x8x18x36xf32, #tpu.memory_space<vmem>>, vector<1x8x1x36xf32>
    %54 = vector.shape_cast %53 : vector<1x8x1x36xf32> to vector<8x36xf32>
    %c0_74 = arith.constant 0 : index
    %c1224 = arith.constant 1224 : index
    %55 = vector.load %arg6[%c0_74, %c1224] : memref<8x1296xf32, #tpu.memory_space<vmem>>, vector<8x36xf32>
    tpu.vector_store %arg6[%c0_74, %c1224], %54 {strides = array<i32>} : memref<8x1296xf32, #tpu.memory_space<vmem>>, vector<8x36xf32>,
    %c0_75 = arith.constant 0 : index
    %c0_76 = arith.constant 0 : index
    %56 = vector.load %arg6[%c0_75, %c0_76] : memref<8x1296xf32, #tpu.memory_space<vmem>>, vector<8x1152xf32>
    %c0_77 = arith.constant 0 : index
    %c0_78 = arith.constant 0 : index
    %57 = vector.load %arg7[%c0_77, %c0_78] : memref<128x1152xf32, #tpu.memory_space<vmem>>, vector<8x1152xf32>
    tpu.vector_store %arg7[%c0_77, %c0_78], %56 {strides = array<i32>} : memref<128x1152xf32, #tpu.memory_space<vmem>>, vector<8x1152xf32>,
    %c0_79 = arith.constant 0 : index
    %c2_80 = arith.constant 2 : index
    %58 = vector.load %arg6[%c0_79, %c2_80] : memref<8x1296xf32, #tpu.memory_space<vmem>>, vector<8x1152xf32>
    %c8_81 = arith.constant 8 : index
    %c0_82 = arith.constant 0 : index
    %59 = vector.load %arg7[%c8_81, %c0_82] : memref<128x1152xf32, #tpu.memory_space<vmem>>, vector<8x1152xf32>
    tpu.vector_store %arg7[%c8_81, %c0_82], %58 {strides = array<i32>} : memref<128x1152xf32, #tpu.memory_space<vmem>>, vector<8x1152xf32>,
    %c0_83 = arith.constant 0 : index
    %c72_84 = arith.constant 72 : index
    %60 = vector.load %arg6[%c0_83, %c72_84] : memref<8x1296xf32, #tpu.memory_space<vmem>>, vector<8x1152xf32>
    %c16_85 = arith.constant 16 : index
    %c0_86 = arith.constant 0 : index
    %61 = vector.load %arg7[%c16_85, %c0_86] : memref<128x1152xf32, #tpu.memory_space<vmem>>, vector<8x1152xf32>
    tpu.vector_store %arg7[%c16_85, %c0_86], %60 {strides = array<i32>} : memref<128x1152xf32, #tpu.memory_space<vmem>>, vector<8x1152xf32>,
    %c0_87 = arith.constant 0 : index
    %c74 = arith.constant 74 : index
    %62 = vector.load %arg6[%c0_87, %c74] : memref<8x1296xf32, #tpu.memory_space<vmem>>, vector<8x1152xf32>
    %c24 = arith.constant 24 : index
    %c0_88 = arith.constant 0 : index
    %63 = vector.load %arg7[%c24, %c0_88] : memref<128x1152xf32, #tpu.memory_space<vmem>>, vector<8x1152xf32>
    tpu.vector_store %arg7[%c24, %c0_88], %62 {strides = array<i32>} : memref<128x1152xf32, #tpu.memory_space<vmem>>, vector<8x1152xf32>,
    %c0_89 = arith.constant 0 : index
    %c1_90 = arith.constant 1 : index
    %64 = vector.load %arg6[%c0_89, %c1_90] : memref<8x1296xf32, #tpu.memory_space<vmem>>, vector<8x1152xf32>
    %c32 = arith.constant 32 : index
    %c0_91 = arith.constant 0 : index
    %65 = vector.load %arg7[%c32, %c0_91] : memref<128x1152xf32, #tpu.memory_space<vmem>>, vector<8x1152xf32>
    tpu.vector_store %arg7[%c32, %c0_91], %64 {strides = array<i32>} : memref<128x1152xf32, #tpu.memory_space<vmem>>, vector<8x1152xf32>,
    %c0_92 = arith.constant 0 : index
    %c3_93 = arith.constant 3 : index
    %66 = vector.load %arg6[%c0_92, %c3_93] : memref<8x1296xf32, #tpu.memory_space<vmem>>, vector<8x1152xf32>
    %c40 = arith.constant 40 : index
    %c0_94 = arith.constant 0 : index
    %67 = vector.load %arg7[%c40, %c0_94] : memref<128x1152xf32, #tpu.memory_space<vmem>>, vector<8x1152xf32>
    tpu.vector_store %arg7[%c40, %c0_94], %66 {strides = array<i32>} : memref<128x1152xf32, #tpu.memory_space<vmem>>, vector<8x1152xf32>,
    %c0_95 = arith.constant 0 : index
    %c73 = arith.constant 73 : index
    %68 = vector.load %arg6[%c0_95, %c73] : memref<8x1296xf32, #tpu.memory_space<vmem>>, vector<8x1152xf32>
    %c48 = arith.constant 48 : index
    %c0_96 = arith.constant 0 : index
    %69 = vector.load %arg7[%c48, %c0_96] : memref<128x1152xf32, #tpu.memory_space<vmem>>, vector<8x1152xf32>
    tpu.vector_store %arg7[%c48, %c0_96], %68 {strides = array<i32>} : memref<128x1152xf32, #tpu.memory_space<vmem>>, vector<8x1152xf32>,
    %c0_97 = arith.constant 0 : index
    %c75 = arith.constant 75 : index
    %70 = vector.load %arg6[%c0_97, %c75] : memref<8x1296xf32, #tpu.memory_space<vmem>>, vector<8x1152xf32>
    %c56 = arith.constant 56 : index
    %c0_98 = arith.constant 0 : index
    %71 = vector.load %arg7[%c56, %c0_98] : memref<128x1152xf32, #tpu.memory_space<vmem>>, vector<8x1152xf32>
    tpu.vector_store %arg7[%c56, %c0_98], %70 {strides = array<i32>} : memref<128x1152xf32, #tpu.memory_space<vmem>>, vector<8x1152xf32>,
    %c0_99 = arith.constant 0 : index
    %c36 = arith.constant 36 : index
    %72 = vector.load %arg6[%c0_99, %c36] : memref<8x1296xf32, #tpu.memory_space<vmem>>, vector<8x1152xf32>
    %c64 = arith.constant 64 : index
    %c0_100 = arith.constant 0 : index
    %73 = vector.load %arg7[%c64, %c0_100] : memref<128x1152xf32, #tpu.memory_space<vmem>>, vector<8x1152xf32>
    tpu.vector_store %arg7[%c64, %c0_100], %72 {strides = array<i32>} : memref<128x1152xf32, #tpu.memory_space<vmem>>, vector<8x1152xf32>,
    %c0_101 = arith.constant 0 : index
    %c38 = arith.constant 38 : index
    %74 = vector.load %arg6[%c0_101, %c38] : memref<8x1296xf32, #tpu.memory_space<vmem>>, vector<8x1152xf32>
    %c72_102 = arith.constant 72 : index
    %c0_103 = arith.constant 0 : index
    %75 = vector.load %arg7[%c72_102, %c0_103] : memref<128x1152xf32, #tpu.memory_space<vmem>>, vector<8x1152xf32>
    tpu.vector_store %arg7[%c72_102, %c0_103], %74 {strides = array<i32>} : memref<128x1152xf32, #tpu.memory_space<vmem>>, vector<8x1152xf32>,
    %c0_104 = arith.constant 0 : index
    %c108 = arith.constant 108 : index
    %76 = vector.load %arg6[%c0_104, %c108] : memref<8x1296xf32, #tpu.memory_space<vmem>>, vector<8x1152xf32>
    %c80 = arith.constant 80 : index
    %c0_105 = arith.constant 0 : index
    %77 = vector.load %arg7[%c80, %c0_105] : memref<128x1152xf32, #tpu.memory_space<vmem>>, vector<8x1152xf32>
    tpu.vector_store %arg7[%c80, %c0_105], %76 {strides = array<i32>} : memref<128x1152xf32, #tpu.memory_space<vmem>>, vector<8x1152xf32>,
    %c0_106 = arith.constant 0 : index
    %c110 = arith.constant 110 : index
    %78 = vector.load %arg6[%c0_106, %c110] : memref<8x1296xf32, #tpu.memory_space<vmem>>, vector<8x1152xf32>
    %c88 = arith.constant 88 : index
    %c0_107 = arith.constant 0 : index
    %79 = vector.load %arg7[%c88, %c0_107] : memref<128x1152xf32, #tpu.memory_space<vmem>>, vector<8x1152xf32>
    tpu.vector_store %arg7[%c88, %c0_107], %78 {strides = array<i32>} : memref<128x1152xf32, #tpu.memory_space<vmem>>, vector<8x1152xf32>,
    %c0_108 = arith.constant 0 : index
    %c37 = arith.constant 37 : index
    %80 = vector.load %arg6[%c0_108, %c37] : memref<8x1296xf32, #tpu.memory_space<vmem>>, vector<8x1152xf32>
    %c96 = arith.constant 96 : index
    %c0_109 = arith.constant 0 : index
    %81 = vector.load %arg7[%c96, %c0_109] : memref<128x1152xf32, #tpu.memory_space<vmem>>, vector<8x1152xf32>
    tpu.vector_store %arg7[%c96, %c0_109], %80 {strides = array<i32>} : memref<128x1152xf32, #tpu.memory_space<vmem>>, vector<8x1152xf32>,
    %c0_110 = arith.constant 0 : index
    %c39 = arith.constant 39 : index
    %82 = vector.load %arg6[%c0_110, %c39] : memref<8x1296xf32, #tpu.memory_space<vmem>>, vector<8x1152xf32>
    %c104 = arith.constant 104 : index
    %c0_111 = arith.constant 0 : index
    %83 = vector.load %arg7[%c104, %c0_111] : memref<128x1152xf32, #tpu.memory_space<vmem>>, vector<8x1152xf32>
    tpu.vector_store %arg7[%c104, %c0_111], %82 {strides = array<i32>} : memref<128x1152xf32, #tpu.memory_space<vmem>>, vector<8x1152xf32>,
    %c0_112 = arith.constant 0 : index
    %c109 = arith.constant 109 : index
    %84 = vector.load %arg6[%c0_112, %c109] : memref<8x1296xf32, #tpu.memory_space<vmem>>, vector<8x1152xf32>
    %c112 = arith.constant 112 : index
    %c0_113 = arith.constant 0 : index
    %85 = vector.load %arg7[%c112, %c0_113] : memref<128x1152xf32, #tpu.memory_space<vmem>>, vector<8x1152xf32>
    tpu.vector_store %arg7[%c112, %c0_113], %84 {strides = array<i32>} : memref<128x1152xf32, #tpu.memory_space<vmem>>, vector<8x1152xf32>,
    %c0_114 = arith.constant 0 : index
    %c111 = arith.constant 111 : index
    %86 = vector.load %arg6[%c0_114, %c111] : memref<8x1296xf32, #tpu.memory_space<vmem>>, vector<8x1152xf32>
    %c120 = arith.constant 120 : index
    %c0_115 = arith.constant 0 : index
    %87 = vector.load %arg7[%c120, %c0_115] : memref<128x1152xf32, #tpu.memory_space<vmem>>, vector<8x1152xf32>
    tpu.vector_store %arg7[%c120, %c0_115], %86 {strides = array<i32>} : memref<128x1152xf32, #tpu.memory_space<vmem>>, vector<8x1152xf32>,
    %c0_116 = arith.constant 0 : index
    %c0_117 = arith.constant 0 : index
    %88 = vector.load %arg2[%c0_116, %c0_117] : memref<8x128xf32, #tpu.memory_space<vmem>>, vector<8x128xf32>
    %c0_118 = arith.constant 0 : index
    %c0_119 = arith.constant 0 : index
    %89 = vector.load %arg7[%c0_118, %c0_119] : memref<128x1152xf32, #tpu.memory_space<vmem>>, vector<128x1152xf32>
    %cst_120 = arith.constant dense<0.000000e+00> : vector<8x1152xf32>
    %90 = tpu.matmul %88, %89, %cst_120 {dimension_numbers = #tpu.dot_dimension_numbers<[1], [0], [0], [1], [0, 0, 1, 1], [], []>} : vector<8x128xf32>, vector<128x1152xf32>, vector<8x1152xf32> -> vector<8x1152xf32>
    %c0_121 = arith.constant 0 : index
    %c0_122 = arith.constant 0 : index
    %91 = vector.load %arg3[%c0_121, %c0_122] : memref<1x1152xf32, #tpu.memory_space<vmem>>, vector<1x1152xf32>
    %92 = vector.broadcast %91 : vector<1x1152xf32> to vector<8x1152xf32>
    %93 = arith.mulf %90, %92 : vector<8x1152xf32>
    %cst_123 = arith.constant dense<0.000000e+00> : vector<8xf32>
    %94 = vector.multi_reduction <add>, %93, %cst_123 [1] : vector<8x1152xf32> to vector<8xf32>
    %95 = vector.shape_cast %94 : vector<8xf32> to vector<8x1xf32>
    %cst_124 = arith.constant 9.765625E-4 : f32
    %96 = vector.broadcast %cst_124 : f32 to vector<8x1xf32>
    %97 = arith.mulf %95, %96 : vector<8x1xf32>
    %98 = vector.broadcast %97 : vector<8x1xf32> to vector<8x1152xf32>
    %99 = arith.subf %90, %98 : vector<8x1152xf32>
    %100 = vector.broadcast %91 : vector<1x1152xf32> to vector<8x1152xf32>
    %101 = arith.mulf %99, %100 : vector<8x1152xf32>
    %102 = arith.mulf %101, %101 : vector<8x1152xf32>
    %cst_125 = arith.constant dense<0.000000e+00> : vector<8xf32>
    %103 = vector.multi_reduction <add>, %102, %cst_125 [1] : vector<8x1152xf32> to vector<8xf32>
    %104 = vector.shape_cast %103 : vector<8xf32> to vector<8x1xf32>
    %cst_126 = arith.constant 9.765625E-4 : f32
    %105 = vector.broadcast %cst_126 : f32 to vector<8x1xf32>
    %106 = arith.mulf %104, %105 : vector<8x1xf32>
    %cst_127 = arith.constant 9.99999974E-6 : f32
    %107 = vector.broadcast %cst_127 : f32 to vector<8x1xf32>
    %108 = arith.addf %106, %107 : vector<8x1xf32>
    %109 = math.rsqrt %108 : vector<8x1xf32>
    %110 = vector.broadcast %109 : vector<8x1xf32> to vector<8x1152xf32>
    %111 = arith.mulf %99, %110 : vector<8x1152xf32>
    %cst_128 = arith.constant 0.000000e+00 : f32
    %112 = vector.broadcast %cst_128 : f32 to vector<8x1152xf32>
    %113 = arith.maximumf %111, %112 : vector<8x1152xf32>
    %c0_129 = arith.constant 0 : index
    %c0_130 = arith.constant 0 : index
    %114 = vector.load %arg8[%c0_129, %c0_130] : memref<8x1152xf32, #tpu.memory_space<vmem>>, vector<8x1152xf32>
    tpu.vector_store %arg8[%c0_129, %c0_130], %113 {strides = array<i32>} : memref<8x1152xf32, #tpu.memory_space<vmem>>, vector<8x1152xf32>,
    %c0_131 = arith.constant 0 : index
    %c0_132 = arith.constant 0 : index
    %115 = vector.load %arg8[%c0_131, %c0_132] : memref<8x1152xf32, #tpu.memory_space<vmem>>, vector<8x32xf32>
    %c0_133 = arith.constant 0 : index
    %c0_134 = arith.constant 0 : index
    %c0_135 = arith.constant 0 : index
    %c0_136 = arith.constant 0 : index
    %116 = vector.load %arg5[%c0_133, %c0_134, %c0_135, %c0_136] : memref<1x16x32x32xf32, #tpu.memory_space<vmem>>, vector<1x8x1x32xf32>
    %117 = vector.shape_cast %116 : vector<1x8x1x32xf32> to vector<8x32xf32>
    %118 = vector.shape_cast %115 : vector<8x32xf32> to vector<1x8x1x32xf32>
    tpu.vector_store %arg5[%c0_133, %c0_134, %c0_135, %c0_136], %118 {strides = array<i32>} : memref<1x16x32x32xf32, #tpu.memory_space<vmem>>, vector<1x8x1x32xf32>,
    %c0_137 = arith.constant 0 : index
    %c36_138 = arith.constant 36 : index
    %119 = vector.load %arg8[%c0_137, %c36_138] : memref<8x1152xf32, #tpu.memory_space<vmem>>, vector<8x32xf32>
    %c0_139 = arith.constant 0 : index
    %c0_140 = arith.constant 0 : index
    %c1_141 = arith.constant 1 : index
    %c0_142 = arith.constant 0 : index
    %120 = vector.load %arg5[%c0_139, %c0_140, %c1_141, %c0_142] : memref<1x16x32x32xf32, #tpu.memory_space<vmem>>, vector<1x8x1x32xf32>
    %121 = vector.shape_cast %120 : vector<1x8x1x32xf32> to vector<8x32xf32>
    %122 = vector.shape_cast %119 : vector<8x32xf32> to vector<1x8x1x32xf32>
    tpu.vector_store %arg5[%c0_139, %c0_140, %c1_141, %c0_142], %122 {strides = array<i32>} : memref<1x16x32x32xf32, #tpu.memory_space<vmem>>, vector<1x8x1x32xf32>,
    %c0_143 = arith.constant 0 : index
    %c72_144 = arith.constant 72 : index
    %123 = vector.load %arg8[%c0_143, %c72_144] : memref<8x1152xf32, #tpu.memory_space<vmem>>, vector<8x32xf32>
    %c0_145 = arith.constant 0 : index
    %c0_146 = arith.constant 0 : index
    %c2_147 = arith.constant 2 : index
    %c0_148 = arith.constant 0 : index
    %124 = vector.load %arg5[%c0_145, %c0_146, %c2_147, %c0_148] : memref<1x16x32x32xf32, #tpu.memory_space<vmem>>, vector<1x8x1x32xf32>
    %125 = vector.shape_cast %124 : vector<1x8x1x32xf32> to vector<8x32xf32>
    %126 = vector.shape_cast %123 : vector<8x32xf32> to vector<1x8x1x32xf32>
    tpu.vector_store %arg5[%c0_145, %c0_146, %c2_147, %c0_148], %126 {strides = array<i32>} : memref<1x16x32x32xf32, #tpu.memory_space<vmem>>, vector<1x8x1x32xf32>,
    %c0_149 = arith.constant 0 : index
    %c108_150 = arith.constant 108 : index
    %127 = vector.load %arg8[%c0_149, %c108_150] : memref<8x1152xf32, #tpu.memory_space<vmem>>, vector<8x32xf32>
    %c0_151 = arith.constant 0 : index
    %c0_152 = arith.constant 0 : index
    %c3_153 = arith.constant 3 : index
    %c0_154 = arith.constant 0 : index
    %128 = vector.load %arg5[%c0_151, %c0_152, %c3_153, %c0_154] : memref<1x16x32x32xf32, #tpu.memory_space<vmem>>, vector<1x8x1x32xf32>
    %129 = vector.shape_cast %128 : vector<1x8x1x32xf32> to vector<8x32xf32>
    %130 = vector.shape_cast %127 : vector<8x32xf32> to vector<1x8x1x32xf32>
    tpu.vector_store %arg5[%c0_151, %c0_152, %c3_153, %c0_154], %130 {strides = array<i32>} : memref<1x16x32x32xf32, #tpu.memory_space<vmem>>, vector<1x8x1x32xf32>,
    %c0_155 = arith.constant 0 : index
    %c144_156 = arith.constant 144 : index
    %131 = vector.load %arg8[%c0_155, %c144_156] : memref<8x1152xf32, #tpu.memory_space<vmem>>, vector<8x32xf32>
    %c0_157 = arith.constant 0 : index
    %c0_158 = arith.constant 0 : index
    %c4_159 = arith.constant 4 : index
    %c0_160 = arith.constant 0 : index
    %132 = vector.load %arg5[%c0_157, %c0_158, %c4_159, %c0_160] : memref<1x16x32x32xf32, #tpu.memory_space<vmem>>, vector<1x8x1x32xf32>
    %133 = vector.shape_cast %132 : vector<1x8x1x32xf32> to vector<8x32xf32>
    %134 = vector.shape_cast %131 : vector<8x32xf32> to vector<1x8x1x32xf32>
    tpu.vector_store %arg5[%c0_157, %c0_158, %c4_159, %c0_160], %134 {strides = array<i32>} : memref<1x16x32x32xf32, #tpu.memory_space<vmem>>, vector<1x8x1x32xf32>,
    %c0_161 = arith.constant 0 : index
    %c180 = arith.constant 180 : index
    %135 = vector.load %arg8[%c0_161, %c180] : memref<8x1152xf32, #tpu.memory_space<vmem>>, vector<8x32xf32>
    %c0_162 = arith.constant 0 : index
    %c0_163 = arith.constant 0 : index
    %c5_164 = arith.constant 5 : index
    %c0_165 = arith.constant 0 : index
    %136 = vector.load %arg5[%c0_162, %c0_163, %c5_164, %c0_165] : memref<1x16x32x32xf32, #tpu.memory_space<vmem>>, vector<1x8x1x32xf32>
    %137 = vector.shape_cast %136 : vector<1x8x1x32xf32> to vector<8x32xf32>
    %138 = vector.shape_cast %135 : vector<8x32xf32> to vector<1x8x1x32xf32>
    tpu.vector_store %arg5[%c0_162, %c0_163, %c5_164, %c0_165], %138 {strides = array<i32>} : memref<1x16x32x32xf32, #tpu.memory_space<vmem>>, vector<1x8x1x32xf32>,
    %c0_166 = arith.constant 0 : index
    %c216_167 = arith.constant 216 : index
    %139 = vector.load %arg8[%c0_166, %c216_167] : memref<8x1152xf32, #tpu.memory_space<vmem>>, vector<8x32xf32>
    %c0_168 = arith.constant 0 : index
    %c0_169 = arith.constant 0 : index
    %c6_170 = arith.constant 6 : index
    %c0_171 = arith.constant 0 : index
    %140 = vector.load %arg5[%c0_168, %c0_169, %c6_170, %c0_171] : memref<1x16x32x32xf32, #tpu.memory_space<vmem>>, vector<1x8x1x32xf32>
    %141 = vector.shape_cast %140 : vector<1x8x1x32xf32> to vector<8x32xf32>
    %142 = vector.shape_cast %139 : vector<8x32xf32> to vector<1x8x1x32xf32>
    tpu.vector_store %arg5[%c0_168, %c0_169, %c6_170, %c0_171], %142 {strides = array<i32>} : memref<1x16x32x32xf32, #tpu.memory_space<vmem>>, vector<1x8x1x32xf32>,
    %c0_172 = arith.constant 0 : index
    %c252 = arith.constant 252 : index
    %143 = vector.load %arg8[%c0_172, %c252] : memref<8x1152xf32, #tpu.memory_space<vmem>>, vector<8x32xf32>
    %c0_173 = arith.constant 0 : index
    %c0_174 = arith.constant 0 : index
    %c7_175 = arith.constant 7 : index
    %c0_176 = arith.constant 0 : index
    %144 = vector.load %arg5[%c0_173, %c0_174, %c7_175, %c0_176] : memref<1x16x32x32xf32, #tpu.memory_space<vmem>>, vector<1x8x1x32xf32>
    %145 = vector.shape_cast %144 : vector<1x8x1x32xf32> to vector<8x32xf32>
    %146 = vector.shape_cast %143 : vector<8x32xf32> to vector<1x8x1x32xf32>
    tpu.vector_store %arg5[%c0_173, %c0_174, %c7_175, %c0_176], %146 {strides = array<i32>} : memref<1x16x32x32xf32, #tpu.memory_space<vmem>>, vector<1x8x1x32xf32>,
    %c0_177 = arith.constant 0 : index
    %c288_178 = arith.constant 288 : index
    %147 = vector.load %arg8[%c0_177, %c288_178] : memref<8x1152xf32, #tpu.memory_space<vmem>>, vector<8x32xf32>
    %c0_179 = arith.constant 0 : index
    %c0_180 = arith.constant 0 : index
    %c8_181 = arith.constant 8 : index
    %c0_182 = arith.constant 0 : index
    %148 = vector.load %arg5[%c0_179, %c0_180, %c8_181, %c0_182] : memref<1x16x32x32xf32, #tpu.memory_space<vmem>>, vector<1x8x1x32xf32>
    %149 = vector.shape_cast %148 : vector<1x8x1x32xf32> to vector<8x32xf32>
    %150 = vector.shape_cast %147 : vector<8x32xf32> to vector<1x8x1x32xf32>
    tpu.vector_store %arg5[%c0_179, %c0_180, %c8_181, %c0_182], %150 {strides = array<i32>} : memref<1x16x32x32xf32, #tpu.memory_space<vmem>>, vector<1x8x1x32xf32>,
    %c0_183 = arith.constant 0 : index
    %c324 = arith.constant 324 : index
    %151 = vector.load %arg8[%c0_183, %c324] : memref<8x1152xf32, #tpu.memory_space<vmem>>, vector<8x32xf32>
    %c0_184 = arith.constant 0 : index
    %c0_185 = arith.constant 0 : index
    %c9_186 = arith.constant 9 : index
    %c0_187 = arith.constant 0 : index
    %152 = vector.load %arg5[%c0_184, %c0_185, %c9_186, %c0_187] : memref<1x16x32x32xf32, #tpu.memory_space<vmem>>, vector<1x8x1x32xf32>
    %153 = vector.shape_cast %152 : vector<1x8x1x32xf32> to vector<8x32xf32>
    %154 = vector.shape_cast %151 : vector<8x32xf32> to vector<1x8x1x32xf32>
    tpu.vector_store %arg5[%c0_184, %c0_185, %c9_186, %c0_187], %154 {strides = array<i32>} : memref<1x16x32x32xf32, #tpu.memory_space<vmem>>, vector<1x8x1x32xf32>,
    %c0_188 = arith.constant 0 : index
    %c360_189 = arith.constant 360 : index
    %155 = vector.load %arg8[%c0_188, %c360_189] : memref<8x1152xf32, #tpu.memory_space<vmem>>, vector<8x32xf32>
    %c0_190 = arith.constant 0 : index
    %c0_191 = arith.constant 0 : index
    %c10_192 = arith.constant 10 : index
    %c0_193 = arith.constant 0 : index
    %156 = vector.load %arg5[%c0_190, %c0_191, %c10_192, %c0_193] : memref<1x16x32x32xf32, #tpu.memory_space<vmem>>, vector<1x8x1x32xf32>
    %157 = vector.shape_cast %156 : vector<1x8x1x32xf32> to vector<8x32xf32>
    %158 = vector.shape_cast %155 : vector<8x32xf32> to vector<1x8x1x32xf32>
    tpu.vector_store %arg5[%c0_190, %c0_191, %c10_192, %c0_193], %158 {strides = array<i32>} : memref<1x16x32x32xf32, #tpu.memory_space<vmem>>, vector<1x8x1x32xf32>,
    %c0_194 = arith.constant 0 : index
    %c396 = arith.constant 396 : index
    %159 = vector.load %arg8[%c0_194, %c396] : memref<8x1152xf32, #tpu.memory_space<vmem>>, vector<8x32xf32>
    %c0_195 = arith.constant 0 : index
    %c0_196 = arith.constant 0 : index
    %c11_197 = arith.constant 11 : index
    %c0_198 = arith.constant 0 : index
    %160 = vector.load %arg5[%c0_195, %c0_196, %c11_197, %c0_198] : memref<1x16x32x32xf32, #tpu.memory_space<vmem>>, vector<1x8x1x32xf32>
    %161 = vector.shape_cast %160 : vector<1x8x1x32xf32> to vector<8x32xf32>
    %162 = vector.shape_cast %159 : vector<8x32xf32> to vector<1x8x1x32xf32>
    tpu.vector_store %arg5[%c0_195, %c0_196, %c11_197, %c0_198], %162 {strides = array<i32>} : memref<1x16x32x32xf32, #tpu.memory_space<vmem>>, vector<1x8x1x32xf32>,
    %c0_199 = arith.constant 0 : index
    %c432_200 = arith.constant 432 : index
    %163 = vector.load %arg8[%c0_199, %c432_200] : memref<8x1152xf32, #tpu.memory_space<vmem>>, vector<8x32xf32>
    %c0_201 = arith.constant 0 : index
    %c0_202 = arith.constant 0 : index
    %c12_203 = arith.constant 12 : index
    %c0_204 = arith.constant 0 : index
    %164 = vector.load %arg5[%c0_201, %c0_202, %c12_203, %c0_204] : memref<1x16x32x32xf32, #tpu.memory_space<vmem>>, vector<1x8x1x32xf32>
    %165 = vector.shape_cast %164 : vector<1x8x1x32xf32> to vector<8x32xf32>
    %166 = vector.shape_cast %163 : vector<8x32xf32> to vector<1x8x1x32xf32>
    tpu.vector_store %arg5[%c0_201, %c0_202, %c12_203, %c0_204], %166 {strides = array<i32>} : memref<1x16x32x32xf32, #tpu.memory_space<vmem>>, vector<1x8x1x32xf32>,
    %c0_205 = arith.constant 0 : index
    %c468 = arith.constant 468 : index
    %167 = vector.load %arg8[%c0_205, %c468] : memref<8x1152xf32, #tpu.memory_space<vmem>>, vector<8x32xf32>
    %c0_206 = arith.constant 0 : index
    %c0_207 = arith.constant 0 : index
    %c13_208 = arith.constant 13 : index
    %c0_209 = arith.constant 0 : index
    %168 = vector.load %arg5[%c0_206, %c0_207, %c13_208, %c0_209] : memref<1x16x32x32xf32, #tpu.memory_space<vmem>>, vector<1x8x1x32xf32>
    %169 = vector.shape_cast %168 : vector<1x8x1x32xf32> to vector<8x32xf32>
    %170 = vector.shape_cast %167 : vector<8x32xf32> to vector<1x8x1x32xf32>
    tpu.vector_store %arg5[%c0_206, %c0_207, %c13_208, %c0_209], %170 {strides = array<i32>} : memref<1x16x32x32xf32, #tpu.memory_space<vmem>>, vector<1x8x1x32xf32>,
    %c0_210 = arith.constant 0 : index
    %c504_211 = arith.constant 504 : index
    %171 = vector.load %arg8[%c0_210, %c504_211] : memref<8x1152xf32, #tpu.memory_space<vmem>>, vector<8x32xf32>
    %c0_212 = arith.constant 0 : index
    %c0_213 = arith.constant 0 : index
    %c14_214 = arith.constant 14 : index
    %c0_215 = arith.constant 0 : index
    %172 = vector.load %arg5[%c0_212, %c0_213, %c14_214, %c0_215] : memref<1x16x32x32xf32, #tpu.memory_space<vmem>>, vector<1x8x1x32xf32>
    %173 = vector.shape_cast %172 : vector<1x8x1x32xf32> to vector<8x32xf32>
    %174 = vector.shape_cast %171 : vector<8x32xf32> to vector<1x8x1x32xf32>
    tpu.vector_store %arg5[%c0_212, %c0_213, %c14_214, %c0_215], %174 {strides = array<i32>} : memref<1x16x32x32xf32, #tpu.memory_space<vmem>>, vector<1x8x1x32xf32>,
    %c0_216 = arith.constant 0 : index
    %c540 = arith.constant 540 : index
    %175 = vector.load %arg8[%c0_216, %c540] : memref<8x1152xf32, #tpu.memory_space<vmem>>, vector<8x32xf32>
    %c0_217 = arith.constant 0 : index
    %c0_218 = arith.constant 0 : index
    %c15_219 = arith.constant 15 : index
    %c0_220 = arith.constant 0 : index
    %176 = vector.load %arg5[%c0_217, %c0_218, %c15_219, %c0_220] : memref<1x16x32x32xf32, #tpu.memory_space<vmem>>, vector<1x8x1x32xf32>
    %177 = vector.shape_cast %176 : vector<1x8x1x32xf32> to vector<8x32xf32>
    %178 = vector.shape_cast %175 : vector<8x32xf32> to vector<1x8x1x32xf32>
    tpu.vector_store %arg5[%c0_217, %c0_218, %c15_219, %c0_220], %178 {strides = array<i32>} : memref<1x16x32x32xf32, #tpu.memory_space<vmem>>, vector<1x8x1x32xf32>,
    %c0_221 = arith.constant 0 : index
    %c576_222 = arith.constant 576 : index
    %179 = vector.load %arg8[%c0_221, %c576_222] : memref<8x1152xf32, #tpu.memory_space<vmem>>, vector<8x32xf32>
    %c0_223 = arith.constant 0 : index
    %c0_224 = arith.constant 0 : index
    %c16_225 = arith.constant 16 : index
    %c0_226 = arith.constant 0 : index
    %180 = vector.load %arg5[%c0_223, %c0_224, %c16_225, %c0_226] : memref<1x16x32x32xf32, #tpu.memory_space<vmem>>, vector<1x8x1x32xf32>
    %181 = vector.shape_cast %180 : vector<1x8x1x32xf32> to vector<8x32xf32>
    %182 = vector.shape_cast %179 : vector<8x32xf32> to vector<1x8x1x32xf32>
    tpu.vector_store %arg5[%c0_223, %c0_224, %c16_225, %c0_226], %182 {strides = array<i32>} : memref<1x16x32x32xf32, #tpu.memory_space<vmem>>, vector<1x8x1x32xf32>,
    %c0_227 = arith.constant 0 : index
    %c612 = arith.constant 612 : index
    %183 = vector.load %arg8[%c0_227, %c612] : memref<8x1152xf32, #tpu.memory_space<vmem>>, vector<8x32xf32>
    %c0_228 = arith.constant 0 : index
    %c0_229 = arith.constant 0 : index
    %c17_230 = arith.constant 17 : index
    %c0_231 = arith.constant 0 : index
    %184 = vector.load %arg5[%c0_228, %c0_229, %c17_230, %c0_231] : memref<1x16x32x32xf32, #tpu.memory_space<vmem>>, vector<1x8x1x32xf32>
    %185 = vector.shape_cast %184 : vector<1x8x1x32xf32> to vector<8x32xf32>
    %186 = vector.shape_cast %183 : vector<8x32xf32> to vector<1x8x1x32xf32>
    tpu.vector_store %arg5[%c0_228, %c0_229, %c17_230, %c0_231], %186 {strides = array<i32>} : memref<1x16x32x32xf32, #tpu.memory_space<vmem>>, vector<1x8x1x32xf32>,
    %c0_232 = arith.constant 0 : index
    %c648_233 = arith.constant 648 : index
    %187 = vector.load %arg8[%c0_232, %c648_233] : memref<8x1152xf32, #tpu.memory_space<vmem>>, vector<8x32xf32>
    %c0_234 = arith.constant 0 : index
    %c0_235 = arith.constant 0 : index
    %c18 = arith.constant 18 : index
    %c0_236 = arith.constant 0 : index
    %188 = vector.load %arg5[%c0_234, %c0_235, %c18, %c0_236] : memref<1x16x32x32xf32, #tpu.memory_space<vmem>>, vector<1x8x1x32xf32>
    %189 = vector.shape_cast %188 : vector<1x8x1x32xf32> to vector<8x32xf32>
    %190 = vector.shape_cast %187 : vector<8x32xf32> to vector<1x8x1x32xf32>
    tpu.vector_store %arg5[%c0_234, %c0_235, %c18, %c0_236], %190 {strides = array<i32>} : memref<1x16x32x32xf32, #tpu.memory_space<vmem>>, vector<1x8x1x32xf32>,
    %c0_237 = arith.constant 0 : index
    %c684 = arith.constant 684 : index
    %191 = vector.load %arg8[%c0_237, %c684] : memref<8x1152xf32, #tpu.memory_space<vmem>>, vector<8x32xf32>
    %c0_238 = arith.constant 0 : index
    %c0_239 = arith.constant 0 : index
    %c19 = arith.constant 19 : index
    %c0_240 = arith.constant 0 : index
    %192 = vector.load %arg5[%c0_238, %c0_239, %c19, %c0_240] : memref<1x16x32x32xf32, #tpu.memory_space<vmem>>, vector<1x8x1x32xf32>
    %193 = vector.shape_cast %192 : vector<1x8x1x32xf32> to vector<8x32xf32>
    %194 = vector.shape_cast %191 : vector<8x32xf32> to vector<1x8x1x32xf32>
    tpu.vector_store %arg5[%c0_238, %c0_239, %c19, %c0_240], %194 {strides = array<i32>} : memref<1x16x32x32xf32, #tpu.memory_space<vmem>>, vector<1x8x1x32xf32>,
    %c0_241 = arith.constant 0 : index
    %c720_242 = arith.constant 720 : index
    %195 = vector.load %arg8[%c0_241, %c720_242] : memref<8x1152xf32, #tpu.memory_space<vmem>>, vector<8x32xf32>
    %c0_243 = arith.constant 0 : index
    %c0_244 = arith.constant 0 : index
    %c20 = arith.constant 20 : index
    %c0_245 = arith.constant 0 : index
    %196 = vector.load %arg5[%c0_243, %c0_244, %c20, %c0_245] : memref<1x16x32x32xf32, #tpu.memory_space<vmem>>, vector<1x8x1x32xf32>
    %197 = vector.shape_cast %196 : vector<1x8x1x32xf32> to vector<8x32xf32>
    %198 = vector.shape_cast %195 : vector<8x32xf32> to vector<1x8x1x32xf32>
    tpu.vector_store %arg5[%c0_243, %c0_244, %c20, %c0_245], %198 {strides = array<i32>} : memref<1x16x32x32xf32, #tpu.memory_space<vmem>>, vector<1x8x1x32xf32>,
    %c0_246 = arith.constant 0 : index
    %c756 = arith.constant 756 : index
    %199 = vector.load %arg8[%c0_246, %c756] : memref<8x1152xf32, #tpu.memory_space<vmem>>, vector<8x32xf32>
    %c0_247 = arith.constant 0 : index
    %c0_248 = arith.constant 0 : index
    %c21 = arith.constant 21 : index
    %c0_249 = arith.constant 0 : index
    %200 = vector.load %arg5[%c0_247, %c0_248, %c21, %c0_249] : memref<1x16x32x32xf32, #tpu.memory_space<vmem>>, vector<1x8x1x32xf32>
    %201 = vector.shape_cast %200 : vector<1x8x1x32xf32> to vector<8x32xf32>
    %202 = vector.shape_cast %199 : vector<8x32xf32> to vector<1x8x1x32xf32>
    tpu.vector_store %arg5[%c0_247, %c0_248, %c21, %c0_249], %202 {strides = array<i32>} : memref<1x16x32x32xf32, #tpu.memory_space<vmem>>, vector<1x8x1x32xf32>,
    %c0_250 = arith.constant 0 : index
    %c792_251 = arith.constant 792 : index
    %203 = vector.load %arg8[%c0_250, %c792_251] : memref<8x1152xf32, #tpu.memory_space<vmem>>, vector<8x32xf32>
    %c0_252 = arith.constant 0 : index
    %c0_253 = arith.constant 0 : index
    %c22 = arith.constant 22 : index
    %c0_254 = arith.constant 0 : index
    %204 = vector.load %arg5[%c0_252, %c0_253, %c22, %c0_254] : memref<1x16x32x32xf32, #tpu.memory_space<vmem>>, vector<1x8x1x32xf32>
    %205 = vector.shape_cast %204 : vector<1x8x1x32xf32> to vector<8x32xf32>
    %206 = vector.shape_cast %203 : vector<8x32xf32> to vector<1x8x1x32xf32>
    tpu.vector_store %arg5[%c0_252, %c0_253, %c22, %c0_254], %206 {strides = array<i32>} : memref<1x16x32x32xf32, #tpu.memory_space<vmem>>, vector<1x8x1x32xf32>,
    %c0_255 = arith.constant 0 : index
    %c828 = arith.constant 828 : index
    %207 = vector.load %arg8[%c0_255, %c828] : memref<8x1152xf32, #tpu.memory_space<vmem>>, vector<8x32xf32>
    %c0_256 = arith.constant 0 : index
    %c0_257 = arith.constant 0 : index
    %c23 = arith.constant 23 : index
    %c0_258 = arith.constant 0 : index
    %208 = vector.load %arg5[%c0_256, %c0_257, %c23, %c0_258] : memref<1x16x32x32xf32, #tpu.memory_space<vmem>>, vector<1x8x1x32xf32>
    %209 = vector.shape_cast %208 : vector<1x8x1x32xf32> to vector<8x32xf32>
    %210 = vector.shape_cast %207 : vector<8x32xf32> to vector<1x8x1x32xf32>
    tpu.vector_store %arg5[%c0_256, %c0_257, %c23, %c0_258], %210 {strides = array<i32>} : memref<1x16x32x32xf32, #tpu.memory_space<vmem>>, vector<1x8x1x32xf32>,
    %c0_259 = arith.constant 0 : index
    %c864_260 = arith.constant 864 : index
    %211 = vector.load %arg8[%c0_259, %c864_260] : memref<8x1152xf32, #tpu.memory_space<vmem>>, vector<8x32xf32>
    %c0_261 = arith.constant 0 : index
    %c0_262 = arith.constant 0 : index
    %c24_263 = arith.constant 24 : index
    %c0_264 = arith.constant 0 : index
    %212 = vector.load %arg5[%c0_261, %c0_262, %c24_263, %c0_264] : memref<1x16x32x32xf32, #tpu.memory_space<vmem>>, vector<1x8x1x32xf32>
    %213 = vector.shape_cast %212 : vector<1x8x1x32xf32> to vector<8x32xf32>
    %214 = vector.shape_cast %211 : vector<8x32xf32> to vector<1x8x1x32xf32>
    tpu.vector_store %arg5[%c0_261, %c0_262, %c24_263, %c0_264], %214 {strides = array<i32>} : memref<1x16x32x32xf32, #tpu.memory_space<vmem>>, vector<1x8x1x32xf32>,
    %c0_265 = arith.constant 0 : index
    %c900 = arith.constant 900 : index
    %215 = vector.load %arg8[%c0_265, %c900] : memref<8x1152xf32, #tpu.memory_space<vmem>>, vector<8x32xf32>
    %c0_266 = arith.constant 0 : index
    %c0_267 = arith.constant 0 : index
    %c25 = arith.constant 25 : index
    %c0_268 = arith.constant 0 : index
    %216 = vector.load %arg5[%c0_266, %c0_267, %c25, %c0_268] : memref<1x16x32x32xf32, #tpu.memory_space<vmem>>, vector<1x8x1x32xf32>
    %217 = vector.shape_cast %216 : vector<1x8x1x32xf32> to vector<8x32xf32>
    %218 = vector.shape_cast %215 : vector<8x32xf32> to vector<1x8x1x32xf32>
    tpu.vector_store %arg5[%c0_266, %c0_267, %c25, %c0_268], %218 {strides = array<i32>} : memref<1x16x32x32xf32, #tpu.memory_space<vmem>>, vector<1x8x1x32xf32>,
    %c0_269 = arith.constant 0 : index
    %c936_270 = arith.constant 936 : index
    %219 = vector.load %arg8[%c0_269, %c936_270] : memref<8x1152xf32, #tpu.memory_space<vmem>>, vector<8x32xf32>
    %c0_271 = arith.constant 0 : index
    %c0_272 = arith.constant 0 : index
    %c26 = arith.constant 26 : index
    %c0_273 = arith.constant 0 : index
    %220 = vector.load %arg5[%c0_271, %c0_272, %c26, %c0_273] : memref<1x16x32x32xf32, #tpu.memory_space<vmem>>, vector<1x8x1x32xf32>
    %221 = vector.shape_cast %220 : vector<1x8x1x32xf32> to vector<8x32xf32>
    %222 = vector.shape_cast %219 : vector<8x32xf32> to vector<1x8x1x32xf32>
    tpu.vector_store %arg5[%c0_271, %c0_272, %c26, %c0_273], %222 {strides = array<i32>} : memref<1x16x32x32xf32, #tpu.memory_space<vmem>>, vector<1x8x1x32xf32>,
    %c0_274 = arith.constant 0 : index
    %c972 = arith.constant 972 : index
    %223 = vector.load %arg8[%c0_274, %c972] : memref<8x1152xf32, #tpu.memory_space<vmem>>, vector<8x32xf32>
    %c0_275 = arith.constant 0 : index
    %c0_276 = arith.constant 0 : index
    %c27 = arith.constant 27 : index
    %c0_277 = arith.constant 0 : index
    %224 = vector.load %arg5[%c0_275, %c0_276, %c27, %c0_277] : memref<1x16x32x32xf32, #tpu.memory_space<vmem>>, vector<1x8x1x32xf32>
    %225 = vector.shape_cast %224 : vector<1x8x1x32xf32> to vector<8x32xf32>
    %226 = vector.shape_cast %223 : vector<8x32xf32> to vector<1x8x1x32xf32>
    tpu.vector_store %arg5[%c0_275, %c0_276, %c27, %c0_277], %226 {strides = array<i32>} : memref<1x16x32x32xf32, #tpu.memory_space<vmem>>, vector<1x8x1x32xf32>,
    %c0_278 = arith.constant 0 : index
    %c1008_279 = arith.constant 1008 : index
    %227 = vector.load %arg8[%c0_278, %c1008_279] : memref<8x1152xf32, #tpu.memory_space<vmem>>, vector<8x32xf32>
    %c0_280 = arith.constant 0 : index
    %c0_281 = arith.constant 0 : index
    %c28 = arith.constant 28 : index
    %c0_282 = arith.constant 0 : index
    %228 = vector.load %arg5[%c0_280, %c0_281, %c28, %c0_282] : memref<1x16x32x32xf32, #tpu.memory_space<vmem>>, vector<1x8x1x32xf32>
    %229 = vector.shape_cast %228 : vector<1x8x1x32xf32> to vector<8x32xf32>
    %230 = vector.shape_cast %227 : vector<8x32xf32> to vector<1x8x1x32xf32>
    tpu.vector_store %arg5[%c0_280, %c0_281, %c28, %c0_282], %230 {strides = array<i32>} : memref<1x16x32x32xf32, #tpu.memory_space<vmem>>, vector<1x8x1x32xf32>,
    %c0_283 = arith.constant 0 : index
    %c1044 = arith.constant 1044 : index
    %231 = vector.load %arg8[%c0_283, %c1044] : memref<8x1152xf32, #tpu.memory_space<vmem>>, vector<8x32xf32>
    %c0_284 = arith.constant 0 : index
    %c0_285 = arith.constant 0 : index
    %c29 = arith.constant 29 : index
    %c0_286 = arith.constant 0 : index
    %232 = vector.load %arg5[%c0_284, %c0_285, %c29, %c0_286] : memref<1x16x32x32xf32, #tpu.memory_space<vmem>>, vector<1x8x1x32xf32>
    %233 = vector.shape_cast %232 : vector<1x8x1x32xf32> to vector<8x32xf32>
    %234 = vector.shape_cast %231 : vector<8x32xf32> to vector<1x8x1x32xf32>
    tpu.vector_store %arg5[%c0_284, %c0_285, %c29, %c0_286], %234 {strides = array<i32>} : memref<1x16x32x32xf32, #tpu.memory_space<vmem>>, vector<1x8x1x32xf32>,
    %c0_287 = arith.constant 0 : index
    %c1080_288 = arith.constant 1080 : index
    %235 = vector.load %arg8[%c0_287, %c1080_288] : memref<8x1152xf32, #tpu.memory_space<vmem>>, vector<8x32xf32>
    %c0_289 = arith.constant 0 : index
    %c0_290 = arith.constant 0 : index
    %c30 = arith.constant 30 : index
    %c0_291 = arith.constant 0 : index
    %236 = vector.load %arg5[%c0_289, %c0_290, %c30, %c0_291] : memref<1x16x32x32xf32, #tpu.memory_space<vmem>>, vector<1x8x1x32xf32>
    %237 = vector.shape_cast %236 : vector<1x8x1x32xf32> to vector<8x32xf32>
    %238 = vector.shape_cast %235 : vector<8x32xf32> to vector<1x8x1x32xf32>
    tpu.vector_store %arg5[%c0_289, %c0_290, %c30, %c0_291], %238 {strides = array<i32>} : memref<1x16x32x32xf32, #tpu.memory_space<vmem>>, vector<1x8x1x32xf32>,
    %c0_292 = arith.constant 0 : index
    %c1116 = arith.constant 1116 : index
    %239 = vector.load %arg8[%c0_292, %c1116] : memref<8x1152xf32, #tpu.memory_space<vmem>>, vector<8x32xf32>
    %c0_293 = arith.constant 0 : index
    %c0_294 = arith.constant 0 : index
    %c31 = arith.constant 31 : index
    %c0_295 = arith.constant 0 : index
    %240 = vector.load %arg5[%c0_293, %c0_294, %c31, %c0_295] : memref<1x16x32x32xf32, #tpu.memory_space<vmem>>, vector<1x8x1x32xf32>
    %241 = vector.shape_cast %240 : vector<1x8x1x32xf32> to vector<8x32xf32>
    %242 = vector.shape_cast %239 : vector<8x32xf32> to vector<1x8x1x32xf32>
    tpu.vector_store %arg5[%c0_293, %c0_294, %c31, %c0_295], %242 {strides = array<i32>} : memref<1x16x32x32xf32, #tpu.memory_space<vmem>>, vector<1x8x1x32xf32>,
    %c0_296 = arith.constant 0 : index
    %c0_297 = arith.constant 0 : index
    %c0_298 = arith.constant 0 : index
    %c0_299 = arith.constant 0 : index
    %243 = vector.load %arg4[%c0_296, %c0_297, %c0_298, %c0_299] : memref<1x8x32x32xf32, #tpu.memory_space<vmem>>, vector<1x8x32x32xf32>
    %244 = vector.shape_cast %243 : vector<1x8x32x32xf32> to vector<8x32x32xf32>
    %c0_300 = arith.constant 0 : index
    %c8_301 = arith.constant 8 : index
    %c0_302 = arith.constant 0 : index
    %c0_303 = arith.constant 0 : index
    %245 = vector.load %arg5[%c0_300, %c8_301, %c0_302, %c0_303] : memref<1x16x32x32xf32, #tpu.memory_space<vmem>>, vector<1x8x32x32xf32>
    %246 = vector.shape_cast %245 : vector<1x8x32x32xf32> to vector<8x32x32xf32>
    %247 = vector.shape_cast %244 : vector<8x32x32xf32> to vector<1x8x32x32xf32>
    tpu.vector_store %arg5[%c0_300, %c8_301, %c0_302, %c0_303], %247 {strides = array<i32>} : memref<1x16x32x32xf32, #tpu.memory_space<vmem>>, vector<1x8x32x32xf32>,
    return
  }
  func.func @transform_0(%arg0: i32) -> (i32, i32, i32, i32) {
    %c0_i32 = arith.constant 0 : i32
    %c0_i32_0 = arith.constant 0 : i32
    %c0_i32_1 = arith.constant 0 : i32
    %c0_i32_2 = arith.constant 0 : i32
    return %arg0, %c0_i32, %c0_i32_0, %c0_i32_1 : i32, i32, i32, i32
  }
  func.func @transform_1(%arg0: i32) -> (i32, i32) {
    %c0_i32 = arith.constant 0 : i32
    %c0_i32_0 = arith.constant 0 : i32
    %c0_i32_1 = arith.constant 0 : i32
    return %c0_i32, %c0_i32_0 : i32, i32
  }
  func.func @transform_2(%arg0: i32) -> (i32, i32) {
    %c0_i32 = arith.constant 0 : i32
    %c0_i32_0 = arith.constant 0 : i32
    %c0_i32_1 = arith.constant 0 : i32
    return %c0_i32, %c0_i32_0 : i32, i32
  }
  func.func @transform_3(%arg0: i32) -> (i32, i32, i32, i32) {
    %c0_i32 = arith.constant 0 : i32
    %c0_i32_0 = arith.constant 0 : i32
    %c0_i32_1 = arith.constant 0 : i32
    %c0_i32_2 = arith.constant 0 : i32
    return %arg0, %c0_i32, %c0_i32_0, %c0_i32_1 : i32, i32, i32, i32
  }
  func.func @transform_4(%arg0: i32) -> (i32, i32, i32, i32) {
    %c0_i32 = arith.constant 0 : i32
    %c0_i32_0 = arith.constant 0 : i32
    %c0_i32_1 = arith.constant 0 : i32
    %c0_i32_2 = arith.constant 0 : i32
    return %arg0, %c0_i32, %c0_i32_0, %c0_i32_1 : i32, i32, i32, i32
  }
}

</mosaic_0001>

<llo_original>
// kernel: tpu_custom_call.1
$region0: #{tpu_custom_call.1}
  #allocation0 [shape = 'u32[]', space=smem, size = 0x4, offset = 0x4, fixed_abs, tag = 'smem constant byte address 0x4 - core index']
  #allocation1 [shape = 'u32[72,128]{1,0:T(1,128)}', space=vmem, size = 0x9000, scoped, tag = 'internal scratch']
  #allocation2 [shape = 'f32[8,1296]{1,0:T(8,128)}', space=vmem, size = 0xb000, scoped, tag = 'scratch operand']
  #allocation3 [shape = 'f32[128,1152]{1,0:T(8,128)}', space=vmem, size = 0x90000, scoped, tag = 'scratch operand']
  #allocation4 [shape = 'f32[8,1152]{1,0:T(8,128)}', space=vmem, size = 0x9000, scoped, tag = 'scratch operand']
  %s0 = inlined_call_operand.vmem [shape: f32[2,8,18,36], index: 0, kind: input, shape index: {}]
  %s1 = inlined_call_operand.vmem [shape: f32[8,128], index: 1, kind: input, shape index: {}]
  %s2 = inlined_call_operand.vmem [shape: f32[1,1152], index: 2, kind: input, shape index: {}]
  %s3 = inlined_call_operand.vmem [shape: f32[2,8,32,32], index: 3, kind: input, shape index: {}]
  %s4 = inlined_call_operand.hbm [shape: f32[2,16,32,32], index: 4, kind: output, shape index: {}]
  %s5 = sld [smem:[#allocation0]]
  $region49: #{tpu_custom_call.1} parent=0
    _
  %s7 = ssub.s32 1, %s5
  %s8 = scalar_select 0, %s7, %s5
  $region1: #{tpu_custom_call.1} parent=0
    #allocation5 [shape = 'u8[524288]{0}', space=vmem, size = 0x80000, scoped, tag = 'output window, operand 0']
    #allocation6 [shape = 's32[2]{0}', space=sflag, size = 0x8, scoped, tag = 'scoped memory for tpu_custom_call.1']
    %9 = vsyncpa [#allocation6], 0
    %s10 = scalar_lea.sflag [#allocation6], 1
    %11 = vsyncpa %s10, 0
    loop: start=0, step=1, limit=4
    $region2: #{tpu_custom_call.1} parent=1 // loop_pre_header
      _
    $region3: #{tpu_custom_call.1} parent=1 // loop_header
      %s13 = sphi 0, %s17
      %p14 = scmp.ge.s32.totalorder %s13, 4
      %s23 = sphi 0, %s25
      %s26 = sphi 0, %s23
      %s27 = sphi 0, %s26
      %s43 = sphi 0, %s27
      %s47 = sphi 0, %s47
      %s49 = sphi 0, %s47
      %s50 = sphi 0, %s49
      %s64 = sphi 0, %s50
      %s68 = sphi 0, %s68
      %s70 = sphi 0, %s68
      %s71 = sphi 0, %s70
      %s85 = sphi 0, %s71
      %s91 = sphi 0, %s93
      %s94 = sphi 0, %s91
      %s95 = sphi 0, %s94
      %s111 = sphi 0, %s95
      %s117 = sphi 0, %s119
      %s120 = sphi 0, %s117
      %s121 = sphi 0, %s120
      %s137 = sphi 0, %s121
    $region4: #{tpu_custom_call.1} parent=1 // loop_header_branch
      %16 = sbr.rel (%p14) target = $region8
    $region5: #{tpu_custom_call.1} parent=1 // loop_body
      %s18 = ssub.s32 %s13, 1
      %s19 = ssub.s32 %s13, 2
      %s20 = sadd.s32 %s13, 1
      %s21 = ssub.s32 %s13, %s20
      %p22 = scmp.eq.s32.totalorder %s21, 0
      %s24 = sadd.s32 %s23, 1
      %s25 = scalar_select %p22, %s23, %s24
      %p28 = pneg %p22
      %p29 = scmp.eq.s32.totalorder %s13, 1
      %p30 = por %p28, %p29
      %p31 = scmp.ne.s32.totalorder %s23, %s26
      %p32 = scmp.eq.s32.totalorder %s13, 0
      %p33 = por %p31, %p32
      %p34 = scmp.ne.s32.totalorder %s23, %s26
      %p35 = scmp.eq.s32.totalorder %s18, 1
      %p36 = por %p34, %p35
      %p37 = scmp.ne.s32.totalorder %s26, %s27
      %p38 = scmp.eq.s32.totalorder %s18, 0
      %p39 = por %p37, %p38
      %p40 = scmp.ne.s32.totalorder %s26, %s27
      %p41 = scmp.eq.s32.totalorder %s19, 1
      %p42 = por %p40, %p41
      %p44 = scmp.ne.s32.totalorder %s27, %s43
      %p45 = scmp.eq.s32.totalorder %s19, 0
      %p46 = por %p44, %p45
      %s48 = sadd.s32 %s47, 1
      %p51 = scmp.eq.s32.totalorder %s13, 1
      %p52 = scmp.ne.s32.totalorder %s47, %s49
      %p53 = scmp.eq.s32.totalorder %s13, 0
      %p54 = por %p52, %p53
      %p55 = scmp.ne.s32.totalorder %s47, %s49
      %p56 = scmp.eq.s32.totalorder %s18, 1
      %p57 = por %p55, %p56
      %p58 = scmp.ne.s32.totalorder %s49, %s50
      %p59 = scmp.eq.s32.totalorder %s18, 0
      %p60 = por %p58, %p59
      %p61 = scmp.ne.s32.totalorder %s49, %s50
      %p62 = scmp.eq.s32.totalorder %s19, 1
      %p63 = por %p61, %p62
      %p65 = scmp.ne.s32.totalorder %s50, %s64
      %p66 = scmp.eq.s32.totalorder %s19, 0
      %p67 = por %p65, %p66
      %s69 = sadd.s32 %s68, 1
      %p72 = scmp.eq.s32.totalorder %s13, 1
      %p73 = scmp.ne.s32.totalorder %s68, %s70
      %p74 = scmp.eq.s32.totalorder %s13, 0
      %p75 = por %p73, %p74
      %p76 = scmp.ne.s32.totalorder %s68, %s70
      %p77 = scmp.eq.s32.totalorder %s18, 1
      %p78 = por %p76, %p77
      %p79 = scmp.ne.s32.totalorder %s70, %s71
      %p80 = scmp.eq.s32.totalorder %s18, 0
      %p81 = por %p79, %p80
      %p82 = scmp.ne.s32.totalorder %s70, %s71
      %p83 = scmp.eq.s32.totalorder %s19, 1
      %p84 = por %p82, %p83
      %p86 = scmp.ne.s32.totalorder %s71, %s85
      %p87 = scmp.eq.s32.totalorder %s19, 0
      %p88 = por %p86, %p87
      %s89 = ssub.s32 %s13, %s20
      %p90 = scmp.eq.s32.totalorder %s89, 0
      %s92 = sadd.s32 %s91, 1
      %s93 = scalar_select %p90, %s91, %s92
      %p96 = pneg %p90
      %p97 = scmp.eq.s32.totalorder %s13, 1
      %p98 = por %p96, %p97
      %p99 = scmp.ne.s32.totalorder %s91, %s94
      %p100 = scmp.eq.s32.totalorder %s13, 0
      %p101 = por %p99, %p100
      %p102 = scmp.ne.s32.totalorder %s91, %s94
      %p103 = scmp.eq.s32.totalorder %s18, 1
      %p104 = por %p102, %p103
      %p105 = scmp.ne.s32.totalorder %s94, %s95
      %p106 = scmp.eq.s32.totalorder %s18, 0
      %p107 = por %p105, %p106
      %p108 = scmp.ne.s32.totalorder %s94, %s95
      %p109 = scmp.eq.s32.totalorder %s19, 1
      %p110 = por %p108, %p109
      %p112 = scmp.ne.s32.totalorder %s95, %s111
      %p113 = scmp.eq.s32.totalorder %s19, 0
      %p114 = por %p112, %p113
      %s115 = ssub.s32 %s13, %s20
      %p116 = scmp.eq.s32.totalorder %s115, 0
      %s118 = sadd.s32 %s117, 1
      %s119 = scalar_select %p116, %s117, %s118
      %p122 = pneg %p116
      %p123 = scmp.eq.s32.totalorder %s13, 1
      %p124 = por %p122, %p123
      %p125 = scmp.ne.s32.totalorder %s117, %s120
      %p126 = scmp.eq.s32.totalorder %s13, 0
      %p127 = por %p125, %p126
      %p128 = scmp.ne.s32.totalorder %s117, %s120
      %p129 = scmp.eq.s32.totalorder %s18, 1
      %p130 = por %p128, %p129
      %p131 = scmp.ne.s32.totalorder %s120, %s121
      %p132 = scmp.eq.s32.totalorder %s18, 0
      %p133 = por %p131, %p132
      %p134 = scmp.ne.s32.totalorder %s120, %s121
      %p135 = scmp.eq.s32.totalorder %s19, 1
      %p136 = por %p134, %p135
      %p138 = scmp.ne.s32.totalorder %s121, %s137
      %p139 = scmp.eq.s32.totalorder %s19, 0
      %p140 = por %p138, %p139
      %p141 = scmp.le.s32.totalorder 1, %s13
      %p142 = scmp.lt.s32.totalorder %s13, 3
      %p143 = pnand %p141, %p142
      %p144 = pneg %p143
      // Predicated region
      $region9: #{tpu_custom_call.1} parent=5 // pred_check
        _
      $region10: #{tpu_custom_call.1} parent=5 // pred_check_branch
        %146 = sbr.rel (%p143) target = $region12
      $region11: #{tpu_custom_call.1} parent=5 // pred_region
        %s147 = ssub.s32 %s13, 1
        // Predicated region
        $region13: #{tpu_custom_call.1} parent=11 // pred_check
          %p148 = pneg %p60
        $region14: #{tpu_custom_call.1} parent=11 // pred_check_branch
          %150 = sbr.rel (%p148) target = $region16
        $region15: #{tpu_custom_call.1} parent=11 // pred_region
          _
        $region16: #{tpu_custom_call.1} parent=11 // pred_fallthru
          _
        // Predicated region
        $region17: #{tpu_custom_call.1} parent=11 // pred_check
          %p151 = pneg %p81
        $region18: #{tpu_custom_call.1} parent=11 // pred_check_branch
          %153 = sbr.rel (%p151) target = $region20
        $region19: #{tpu_custom_call.1} parent=11 // pred_region
          _
        $region20: #{tpu_custom_call.1} parent=11 // pred_fallthru
          _
      $region12: #{tpu_custom_call.1} parent=5 // pred_fallthru
        _
      %p154 = scmp.lt.s32.totalorder %s13, 2
      // Predicated region
      $region21: #{tpu_custom_call.1} parent=5 // pred_check
        %p155 = pneg %p154
      $region22: #{tpu_custom_call.1} parent=5 // pred_check_branch
        %157 = sbr.rel (%p155) target = $region24
      $region23: #{tpu_custom_call.1} parent=5 // pred_region
        // Predicated region
        $region25: #{tpu_custom_call.1} parent=23 // pred_check
          %p158 = pneg %p33
        $region26: #{tpu_custom_call.1} parent=23 // pred_check_branch
          %160 = sbr.rel (%p158) target = $region28
        $region27: #{tpu_custom_call.1} parent=23 // pred_region
          %p161 = scmp.lt.s32.totalorder %s13, 1
          %s162 = scalar_select %p161, %s13, 1
          %s163 = smul.addr %s162, 24
          %s164 = smul.addr %s163, 8
          %s165 = scalar_lea.vmem %s0, %s164
        $region28: #{tpu_custom_call.1} parent=23 // pred_fallthru
          _
        // Predicated region
        $region29: #{tpu_custom_call.1} parent=23 // pred_check
          %p166 = pneg %p101
        $region30: #{tpu_custom_call.1} parent=23 // pred_check_branch
          %168 = sbr.rel (%p166) target = $region32
        $region31: #{tpu_custom_call.1} parent=23 // pred_region
          %p169 = scmp.lt.s32.totalorder %s13, 1
          %s170 = scalar_select %p169, %s13, 1
          %s171 = smul.addr %s170, 32
          %s172 = smul.addr %s171, 8
          %s173 = scalar_lea.vmem %s3, %s172
        $region32: #{tpu_custom_call.1} parent=23 // pred_fallthru
          _
      $region24: #{tpu_custom_call.1} parent=5 // pred_fallthru
        _
      %p174 = scmp.le.s32.totalorder 1, %s13
      %p175 = scmp.lt.s32.totalorder %s13, 3
      %p176 = pnand %p174, %p175
      %p177 = pneg %p176
      // Predicated region
      $region33: #{tpu_custom_call.1} parent=5 // pred_check
        _
      $region34: #{tpu_custom_call.1} parent=5 // pred_check_branch
        %179 = sbr.rel (%p176) target = $region36
      $region35: #{tpu_custom_call.1} parent=5 // pred_region
        %s180 = ssub.s32 %s13, 1
        %p181 = scmp.lt.s32.totalorder %s18, 1
        %s182 = scalar_select %p181, %s18, 1
        %s183 = smul.addr %s182, 24
        %s184 = smul.addr %s183, 8
        %s185 = scalar_lea.vmem %s0, %s184
        %p186 = pneg %p39
        %p187 = pneg %p36
        %p188 = pneg %p60
        %p189 = pneg %p57
        %p190 = pneg %p81
        %p191 = pneg %p78
        %p192 = scmp.lt.s32.totalorder %s18, 1
        %s193 = scalar_select %p192, %s18, 1
        %s194 = smul.addr %s193, 32
        %s195 = smul.addr %s194, 8
        %s196 = scalar_lea.vmem %s3, %s195
        %p197 = pneg %p107
        %p198 = pneg %p104
        %p199 = pneg %p133
        %p200 = pneg %p130
        %s201 = sand.u32 %s120, 1
        %s202 = scalar_lea.sflag [#allocation6], %s201
        %s203 = sand.u32 %s120, 1
        %s204 = smul.addr %s203, 512
        %s205 = scalar_lea.vmem [#allocation5], %s204
        %p206 = scmp.lt.s32.totalorder %s18, 1
        %s207 = scalar_select %p206, %s18, 1
        %s208 = smul.addr %s207, 24
        %s209 = smul.addr %s208, 8
        %s210 = scalar_lea.vmem %s0, %s209
        %p211 = scmp.lt.s32.totalorder %s18, 1
        %s212 = scalar_select %p211, %s18, 1
        %s213 = smul.addr %s212, 32
        %s214 = smul.addr %s213, 8
        %s215 = scalar_lea.vmem %s3, %s214
        %216 = vst [vmem:[#allocation2] sm:$0xff] 0.0
        %217 = vst [vmem:[#allocation2 + $0x8] sm:$0xff] 0.0
        %218 = vst [vmem:[#allocation2 + $0x10] sm:$0xff] 0.0
        %219 = vst [vmem:[#allocation2 + $0x18] sm:$0xff] 0.0
        %220 = vst [vmem:[#allocation2 + $0x20] sm:$0xff] 0.0
        %221 = vst [vmem:[#allocation2 + $0x28] sm:$0xff] 0.0
        %222 = vst [vmem:[#allocation2 + $0x30] sm:$0xff] 0.0
        %223 = vst [vmem:[#allocation2 + $0x38] sm:$0xff] 0.0
        %224 = vst [vmem:[#allocation2 + $0x40] sm:$0xff] 0.0
        %225 = vst [vmem:[#allocation2 + $0x48] sm:$0xff] 0.0
        %vm226 = vcmask 130048
        %227 = vst.msk [vmem:[#allocation2 + $0x50] sm:$0xff] %vm226, 0.0
        %v228 = vld [vmem:[%s210] sm:$0x1]
        %v229 = vld [vmem:[%s210 + $0x18] sm:$0x1]
        %v230 = vld [vmem:[%s210 + $0x30] sm:$0x1]
        %v231 = vld [vmem:[%s210 + $0x48] sm:$0x1]
        %v232 = vld [vmem:[%s210 + $0x60] sm:$0x1]
        %v233 = vld [vmem:[%s210 + $0x78] sm:$0x1]
        %v234 = vld [vmem:[%s210 + $0x90] sm:$0x1]
        %v235 = vld [vmem:[%s210 + $0xa8] sm:$0x1]
        %v244 = vrot.slane %v229, 7
        %vm245 = vcmask 1041409
        %v246 = vsel %vm245, %v244, %v228
        %v247 = vrot.slane %v230, 6
        %vm248 = vcmask 1042434
        %v249 = vsel %vm248, %v247, %v246
        %v250 = vrot.slane %v231, 5
        %vm251 = vcmask 1043459
        %v252 = vsel %vm251, %v250, %v249
        %v253 = vrot.slane %v232, 4
        %vm254 = vcmask 1044484
        %v255 = vsel %vm254, %v253, %v252
        %v256 = vrot.slane %v233, 3
        %vm257 = vcmask 1045509
        %v258 = vsel %vm257, %v256, %v255
        %v259 = vrot.slane %v234, 2
        %vm260 = vcmask 1046534
        %v261 = vsel %vm260, %v259, %v258
        %v262 = vrot.slane %v235, 1
        %vm263 = vcmask 1047559
        %v264 = vsel %vm263, %v262, %v261
        %vm266 = vcmask 293888
        %267 = vst.msk [vmem:[#allocation2] sm:$0xff] %vm266, %v264
        %v268 = vld [vmem:[%s210 + $0x1] sm:$0x1]
        %v269 = vld [vmem:[%s210 + $0x19] sm:$0x1]
        %v270 = vld [vmem:[%s210 + $0x31] sm:$0x1]
        %v271 = vld [vmem:[%s210 + $0x49] sm:$0x1]
        %v272 = vld [vmem:[%s210 + $0x61] sm:$0x1]
        %v273 = vld [vmem:[%s210 + $0x79] sm:$0x1]
        %v274 = vld [vmem:[%s210 + $0x91] sm:$0x1]
        %v275 = vld [vmem:[%s210 + $0xa9] sm:$0x1]
        %v284 = vrot.slane %v269, 7
        %v285 = vsel %vm245, %v284, %v268
        %v286 = vrot.slane %v270, 6
        %v287 = vsel %vm248, %v286, %v285
        %v288 = vrot.slane %v271, 5
        %v289 = vsel %vm251, %v288, %v287
        %v290 = vrot.slane %v272, 4
        %v291 = vsel %vm254, %v290, %v289
        %v292 = vrot.slane %v273, 3
        %v293 = vsel %vm257, %v292, %v291
        %v294 = vrot.slane %v274, 2
        %v295 = vsel %vm260, %v294, %v293
        %v296 = vrot.slane %v275, 1
        %v297 = vsel %vm263, %v296, %v295
        %298 = vrot.lane.b32.xlu0 %v297, 72
        %v299 = vpop.permute.xlu0 %298
        %vm301 = vcmask 884288
        %302 = vst.msk [vmem:[#allocation2] sm:$0xff] %vm301, %v299
        %v303 = vld [vmem:[%s210 + $0x2] sm:$0x1]
        %v304 = vld [vmem:[%s210 + $0x1a] sm:$0x1]
        %v305 = vld [vmem:[%s210 + $0x32] sm:$0x1]
        %v306 = vld [vmem:[%s210 + $0x4a] sm:$0x1]
        %v307 = vld [vmem:[%s210 + $0x62] sm:$0x1]
        %v308 = vld [vmem:[%s210 + $0x7a] sm:$0x1]
        %v309 = vld [vmem:[%s210 + $0x92] sm:$0x1]
        %v310 = vld [vmem:[%s210 + $0xaa] sm:$0x1]
        %v319 = vrot.slane %v304, 7
        %v320 = vsel %vm245, %v319, %v303
        %v321 = vrot.slane %v305, 6
        %v322 = vsel %vm248, %v321, %v320
        %v323 = vrot.slane %v306, 5
        %v324 = vsel %vm251, %v323, %v322
        %v325 = vrot.slane %v307, 4
        %v326 = vsel %vm254, %v325, %v324
        %v327 = vrot.slane %v308, 3
        %v328 = vsel %vm257, %v327, %v326
        %v329 = vrot.slane %v309, 2
        %v330 = vsel %vm260, %v329, %v328
        %v331 = vrot.slane %v310, 1
        %v332 = vsel %vm263, %v331, %v330
        %333 = vrot.lane.b32.xlu0 %v332, 16
        %v334 = vpop.permute.xlu0 %333
        %vm336 = vcmask 425088
        %337 = vst.msk [vmem:[#allocation2 + $0x8] sm:$0xff] %vm336, %v334
        %v338 = vld [vmem:[%s210 + $0x3] sm:$0x1]
        %v339 = vld [vmem:[%s210 + $0x1b] sm:$0x1]
        %v340 = vld [vmem:[%s210 + $0x33] sm:$0x1]
        %v341 = vld [vmem:[%s210 + $0x4b] sm:$0x1]
        %v342 = vld [vmem:[%s210 + $0x63] sm:$0x1]
        %v343 = vld [vmem:[%s210 + $0x7b] sm:$0x1]
        %v344 = vld [vmem:[%s210 + $0x93] sm:$0x1]
        %v345 = vld [vmem:[%s210 + $0xab] sm:$0x1]
        %v354 = vrot.slane %v339, 7
        %v355 = vsel %vm245, %v354, %v338
        %v356 = vrot.slane %v340, 6
        %v357 = vsel %vm248, %v356, %v355
        %v358 = vrot.slane %v341, 5
        %v359 = vsel %vm251, %v358, %v357
        %v360 = vrot.slane %v342, 4
        %v361 = vsel %vm254, %v360, %v359
        %v362 = vrot.slane %v343, 3
        %v363 = vsel %vm257, %v362, %v361
        %v364 = vrot.slane %v344, 2
        %v365 = vsel %vm260, %v364, %v363
        %v366 = vrot.slane %v345, 1
        %v367 = vsel %vm263, %v366, %v365
        %368 = vrot.lane.b32.xlu0 %v367, 88
        %v369 = vpop.permute.xlu0 %368
        %vm371 = vcmask 1015488
        %372 = vst.msk [vmem:[#allocation2 + $0x8] sm:$0xff] %vm371, %v369
        %v373 = vld [vmem:[%s210 + $0x4] sm:$0x1]
        %v374 = vld [vmem:[%s210 + $0x1c] sm:$0x1]
        %v375 = vld [vmem:[%s210 + $0x34] sm:$0x1]
        %v376 = vld [vmem:[%s210 + $0x4c] sm:$0x1]
        %v377 = vld [vmem:[%s210 + $0x64] sm:$0x1]
        %v378 = vld [vmem:[%s210 + $0x7c] sm:$0x1]
        %v379 = vld [vmem:[%s210 + $0x94] sm:$0x1]
        %v380 = vld [vmem:[%s210 + $0xac] sm:$0x1]
        %v389 = vrot.slane %v374, 7
        %v390 = vsel %vm245, %v389, %v373
        %v391 = vrot.slane %v375, 6
        %v392 = vsel %vm248, %v391, %v390
        %v393 = vrot.slane %v376, 5
        %v394 = vsel %vm251, %v393, %v392
        %v395 = vrot.slane %v377, 4
        %v396 = vsel %vm254, %v395, %v394
        %v397 = vrot.slane %v378, 3
        %v398 = vsel %vm257, %v397, %v396
        %v399 = vrot.slane %v379, 2
        %v400 = vsel %vm260, %v399, %v398
        %v401 = vrot.slane %v380, 1
        %v402 = vsel %vm263, %v401, %v400
        %403 = vrot.lane.b32.xlu0 %v402, 32
        %v404 = vpop.permute.xlu0 %403
        %vm406 = vcmask 556288
        %407 = vst.msk [vmem:[#allocation2 + $0x10] sm:$0xff] %vm406, %v404
        %v408 = vld [vmem:[%s210 + $0x5] sm:$0x1]
        %v409 = vld [vmem:[%s210 + $0x1d] sm:$0x1]
        %v410 = vld [vmem:[%s210 + $0x35] sm:$0x1]
        %v411 = vld [vmem:[%s210 + $0x4d] sm:$0x1]
        %v412 = vld [vmem:[%s210 + $0x65] sm:$0x1]
        %v413 = vld [vmem:[%s210 + $0x7d] sm:$0x1]
        %v414 = vld [vmem:[%s210 + $0x95] sm:$0x1]
        %v415 = vld [vmem:[%s210 + $0xad] sm:$0x1]
        %v424 = vrot.slane %v409, 7
        %v425 = vsel %vm245, %v424, %v408
        %v426 = vrot.slane %v410, 6
        %v427 = vsel %vm248, %v426, %v425
        %v428 = vrot.slane %v411, 5
        %v429 = vsel %vm251, %v428, %v427
        %v430 = vrot.slane %v412, 4
        %v431 = vsel %vm254, %v430, %v429
        %v432 = vrot.slane %v413, 3
        %v433 = vsel %vm257, %v432, %v431
        %v434 = vrot.slane %v414, 2
        %v435 = vsel %vm260, %v434, %v433
        %v436 = vrot.slane %v415, 1
        %v437 = vsel %vm263, %v436, %v435
        %438 = vrot.lane.b32.xlu0 %v437, 104
        %v439 = vpop.permute.xlu0 %438
        %vm441 = vcmask 1048384
        %442 = vst.msk [vmem:[#allocation2 + $0x10] sm:$0xff] %vm441, %v439
        %vm443 = vcmask 97280
        %444 = vst.msk [vmem:[#allocation2 + $0x18] sm:$0xff] %vm443, %v439
        %v445 = vld [vmem:[%s210 + $0x6] sm:$0x1]
        %v446 = vld [vmem:[%s210 + $0x1e] sm:$0x1]
        %v447 = vld [vmem:[%s210 + $0x36] sm:$0x1]
        %v448 = vld [vmem:[%s210 + $0x4e] sm:$0x1]
        %v449 = vld [vmem:[%s210 + $0x66] sm:$0x1]
        %v450 = vld [vmem:[%s210 + $0x7e] sm:$0x1]
        %v451 = vld [vmem:[%s210 + $0x96] sm:$0x1]
        %v452 = vld [vmem:[%s210 + $0xae] sm:$0x1]
        %v461 = vrot.slane %v446, 7
        %v462 = vsel %vm245, %v461, %v445
        %v463 = vrot.slane %v447, 6
        %v464 = vsel %vm248, %v463, %v462
        %v465 = vrot.slane %v448, 5
        %v466 = vsel %vm251, %v465, %v464
        %v467 = vrot.slane %v449, 4
        %v468 = vsel %vm254, %v467, %v466
        %v469 = vrot.slane %v450, 3
        %v470 = vsel %vm257, %v469, %v468
        %v471 = vrot.slane %v451, 2
        %v472 = vsel %vm260, %v471, %v470
        %v473 = vrot.slane %v452, 1
        %v474 = vsel %vm263, %v473, %v472
        %475 = vrot.lane.b32.xlu0 %v474, 48
        %v476 = vpop.permute.xlu0 %475
        %vm478 = vcmask 687488
        %479 = vst.msk [vmem:[#allocation2 + $0x18] sm:$0xff] %vm478, %v476
        %v480 = vld [vmem:[%s210 + $0x7] sm:$0x1]
        %v481 = vld [vmem:[%s210 + $0x1f] sm:$0x1]
        %v482 = vld [vmem:[%s210 + $0x37] sm:$0x1]
        %v483 = vld [vmem:[%s210 + $0x4f] sm:$0x1]
        %v484 = vld [vmem:[%s210 + $0x67] sm:$0x1]
        %v485 = vld [vmem:[%s210 + $0x7f] sm:$0x1]
        %v486 = vld [vmem:[%s210 + $0x97] sm:$0x1]
        %v487 = vld [vmem:[%s210 + $0xaf] sm:$0x1]
        %v496 = vrot.slane %v481, 7
        %v497 = vsel %vm245, %v496, %v480
        %v498 = vrot.slane %v482, 6
        %v499 = vsel %vm248, %v498, %v497
        %v500 = vrot.slane %v483, 5
        %v501 = vsel %vm251, %v500, %v499
        %v502 = vrot.slane %v484, 4
        %v503 = vsel %vm254, %v502, %v501
        %v504 = vrot.slane %v485, 3
        %v505 = vsel %vm257, %v504, %v503
        %v506 = vrot.slane %v486, 2
        %v507 = vsel %vm260, %v506, %v505
        %v508 = vrot.slane %v487, 1
        %v509 = vsel %vm263, %v508, %v507
        %510 = vrot.lane.b32.xlu0 %v509, 120
        %v511 = vpop.permute.xlu0 %510
        %vm513 = vcmask 1048512
        %514 = vst.msk [vmem:[#allocation2 + $0x18] sm:$0xff] %vm513, %v511
        %vm515 = vcmask 228352
        %516 = vst.msk [vmem:[#allocation2 + $0x20] sm:$0xff] %vm515, %v511
        %v517 = vld [vmem:[%s210 + $0x8] sm:$0x1]
        %v518 = vld [vmem:[%s210 + $0x20] sm:$0x1]
        %v519 = vld [vmem:[%s210 + $0x38] sm:$0x1]
        %v520 = vld [vmem:[%s210 + $0x50] sm:$0x1]
        %v521 = vld [vmem:[%s210 + $0x68] sm:$0x1]
        %v522 = vld [vmem:[%s210 + $0x80] sm:$0x1]
        %v523 = vld [vmem:[%s210 + $0x98] sm:$0x1]
        %v524 = vld [vmem:[%s210 + $0xb0] sm:$0x1]
        %v533 = vrot.slane %v518, 7
        %v534 = vsel %vm245, %v533, %v517
        %v535 = vrot.slane %v519, 6
        %v536 = vsel %vm248, %v535, %v534
        %v537 = vrot.slane %v520, 5
        %v538 = vsel %vm251, %v537, %v536
        %v539 = vrot.slane %v521, 4
        %v540 = vsel %vm254, %v539, %v538
        %v541 = vrot.slane %v522, 3
        %v542 = vsel %vm257, %v541, %v540
        %v543 = vrot.slane %v523, 2
        %v544 = vsel %vm260, %v543, %v542
        %v545 = vrot.slane %v524, 1
        %v546 = vsel %vm263, %v545, %v544
        %547 = vrot.lane.b32.xlu0 %v546, 64
        %v548 = vpop.permute.xlu0 %547
        %vm550 = vcmask 818688
        %551 = vst.msk [vmem:[#allocation2 + $0x20] sm:$0xff] %vm550, %v548
        %v552 = vld [vmem:[%s210 + $0x9] sm:$0x1]
        %v553 = vld [vmem:[%s210 + $0x21] sm:$0x1]
        %v554 = vld [vmem:[%s210 + $0x39] sm:$0x1]
        %v555 = vld [vmem:[%s210 + $0x51] sm:$0x1]
        %v556 = vld [vmem:[%s210 + $0x69] sm:$0x1]
        %v557 = vld [vmem:[%s210 + $0x81] sm:$0x1]
        %v558 = vld [vmem:[%s210 + $0x99] sm:$0x1]
        %v559 = vld [vmem:[%s210 + $0xb1] sm:$0x1]
        %v568 = vrot.slane %v553, 7
        %v569 = vsel %vm245, %v568, %v552
        %v570 = vrot.slane %v554, 6
        %v571 = vsel %vm248, %v570, %v569
        %v572 = vrot.slane %v555, 5
        %v573 = vsel %vm251, %v572, %v571
        %v574 = vrot.slane %v556, 4
        %v575 = vsel %vm254, %v574, %v573
        %v576 = vrot.slane %v557, 3
        %v577 = vsel %vm257, %v576, %v575
        %v578 = vrot.slane %v558, 2
        %v579 = vsel %vm260, %v578, %v577
        %v580 = vrot.slane %v559, 1
        %v581 = vsel %vm263, %v580, %v579
        %582 = vrot.lane.b32.xlu0 %v581, 8
        %v583 = vpop.permute.xlu0 %582
        %vm585 = vcmask 359488
        %586 = vst.msk [vmem:[#allocation2 + $0x28] sm:$0xff] %vm585, %v583
        %v587 = vld [vmem:[%s210 + $0xa] sm:$0x1]
        %v588 = vld [vmem:[%s210 + $0x22] sm:$0x1]
        %v589 = vld [vmem:[%s210 + $0x3a] sm:$0x1]
        %v590 = vld [vmem:[%s210 + $0x52] sm:$0x1]
        %v591 = vld [vmem:[%s210 + $0x6a] sm:$0x1]
        %v592 = vld [vmem:[%s210 + $0x82] sm:$0x1]
        %v593 = vld [vmem:[%s210 + $0x9a] sm:$0x1]
        %v594 = vld [vmem:[%s210 + $0xb2] sm:$0x1]
        %v603 = vrot.slane %v588, 7
        %v604 = vsel %vm245, %v603, %v587
        %v605 = vrot.slane %v589, 6
        %v606 = vsel %vm248, %v605, %v604
        %v607 = vrot.slane %v590, 5
        %v608 = vsel %vm251, %v607, %v606
        %v609 = vrot.slane %v591, 4
        %v610 = vsel %vm254, %v609, %v608
        %v611 = vrot.slane %v592, 3
        %v612 = vsel %vm257, %v611, %v610
        %v613 = vrot.slane %v593, 2
        %v614 = vsel %vm260, %v613, %v612
        %v615 = vrot.slane %v594, 1
        %v616 = vsel %vm263, %v615, %v614
        %617 = vrot.lane.b32.xlu0 %v616, 80
        %v618 = vpop.permute.xlu0 %617
        %vm620 = vcmask 949888
        %621 = vst.msk [vmem:[#allocation2 + $0x28] sm:$0xff] %vm620, %v618
        %v622 = vld [vmem:[%s210 + $0xb] sm:$0x1]
        %v623 = vld [vmem:[%s210 + $0x23] sm:$0x1]
        %v624 = vld [vmem:[%s210 + $0x3b] sm:$0x1]
        %v625 = vld [vmem:[%s210 + $0x53] sm:$0x1]
        %v626 = vld [vmem:[%s210 + $0x6b] sm:$0x1]
        %v627 = vld [vmem:[%s210 + $0x83] sm:$0x1]
        %v628 = vld [vmem:[%s210 + $0x9b] sm:$0x1]
        %v629 = vld [vmem:[%s210 + $0xb3] sm:$0x1]
        %v638 = vrot.slane %v623, 7
        %v639 = vsel %vm245, %v638, %v622
        %v640 = vrot.slane %v624, 6
        %v641 = vsel %vm248, %v640, %v639
        %v642 = vrot.slane %v625, 5
        %v643 = vsel %vm251, %v642, %v641
        %v644 = vrot.slane %v626, 4
        %v645 = vsel %vm254, %v644, %v643
        %v646 = vrot.slane %v627, 3
        %v647 = vsel %vm257, %v646, %v645
        %v648 = vrot.slane %v628, 2
        %v649 = vsel %vm260, %v648, %v647
        %v650 = vrot.slane %v629, 1
        %v651 = vsel %vm263, %v650, %v649
        %652 = vrot.lane.b32.xlu0 %v651, 24
        %v653 = vpop.permute.xlu0 %652
        %vm655 = vcmask 490688
        %656 = vst.msk [vmem:[#allocation2 + $0x30] sm:$0xff] %vm655, %v653
        %v657 = vld [vmem:[%s210 + $0xc] sm:$0x1]
        %v658 = vld [vmem:[%s210 + $0x24] sm:$0x1]
        %v659 = vld [vmem:[%s210 + $0x3c] sm:$0x1]
        %v660 = vld [vmem:[%s210 + $0x54] sm:$0x1]
        %v661 = vld [vmem:[%s210 + $0x6c] sm:$0x1]
        %v662 = vld [vmem:[%s210 + $0x84] sm:$0x1]
        %v663 = vld [vmem:[%s210 + $0x9c] sm:$0x1]
        %v664 = vld [vmem:[%s210 + $0xb4] sm:$0x1]
        %v673 = vrot.slane %v658, 7
        %v674 = vsel %vm245, %v673, %v657
        %v675 = vrot.slane %v659, 6
        %v676 = vsel %vm248, %v675, %v674
        %v677 = vrot.slane %v660, 5
        %v678 = vsel %vm251, %v677, %v676
        %v679 = vrot.slane %v661, 4
        %v680 = vsel %vm254, %v679, %v678
        %v681 = vrot.slane %v662, 3
        %v682 = vsel %vm257, %v681, %v680
        %v683 = vrot.slane %v663, 2
        %v684 = vsel %vm260, %v683, %v682
        %v685 = vrot.slane %v664, 1
        %v686 = vsel %vm263, %v685, %v684
        %687 = vrot.lane.b32.xlu0 %v686, 96
        %v688 = vpop.permute.xlu0 %687
        %vm690 = vcmask 1048320
        %691 = vst.msk [vmem:[#allocation2 + $0x30] sm:$0xff] %vm690, %v688
        %vm692 = vcmask 31744
        %693 = vst.msk [vmem:[#allocation2 + $0x38] sm:$0xff] %vm692, %v688
        %v694 = vld [vmem:[%s210 + $0xd] sm:$0x1]
        %v695 = vld [vmem:[%s210 + $0x25] sm:$0x1]
        %v696 = vld [vmem:[%s210 + $0x3d] sm:$0x1]
        %v697 = vld [vmem:[%s210 + $0x55] sm:$0x1]
        %v698 = vld [vmem:[%s210 + $0x6d] sm:$0x1]
        %v699 = vld [vmem:[%s210 + $0x85] sm:$0x1]
        %v700 = vld [vmem:[%s210 + $0x9d] sm:$0x1]
        %v701 = vld [vmem:[%s210 + $0xb5] sm:$0x1]
        %v710 = vrot.slane %v695, 7
        %v711 = vsel %vm245, %v710, %v694
        %v712 = vrot.slane %v696, 6
        %v713 = vsel %vm248, %v712, %v711
        %v714 = vrot.slane %v697, 5
        %v715 = vsel %vm251, %v714, %v713
        %v716 = vrot.slane %v698, 4
        %v717 = vsel %vm254, %v716, %v715
        %v718 = vrot.slane %v699, 3
        %v719 = vsel %vm257, %v718, %v717
        %v720 = vrot.slane %v700, 2
        %v721 = vsel %vm260, %v720, %v719
        %v722 = vrot.slane %v701, 1
        %v723 = vsel %vm263, %v722, %v721
        %724 = vrot.lane.b32.xlu0 %v723, 40
        %v725 = vpop.permute.xlu0 %724
        %vm727 = vcmask 621888
        %728 = vst.msk [vmem:[#allocation2 + $0x38] sm:$0xff] %vm727, %v725
        %v729 = vld [vmem:[%s210 + $0xe] sm:$0x1]
        %v730 = vld [vmem:[%s210 + $0x26] sm:$0x1]
        %v731 = vld [vmem:[%s210 + $0x3e] sm:$0x1]
        %v732 = vld [vmem:[%s210 + $0x56] sm:$0x1]
        %v733 = vld [vmem:[%s210 + $0x6e] sm:$0x1]
        %v734 = vld [vmem:[%s210 + $0x86] sm:$0x1]
        %v735 = vld [vmem:[%s210 + $0x9e] sm:$0x1]
        %v736 = vld [vmem:[%s210 + $0xb6] sm:$0x1]
        %v745 = vrot.slane %v730, 7
        %v746 = vsel %vm245, %v745, %v729
        %v747 = vrot.slane %v731, 6
        %v748 = vsel %vm248, %v747, %v746
        %v749 = vrot.slane %v732, 5
        %v750 = vsel %vm251, %v749, %v748
        %v751 = vrot.slane %v733, 4
        %v752 = vsel %vm254, %v751, %v750
        %v753 = vrot.slane %v734, 3
        %v754 = vsel %vm257, %v753, %v752
        %v755 = vrot.slane %v735, 2
        %v756 = vsel %vm260, %v755, %v754
        %v757 = vrot.slane %v736, 1
        %v758 = vsel %vm263, %v757, %v756
        %759 = vrot.lane.b32.xlu0 %v758, 112
        %v760 = vpop.permute.xlu0 %759
        %vm762 = vcmask 1048448
        %763 = vst.msk [vmem:[#allocation2 + $0x38] sm:$0xff] %vm762, %v760
        %vm764 = vcmask 162816
        %765 = vst.msk [vmem:[#allocation2 + $0x40] sm:$0xff] %vm764, %v760
        %v766 = vld [vmem:[%s210 + $0xf] sm:$0x1]
        %v767 = vld [vmem:[%s210 + $0x27] sm:$0x1]
        %v768 = vld [vmem:[%s210 + $0x3f] sm:$0x1]
        %v769 = vld [vmem:[%s210 + $0x57] sm:$0x1]
        %v770 = vld [vmem:[%s210 + $0x6f] sm:$0x1]
        %v771 = vld [vmem:[%s210 + $0x87] sm:$0x1]
        %v772 = vld [vmem:[%s210 + $0x9f] sm:$0x1]
        %v773 = vld [vmem:[%s210 + $0xb7] sm:$0x1]
        %v782 = vrot.slane %v767, 7
        %v783 = vsel %vm245, %v782, %v766
        %v784 = vrot.slane %v768, 6
        %v785 = vsel %vm248, %v784, %v783
        %v786 = vrot.slane %v769, 5
        %v787 = vsel %vm251, %v786, %v785
        %v788 = vrot.slane %v770, 4
        %v789 = vsel %vm254, %v788, %v787
        %v790 = vrot.slane %v771, 3
        %v791 = vsel %vm257, %v790, %v789
        %v792 = vrot.slane %v772, 2
        %v793 = vsel %vm260, %v792, %v791
        %v794 = vrot.slane %v773, 1
        %v795 = vsel %vm263, %v794, %v793
        %796 = vrot.lane.b32.xlu0 %v795, 56
        %v797 = vpop.permute.xlu0 %796
        %vm799 = vcmask 753088
        %800 = vst.msk [vmem:[#allocation2 + $0x40] sm:$0xff] %vm799, %v797
        %v801 = vld [vmem:[%s210 + $0x10] sm:$0x1]
        %v802 = vld [vmem:[%s210 + $0x28] sm:$0x1]
        %v803 = vld [vmem:[%s210 + $0x40] sm:$0x1]
        %v804 = vld [vmem:[%s210 + $0x58] sm:$0x1]
        %v805 = vld [vmem:[%s210 + $0x70] sm:$0x1]
        %v806 = vld [vmem:[%s210 + $0x88] sm:$0x1]
        %v807 = vld [vmem:[%s210 + $0xa0] sm:$0x1]
        %v808 = vld [vmem:[%s210 + $0xb8] sm:$0x1]
        %v817 = vrot.slane %v802, 7
        %v818 = vsel %vm245, %v817, %v801
        %v819 = vrot.slane %v803, 6
        %v820 = vsel %vm248, %v819, %v818
        %v821 = vrot.slane %v804, 5
        %v822 = vsel %vm251, %v821, %v820
        %v823 = vrot.slane %v805, 4
        %v824 = vsel %vm254, %v823, %v822
        %v825 = vrot.slane %v806, 3
        %v826 = vsel %vm257, %v825, %v824
        %v827 = vrot.slane %v807, 2
        %v828 = vsel %vm260, %v827, %v826
        %v829 = vrot.slane %v808, 1
        %v830 = vsel %vm263, %v829, %v828
        %832 = vst.msk [vmem:[#allocation2 + $0x48] sm:$0xff] %vm266, %v830
        %v833 = vld [vmem:[%s210 + $0x11] sm:$0x1]
        %v834 = vld [vmem:[%s210 + $0x29] sm:$0x1]
        %v835 = vld [vmem:[%s210 + $0x41] sm:$0x1]
        %v836 = vld [vmem:[%s210 + $0x59] sm:$0x1]
        %v837 = vld [vmem:[%s210 + $0x71] sm:$0x1]
        %v838 = vld [vmem:[%s210 + $0x89] sm:$0x1]
        %v839 = vld [vmem:[%s210 + $0xa1] sm:$0x1]
        %v840 = vld [vmem:[%s210 + $0xb9] sm:$0x1]
        %v849 = vrot.slane %v834, 7
        %v850 = vsel %vm245, %v849, %v833
        %v851 = vrot.slane %v835, 6
        %v852 = vsel %vm248, %v851, %v850
        %v853 = vrot.slane %v836, 5
        %v854 = vsel %vm251, %v853, %v852
        %v855 = vrot.slane %v837, 4
        %v856 = vsel %vm254, %v855, %v854
        %v857 = vrot.slane %v838, 3
        %v858 = vsel %vm257, %v857, %v856
        %v859 = vrot.slane %v839, 2
        %v860 = vsel %vm260, %v859, %v858
        %v861 = vrot.slane %v840, 1
        %v862 = vsel %vm263, %v861, %v860
        %863 = vrot.lane.b32.xlu0 %v862, 72
        %v864 = vpop.permute.xlu0 %863
        %866 = vst.msk [vmem:[#allocation2 + $0x48] sm:$0xff] %vm301, %v864
        %v867 = vld [vmem:[#allocation2] sm:$0xff]
        %v868 = vld [vmem:[#allocation2 + $0x8] sm:$0xff]
        %v869 = vld [vmem:[#allocation2 + $0x10] sm:$0xff]
        %v870 = vld [vmem:[#allocation2 + $0x18] sm:$0xff]
        %v871 = vld [vmem:[#allocation2 + $0x20] sm:$0xff]
        %v872 = vld [vmem:[#allocation2 + $0x28] sm:$0xff]
        %v873 = vld [vmem:[#allocation2 + $0x30] sm:$0xff]
        %v874 = vld [vmem:[#allocation2 + $0x38] sm:$0xff]
        %v875 = vld [vmem:[#allocation2 + $0x40] sm:$0xff]
        %876 = vst [vmem:[#allocation3] sm:$0xff] %v867
        %877 = vst [vmem:[#allocation3 + $0x8] sm:$0xff] %v868
        %878 = vst [vmem:[#allocation3 + $0x10] sm:$0xff] %v869
        %879 = vst [vmem:[#allocation3 + $0x18] sm:$0xff] %v870
        %880 = vst [vmem:[#allocation3 + $0x20] sm:$0xff] %v871
        %881 = vst [vmem:[#allocation3 + $0x28] sm:$0xff] %v872
        %882 = vst [vmem:[#allocation3 + $0x30] sm:$0xff] %v873
        %883 = vst [vmem:[#allocation3 + $0x38] sm:$0xff] %v874
        %884 = vst [vmem:[#allocation3 + $0x40] sm:$0xff] %v875
        %v885 = vld [vmem:[#allocation2] sm:$0xff]
        %v886 = vld [vmem:[#allocation2 + $0x8] sm:$0xff]
        %v887 = vld [vmem:[#allocation2 + $0x10] sm:$0xff]
        %v888 = vld [vmem:[#allocation2 + $0x18] sm:$0xff]
        %v889 = vld [vmem:[#allocation2 + $0x20] sm:$0xff]
        %v890 = vld [vmem:[#allocation2 + $0x28] sm:$0xff]
        %v891 = vld [vmem:[#allocation2 + $0x30] sm:$0xff]
        %v892 = vld [vmem:[#allocation2 + $0x38] sm:$0xff]
        %v893 = vld [vmem:[#allocation2 + $0x40] sm:$0xff]
        %v894 = vld [vmem:[#allocation2 + $0x48] sm:$0xff]
        %905 = vrot.lane.b32.xlu0 %v885, 126
        %v906 = vpop.permute.xlu0 %905
        %907 = vrot.lane.b32.xlu0 %v886, 126
        %v908 = vpop.permute.xlu0 %907
        %909 = vrot.lane.b32.xlu0 %v887, 126
        %v910 = vpop.permute.xlu0 %909
        %911 = vrot.lane.b32.xlu0 %v888, 126
        %v912 = vpop.permute.xlu0 %911
        %913 = vrot.lane.b32.xlu0 %v889, 126
        %v914 = vpop.permute.xlu0 %913
        %915 = vrot.lane.b32.xlu0 %v890, 126
        %v916 = vpop.permute.xlu0 %915
        %917 = vrot.lane.b32.xlu0 %v891, 126
        %v918 = vpop.permute.xlu0 %917
        %919 = vrot.lane.b32.xlu0 %v892, 126
        %v920 = vpop.permute.xlu0 %919
        %921 = vrot.lane.b32.xlu0 %v893, 126
        %v922 = vpop.permute.xlu0 %921
        %923 = vrot.lane.b32.xlu0 %v894, 126
        %v924 = vpop.permute.xlu0 %923
        %vm925 = vcmask 1031168
        %v926 = vsel %vm925, %v906, %v908
        %v927 = vsel %vm925, %v908, %v910
        %v928 = vsel %vm925, %v910, %v912
        %v929 = vsel %vm925, %v912, %v914
        %v930 = vsel %vm925, %v914, %v916
        %v931 = vsel %vm925, %v916, %v918
        %v932 = vsel %vm925, %v918, %v920
        %v933 = vsel %vm925, %v920, %v922
        %v934 = vsel %vm925, %v922, %v924
        %944 = vst [vmem:[#allocation3 + $0x48] sm:$0xff] %v926
        %945 = vst [vmem:[#allocation3 + $0x50] sm:$0xff] %v927
        %946 = vst [vmem:[#allocation3 + $0x58] sm:$0xff] %v928
        %947 = vst [vmem:[#allocation3 + $0x60] sm:$0xff] %v929
        %948 = vst [vmem:[#allocation3 + $0x68] sm:$0xff] %v930
        %949 = vst [vmem:[#allocation3 + $0x70] sm:$0xff] %v931
        %950 = vst [vmem:[#allocation3 + $0x78] sm:$0xff] %v932
        %951 = vst [vmem:[#allocation3 + $0x80] sm:$0xff] %v933
        %952 = vst [vmem:[#allocation3 + $0x88] sm:$0xff] %v934
        %v953 = vld [vmem:[#allocation2] sm:$0xff]
        %v954 = vld [vmem:[#allocation2 + $0x8] sm:$0xff]
        %v955 = vld [vmem:[#allocation2 + $0x10] sm:$0xff]
        %v956 = vld [vmem:[#allocation2 + $0x18] sm:$0xff]
        %v957 = vld [vmem:[#allocation2 + $0x20] sm:$0xff]
        %v958 = vld [vmem:[#allocation2 + $0x28] sm:$0xff]
        %v959 = vld [vmem:[#allocation2 + $0x30] sm:$0xff]
        %v960 = vld [vmem:[#allocation2 + $0x38] sm:$0xff]
        %v961 = vld [vmem:[#allocation2 + $0x40] sm:$0xff]
        %v962 = vld [vmem:[#allocation2 + $0x48] sm:$0xff]
        %973 = vrot.lane.b32.xlu0 %v953, 56
        %v974 = vpop.permute.xlu0 %973
        %975 = vrot.lane.b32.xlu0 %v954, 56
        %v976 = vpop.permute.xlu0 %975
        %977 = vrot.lane.b32.xlu0 %v955, 56
        %v978 = vpop.permute.xlu0 %977
        %979 = vrot.lane.b32.xlu0 %v956, 56
        %v980 = vpop.permute.xlu0 %979
        %981 = vrot.lane.b32.xlu0 %v957, 56
        %v982 = vpop.permute.xlu0 %981
        %983 = vrot.lane.b32.xlu0 %v958, 56
        %v984 = vpop.permute.xlu0 %983
        %985 = vrot.lane.b32.xlu0 %v959, 56
        %v986 = vpop.permute.xlu0 %985
        %987 = vrot.lane.b32.xlu0 %v960, 56
        %v988 = vpop.permute.xlu0 %987
        %989 = vrot.lane.b32.xlu0 %v961, 56
        %v990 = vpop.permute.xlu0 %989
        %991 = vrot.lane.b32.xlu0 %v962, 56
        %v992 = vpop.permute.xlu0 %991
        %vm993 = vcmask 457728
        %v994 = vsel %vm993, %v974, %v976
        %v995 = vsel %vm993, %v976, %v978
        %v996 = vsel %vm993, %v978, %v980
        %v997 = vsel %vm993, %v980, %v982
        %v998 = vsel %vm993, %v982, %v984
        %v999 = vsel %vm993, %v984, %v986
        %v1000 = vsel %vm993, %v986, %v988
        %v1001 = vsel %vm993, %v988, %v990
        %v1002 = vsel %vm993, %v990, %v992
        %1012 = vst [vmem:[#allocation3 + $0x90] sm:$0xff] %v994
        %1013 = vst [vmem:[#allocation3 + $0x98] sm:$0xff] %v995
        %1014 = vst [vmem:[#allocation3 + $0xa0] sm:$0xff] %v996
        %1015 = vst [vmem:[#allocation3 + $0xa8] sm:$0xff] %v997
        %1016 = vst [vmem:[#allocation3 + $0xb0] sm:$0xff] %v998
        %1017 = vst [vmem:[#allocation3 + $0xb8] sm:$0xff] %v999
        %1018 = vst [vmem:[#allocation3 + $0xc0] sm:$0xff] %v1000
        %1019 = vst [vmem:[#allocation3 + $0xc8] sm:$0xff] %v1001
        %1020 = vst [vmem:[#allocation3 + $0xd0] sm:$0xff] %v1002
        %v1021 = vld [vmem:[#allocation2] sm:$0xff]
        %v1022 = vld [vmem:[#allocation2 + $0x8] sm:$0xff]
        %v1023 = vld [vmem:[#allocation2 + $0x10] sm:$0xff]
        %v1024 = vld [vmem:[#allocation2 + $0x18] sm:$0xff]
        %v1025 = vld [vmem:[#allocation2 + $0x20] sm:$0xff]
        %v1026 = vld [vmem:[#allocation2 + $0x28] sm:$0xff]
        %v1027 = vld [vmem:[#allocation2 + $0x30] sm:$0xff]
        %v1028 = vld [vmem:[#allocation2 + $0x38] sm:$0xff]
        %v1029 = vld [vmem:[#allocation2 + $0x40] sm:$0xff]
        %v1030 = vld [vmem:[#allocation2 + $0x48] sm:$0xff]
        %1041 = vrot.lane.b32.xlu0 %v1021, 54
        %v1042 = vpop.permute.xlu0 %1041
        %1043 = vrot.lane.b32.xlu0 %v1022, 54
        %v1044 = vpop.permute.xlu0 %1043
        %1045 = vrot.lane.b32.xlu0 %v1023, 54
        %v1046 = vpop.permute.xlu0 %1045
        %1047 = vrot.lane.b32.xlu0 %v1024, 54
        %v1048 = vpop.permute.xlu0 %1047
        %1049 = vrot.lane.b32.xlu0 %v1025, 54
        %v1050 = vpop.permute.xlu0 %1049
        %1051 = vrot.lane.b32.xlu0 %v1026, 54
        %v1052 = vpop.permute.xlu0 %1051
        %1053 = vrot.lane.b32.xlu0 %v1027, 54
        %v1054 = vpop.permute.xlu0 %1053
        %1055 = vrot.lane.b32.xlu0 %v1028, 54
        %v1056 = vpop.permute.xlu0 %1055
        %1057 = vrot.lane.b32.xlu0 %v1029, 54
        %v1058 = vpop.permute.xlu0 %1057
        %1059 = vrot.lane.b32.xlu0 %v1030, 54
        %v1060 = vpop.permute.xlu0 %1059
        %vm1061 = vcmask 441344
        %v1062 = vsel %vm1061, %v1042, %v1044
        %v1063 = vsel %vm1061, %v1044, %v1046
        %v1064 = vsel %vm1061, %v1046, %v1048
        %v1065 = vsel %vm1061, %v1048, %v1050
        %v1066 = vsel %vm1061, %v1050, %v1052
        %v1067 = vsel %vm1061, %v1052, %v1054
        %v1068 = vsel %vm1061, %v1054, %v1056
        %v1069 = vsel %vm1061, %v1056, %v1058
        %v1070 = vsel %vm1061, %v1058, %v1060
        %1080 = vst [vmem:[#allocation3 + $0xd8] sm:$0xff] %v1062
        %1081 = vst [vmem:[#allocation3 + $0xe0] sm:$0xff] %v1063
        %1082 = vst [vmem:[#allocation3 + $0xe8] sm:$0xff] %v1064
        %1083 = vst [vmem:[#allocation3 + $0xf0] sm:$0xff] %v1065
        %1084 = vst [vmem:[#allocation3 + $0xf8] sm:$0xff] %v1066
        %1085 = vst [vmem:[#allocation3 + $0x100] sm:$0xff] %v1067
        %1086 = vst [vmem:[#allocation3 + $0x108] sm:$0xff] %v1068
        %1087 = vst [vmem:[#allocation3 + $0x110] sm:$0xff] %v1069
        %1088 = vst [vmem:[#allocation3 + $0x118] sm:$0xff] %v1070
        %v1089 = vld [vmem:[#allocation2] sm:$0xff]
        %v1090 = vld [vmem:[#allocation2 + $0x8] sm:$0xff]
        %v1091 = vld [vmem:[#allocation2 + $0x10] sm:$0xff]
        %v1092 = vld [vmem:[#allocation2 + $0x18] sm:$0xff]
        %v1093 = vld [vmem:[#allocation2 + $0x20] sm:$0xff]
        %v1094 = vld [vmem:[#allocation2 + $0x28] sm:$0xff]
        %v1095 = vld [vmem:[#allocation2 + $0x30] sm:$0xff]
        %v1096 = vld [vmem:[#allocation2 + $0x38] sm:$0xff]
        %v1097 = vld [vmem:[#allocation2 + $0x40] sm:$0xff]
        %v1098 = vld [vmem:[#allocation2 + $0x48] sm:$0xff]
        %1109 = vrot.lane.b32.xlu0 %v1089, 127
        %v1110 = vpop.permute.xlu0 %1109
        %1111 = vrot.lane.b32.xlu0 %v1090, 127
        %v1112 = vpop.permute.xlu0 %1111
        %1113 = vrot.lane.b32.xlu0 %v1091, 127
        %v1114 = vpop.permute.xlu0 %1113
        %1115 = vrot.lane.b32.xlu0 %v1092, 127
        %v1116 = vpop.permute.xlu0 %1115
        %1117 = vrot.lane.b32.xlu0 %v1093, 127
        %v1118 = vpop.permute.xlu0 %1117
        %1119 = vrot.lane.b32.xlu0 %v1094, 127
        %v1120 = vpop.permute.xlu0 %1119
        %1121 = vrot.lane.b32.xlu0 %v1095, 127
        %v1122 = vpop.permute.xlu0 %1121
        %1123 = vrot.lane.b32.xlu0 %v1096, 127
        %v1124 = vpop.permute.xlu0 %1123
        %1125 = vrot.lane.b32.xlu0 %v1097, 127
        %v1126 = vpop.permute.xlu0 %1125
        %1127 = vrot.lane.b32.xlu0 %v1098, 127
        %v1128 = vpop.permute.xlu0 %1127
        %vm1129 = vcmask 1039360
        %v1130 = vsel %vm1129, %v1110, %v1112
        %v1131 = vsel %vm1129, %v1112, %v1114
        %v1132 = vsel %vm1129, %v1114, %v1116
        %v1133 = vsel %vm1129, %v1116, %v1118
        %v1134 = vsel %vm1129, %v1118, %v1120
        %v1135 = vsel %vm1129, %v1120, %v1122
        %v1136 = vsel %vm1129, %v1122, %v1124
        %v1137 = vsel %vm1129, %v1124, %v1126
        %v1138 = vsel %vm1129, %v1126, %v1128
        %1148 = vst [vmem:[#allocation3 + $0x120] sm:$0xff] %v1130
        %1149 = vst [vmem:[#allocation3 + $0x128] sm:$0xff] %v1131
        %1150 = vst [vmem:[#allocation3 + $0x130] sm:$0xff] %v1132
        %1151 = vst [vmem:[#allocation3 + $0x138] sm:$0xff] %v1133
        %1152 = vst [vmem:[#allocation3 + $0x140] sm:$0xff] %v1134
        %1153 = vst [vmem:[#allocation3 + $0x148] sm:$0xff] %v1135
        %1154 = vst [vmem:[#allocation3 + $0x150] sm:$0xff] %v1136
        %1155 = vst [vmem:[#allocation3 + $0x158] sm:$0xff] %v1137
        %1156 = vst [vmem:[#allocation3 + $0x160] sm:$0xff] %v1138
        %v1157 = vld [vmem:[#allocation2] sm:$0xff]
        %v1158 = vld [vmem:[#allocation2 + $0x8] sm:$0xff]
        %v1159 = vld [vmem:[#allocation2 + $0x10] sm:$0xff]
        %v1160 = vld [vmem:[#allocation2 + $0x18] sm:$0xff]
        %v1161 = vld [vmem:[#allocation2 + $0x20] sm:$0xff]
        %v1162 = vld [vmem:[#allocation2 + $0x28] sm:$0xff]
        %v1163 = vld [vmem:[#allocation2 + $0x30] sm:$0xff]
        %v1164 = vld [vmem:[#allocation2 + $0x38] sm:$0xff]
        %v1165 = vld [vmem:[#allocation2 + $0x40] sm:$0xff]
        %v1166 = vld [vmem:[#allocation2 + $0x48] sm:$0xff]
        %1177 = vrot.lane.b32.xlu0 %v1157, 125
        %v1178 = vpop.permute.xlu0 %1177
        %1179 = vrot.lane.b32.xlu0 %v1158, 125
        %v1180 = vpop.permute.xlu0 %1179
        %1181 = vrot.lane.b32.xlu0 %v1159, 125
        %v1182 = vpop.permute.xlu0 %1181
        %1183 = vrot.lane.b32.xlu0 %v1160, 125
        %v1184 = vpop.permute.xlu0 %1183
        %1185 = vrot.lane.b32.xlu0 %v1161, 125
        %v1186 = vpop.permute.xlu0 %1185
        %1187 = vrot.lane.b32.xlu0 %v1162, 125
        %v1188 = vpop.permute.xlu0 %1187
        %1189 = vrot.lane.b32.xlu0 %v1163, 125
        %v1190 = vpop.permute.xlu0 %1189
        %1191 = vrot.lane.b32.xlu0 %v1164, 125
        %v1192 = vpop.permute.xlu0 %1191
        %1193 = vrot.lane.b32.xlu0 %v1165, 125
        %v1194 = vpop.permute.xlu0 %1193
        %1195 = vrot.lane.b32.xlu0 %v1166, 125
        %v1196 = vpop.permute.xlu0 %1195
        %vm1197 = vcmask 1022976
        %v1198 = vsel %vm1197, %v1178, %v1180
        %v1199 = vsel %vm1197, %v1180, %v1182
        %v1200 = vsel %vm1197, %v1182, %v1184
        %v1201 = vsel %vm1197, %v1184, %v1186
        %v1202 = vsel %vm1197, %v1186, %v1188
        %v1203 = vsel %vm1197, %v1188, %v1190
        %v1204 = vsel %vm1197, %v1190, %v1192
        %v1205 = vsel %vm1197, %v1192, %v1194
        %v1206 = vsel %vm1197, %v1194, %v1196
        %1216 = vst [vmem:[#allocation3 + $0x168] sm:$0xff] %v1198
        %1217 = vst [vmem:[#allocation3 + $0x170] sm:$0xff] %v1199
        %1218 = vst [vmem:[#allocation3 + $0x178] sm:$0xff] %v1200
        %1219 = vst [vmem:[#allocation3 + $0x180] sm:$0xff] %v1201
        %1220 = vst [vmem:[#allocation3 + $0x188] sm:$0xff] %v1202
        %1221 = vst [vmem:[#allocation3 + $0x190] sm:$0xff] %v1203
        %1222 = vst [vmem:[#allocation3 + $0x198] sm:$0xff] %v1204
        %1223 = vst [vmem:[#allocation3 + $0x1a0] sm:$0xff] %v1205
        %1224 = vst [vmem:[#allocation3 + $0x1a8] sm:$0xff] %v1206
        %v1225 = vld [vmem:[#allocation2] sm:$0xff]
        %v1226 = vld [vmem:[#allocation2 + $0x8] sm:$0xff]
        %v1227 = vld [vmem:[#allocation2 + $0x10] sm:$0xff]
        %v1228 = vld [vmem:[#allocation2 + $0x18] sm:$0xff]
        %v1229 = vld [vmem:[#allocation2 + $0x20] sm:$0xff]
        %v1230 = vld [vmem:[#allocation2 + $0x28] sm:$0xff]
        %v1231 = vld [vmem:[#allocation2 + $0x30] sm:$0xff]
        %v1232 = vld [vmem:[#allocation2 + $0x38] sm:$0xff]
        %v1233 = vld [vmem:[#allocation2 + $0x40] sm:$0xff]
        %v1234 = vld [vmem:[#allocation2 + $0x48] sm:$0xff]
        %1245 = vrot.lane.b32.xlu0 %v1225, 55
        %v1246 = vpop.permute.xlu0 %1245
        %1247 = vrot.lane.b32.xlu0 %v1226, 55
        %v1248 = vpop.permute.xlu0 %1247
        %1249 = vrot.lane.b32.xlu0 %v1227, 55
        %v1250 = vpop.permute.xlu0 %1249
        %1251 = vrot.lane.b32.xlu0 %v1228, 55
        %v1252 = vpop.permute.xlu0 %1251
        %1253 = vrot.lane.b32.xlu0 %v1229, 55
        %v1254 = vpop.permute.xlu0 %1253
        %1255 = vrot.lane.b32.xlu0 %v1230, 55
        %v1256 = vpop.permute.xlu0 %1255
        %1257 = vrot.lane.b32.xlu0 %v1231, 55
        %v1258 = vpop.permute.xlu0 %1257
        %1259 = vrot.lane.b32.xlu0 %v1232, 55
        %v1260 = vpop.permute.xlu0 %1259
        %1261 = vrot.lane.b32.xlu0 %v1233, 55
        %v1262 = vpop.permute.xlu0 %1261
        %1263 = vrot.lane.b32.xlu0 %v1234, 55
        %v1264 = vpop.permute.xlu0 %1263
        %vm1265 = vcmask 449536
        %v1266 = vsel %vm1265, %v1246, %v1248
        %v1267 = vsel %vm1265, %v1248, %v1250
        %v1268 = vsel %vm1265, %v1250, %v1252
        %v1269 = vsel %vm1265, %v1252, %v1254
        %v1270 = vsel %vm1265, %v1254, %v1256
        %v1271 = vsel %vm1265, %v1256, %v1258
        %v1272 = vsel %vm1265, %v1258, %v1260
        %v1273 = vsel %vm1265, %v1260, %v1262
        %v1274 = vsel %vm1265, %v1262, %v1264
        %1284 = vst [vmem:[#allocation3 + $0x1b0] sm:$0xff] %v1266
        %1285 = vst [vmem:[#allocation3 + $0x1b8] sm:$0xff] %v1267
        %1286 = vst [vmem:[#allocation3 + $0x1c0] sm:$0xff] %v1268
        %1287 = vst [vmem:[#allocation3 + $0x1c8] sm:$0xff] %v1269
        %1288 = vst [vmem:[#allocation3 + $0x1d0] sm:$0xff] %v1270
        %1289 = vst [vmem:[#allocation3 + $0x1d8] sm:$0xff] %v1271
        %1290 = vst [vmem:[#allocation3 + $0x1e0] sm:$0xff] %v1272
        %1291 = vst [vmem:[#allocation3 + $0x1e8] sm:$0xff] %v1273
        %1292 = vst [vmem:[#allocation3 + $0x1f0] sm:$0xff] %v1274
        %v1293 = vld [vmem:[#allocation2] sm:$0xff]
        %v1294 = vld [vmem:[#allocation2 + $0x8] sm:$0xff]
        %v1295 = vld [vmem:[#allocation2 + $0x10] sm:$0xff]
        %v1296 = vld [vmem:[#allocation2 + $0x18] sm:$0xff]
        %v1297 = vld [vmem:[#allocation2 + $0x20] sm:$0xff]
        %v1298 = vld [vmem:[#allocation2 + $0x28] sm:$0xff]
        %v1299 = vld [vmem:[#allocation2 + $0x30] sm:$0xff]
        %v1300 = vld [vmem:[#allocation2 + $0x38] sm:$0xff]
        %v1301 = vld [vmem:[#allocation2 + $0x40] sm:$0xff]
        %v1302 = vld [vmem:[#allocation2 + $0x48] sm:$0xff]
        %1313 = vrot.lane.b32.xlu0 %v1293, 53
        %v1314 = vpop.permute.xlu0 %1313
        %1315 = vrot.lane.b32.xlu0 %v1294, 53
        %v1316 = vpop.permute.xlu0 %1315
        %1317 = vrot.lane.b32.xlu0 %v1295, 53
        %v1318 = vpop.permute.xlu0 %1317
        %1319 = vrot.lane.b32.xlu0 %v1296, 53
        %v1320 = vpop.permute.xlu0 %1319
        %1321 = vrot.lane.b32.xlu0 %v1297, 53
        %v1322 = vpop.permute.xlu0 %1321
        %1323 = vrot.lane.b32.xlu0 %v1298, 53
        %v1324 = vpop.permute.xlu0 %1323
        %1325 = vrot.lane.b32.xlu0 %v1299, 53
        %v1326 = vpop.permute.xlu0 %1325
        %1327 = vrot.lane.b32.xlu0 %v1300, 53
        %v1328 = vpop.permute.xlu0 %1327
        %1329 = vrot.lane.b32.xlu0 %v1301, 53
        %v1330 = vpop.permute.xlu0 %1329
        %1331 = vrot.lane.b32.xlu0 %v1302, 53
        %v1332 = vpop.permute.xlu0 %1331
        %vm1333 = vcmask 433152
        %v1334 = vsel %vm1333, %v1314, %v1316
        %v1335 = vsel %vm1333, %v1316, %v1318
        %v1336 = vsel %vm1333, %v1318, %v1320
        %v1337 = vsel %vm1333, %v1320, %v1322
        %v1338 = vsel %vm1333, %v1322, %v1324
        %v1339 = vsel %vm1333, %v1324, %v1326
        %v1340 = vsel %vm1333, %v1326, %v1328
        %v1341 = vsel %vm1333, %v1328, %v1330
        %v1342 = vsel %vm1333, %v1330, %v1332
        %1352 = vst [vmem:[#allocation3 + $0x1f8] sm:$0xff] %v1334
        %1353 = vst [vmem:[#allocation3 + $0x200] sm:$0xff] %v1335
        %1354 = vst [vmem:[#allocation3 + $0x208] sm:$0xff] %v1336
        %1355 = vst [vmem:[#allocation3 + $0x210] sm:$0xff] %v1337
        %1356 = vst [vmem:[#allocation3 + $0x218] sm:$0xff] %v1338
        %1357 = vst [vmem:[#allocation3 + $0x220] sm:$0xff] %v1339
        %1358 = vst [vmem:[#allocation3 + $0x228] sm:$0xff] %v1340
        %1359 = vst [vmem:[#allocation3 + $0x230] sm:$0xff] %v1341
        %1360 = vst [vmem:[#allocation3 + $0x238] sm:$0xff] %v1342
        %v1361 = vld [vmem:[#allocation2] sm:$0xff]
        %v1362 = vld [vmem:[#allocation2 + $0x8] sm:$0xff]
        %v1363 = vld [vmem:[#allocation2 + $0x10] sm:$0xff]
        %v1364 = vld [vmem:[#allocation2 + $0x18] sm:$0xff]
        %v1365 = vld [vmem:[#allocation2 + $0x20] sm:$0xff]
        %v1366 = vld [vmem:[#allocation2 + $0x28] sm:$0xff]
        %v1367 = vld [vmem:[#allocation2 + $0x30] sm:$0xff]
        %v1368 = vld [vmem:[#allocation2 + $0x38] sm:$0xff]
        %v1369 = vld [vmem:[#allocation2 + $0x40] sm:$0xff]
        %v1370 = vld [vmem:[#allocation2 + $0x48] sm:$0xff]
        %1381 = vrot.lane.b32.xlu0 %v1361, 92
        %v1382 = vpop.permute.xlu0 %1381
        %1383 = vrot.lane.b32.xlu0 %v1362, 92
        %v1384 = vpop.permute.xlu0 %1383
        %1385 = vrot.lane.b32.xlu0 %v1363, 92
        %v1386 = vpop.permute.xlu0 %1385
        %1387 = vrot.lane.b32.xlu0 %v1364, 92
        %v1388 = vpop.permute.xlu0 %1387
        %1389 = vrot.lane.b32.xlu0 %v1365, 92
        %v1390 = vpop.permute.xlu0 %1389
        %1391 = vrot.lane.b32.xlu0 %v1366, 92
        %v1392 = vpop.permute.xlu0 %1391
        %1393 = vrot.lane.b32.xlu0 %v1367, 92
        %v1394 = vpop.permute.xlu0 %1393
        %1395 = vrot.lane.b32.xlu0 %v1368, 92
        %v1396 = vpop.permute.xlu0 %1395
        %1397 = vrot.lane.b32.xlu0 %v1369, 92
        %v1398 = vpop.permute.xlu0 %1397
        %1399 = vrot.lane.b32.xlu0 %v1370, 92
        %v1400 = vpop.permute.xlu0 %1399
        %vm1401 = vcmask 752640
        %v1402 = vsel %vm1401, %v1382, %v1384
        %v1403 = vsel %vm1401, %v1384, %v1386
        %v1404 = vsel %vm1401, %v1386, %v1388
        %v1405 = vsel %vm1401, %v1388, %v1390
        %v1406 = vsel %vm1401, %v1390, %v1392
        %v1407 = vsel %vm1401, %v1392, %v1394
        %v1408 = vsel %vm1401, %v1394, %v1396
        %v1409 = vsel %vm1401, %v1396, %v1398
        %v1410 = vsel %vm1401, %v1398, %v1400
        %1420 = vst [vmem:[#allocation3 + $0x240] sm:$0xff] %v1402
        %1421 = vst [vmem:[#allocation3 + $0x248] sm:$0xff] %v1403
        %1422 = vst [vmem:[#allocation3 + $0x250] sm:$0xff] %v1404
        %1423 = vst [vmem:[#allocation3 + $0x258] sm:$0xff] %v1405
        %1424 = vst [vmem:[#allocation3 + $0x260] sm:$0xff] %v1406
        %1425 = vst [vmem:[#allocation3 + $0x268] sm:$0xff] %v1407
        %1426 = vst [vmem:[#allocation3 + $0x270] sm:$0xff] %v1408
        %1427 = vst [vmem:[#allocation3 + $0x278] sm:$0xff] %v1409
        %1428 = vst [vmem:[#allocation3 + $0x280] sm:$0xff] %v1410
        %v1429 = vld [vmem:[#allocation2] sm:$0xff]
        %v1430 = vld [vmem:[#allocation2 + $0x8] sm:$0xff]
        %v1431 = vld [vmem:[#allocation2 + $0x10] sm:$0xff]
        %v1432 = vld [vmem:[#allocation2 + $0x18] sm:$0xff]
        %v1433 = vld [vmem:[#allocation2 + $0x20] sm:$0xff]
        %v1434 = vld [vmem:[#allocation2 + $0x28] sm:$0xff]
        %v1435 = vld [vmem:[#allocation2 + $0x30] sm:$0xff]
        %v1436 = vld [vmem:[#allocation2 + $0x38] sm:$0xff]
        %v1437 = vld [vmem:[#allocation2 + $0x40] sm:$0xff]
        %v1438 = vld [vmem:[#allocation2 + $0x48] sm:$0xff]
        %1449 = vrot.lane.b32.xlu0 %v1429, 90
        %v1450 = vpop.permute.xlu0 %1449
        %1451 = vrot.lane.b32.xlu0 %v1430, 90
        %v1452 = vpop.permute.xlu0 %1451
        %1453 = vrot.lane.b32.xlu0 %v1431, 90
        %v1454 = vpop.permute.xlu0 %1453
        %1455 = vrot.lane.b32.xlu0 %v1432, 90
        %v1456 = vpop.permute.xlu0 %1455
        %1457 = vrot.lane.b32.xlu0 %v1433, 90
        %v1458 = vpop.permute.xlu0 %1457
        %1459 = vrot.lane.b32.xlu0 %v1434, 90
        %v1460 = vpop.permute.xlu0 %1459
        %1461 = vrot.lane.b32.xlu0 %v1435, 90
        %v1462 = vpop.permute.xlu0 %1461
        %1463 = vrot.lane.b32.xlu0 %v1436, 90
        %v1464 = vpop.permute.xlu0 %1463
        %1465 = vrot.lane.b32.xlu0 %v1437, 90
        %v1466 = vpop.permute.xlu0 %1465
        %1467 = vrot.lane.b32.xlu0 %v1438, 90
        %v1468 = vpop.permute.xlu0 %1467
        %vm1469 = vcmask 736256
        %v1470 = vsel %vm1469, %v1450, %v1452
        %v1471 = vsel %vm1469, %v1452, %v1454
        %v1472 = vsel %vm1469, %v1454, %v1456
        %v1473 = vsel %vm1469, %v1456, %v1458
        %v1474 = vsel %vm1469, %v1458, %v1460
        %v1475 = vsel %vm1469, %v1460, %v1462
        %v1476 = vsel %vm1469, %v1462, %v1464
        %v1477 = vsel %vm1469, %v1464, %v1466
        %v1478 = vsel %vm1469, %v1466, %v1468
        %1488 = vst [vmem:[#allocation3 + $0x288] sm:$0xff] %v1470
        %1489 = vst [vmem:[#allocation3 + $0x290] sm:$0xff] %v1471
        %1490 = vst [vmem:[#allocation3 + $0x298] sm:$0xff] %v1472
        %1491 = vst [vmem:[#allocation3 + $0x2a0] sm:$0xff] %v1473
        %1492 = vst [vmem:[#allocation3 + $0x2a8] sm:$0xff] %v1474
        %1493 = vst [vmem:[#allocation3 + $0x2b0] sm:$0xff] %v1475
        %1494 = vst [vmem:[#allocation3 + $0x2b8] sm:$0xff] %v1476
        %1495 = vst [vmem:[#allocation3 + $0x2c0] sm:$0xff] %v1477
        %1496 = vst [vmem:[#allocation3 + $0x2c8] sm:$0xff] %v1478
        %v1497 = vld [vmem:[#allocation2] sm:$0xff]
        %v1498 = vld [vmem:[#allocation2 + $0x8] sm:$0xff]
        %v1499 = vld [vmem:[#allocation2 + $0x10] sm:$0xff]
        %v1500 = vld [vmem:[#allocation2 + $0x18] sm:$0xff]
        %v1501 = vld [vmem:[#allocation2 + $0x20] sm:$0xff]
        %v1502 = vld [vmem:[#allocation2 + $0x28] sm:$0xff]
        %v1503 = vld [vmem:[#allocation2 + $0x30] sm:$0xff]
        %v1504 = vld [vmem:[#allocation2 + $0x38] sm:$0xff]
        %v1505 = vld [vmem:[#allocation2 + $0x40] sm:$0xff]
        %v1506 = vld [vmem:[#allocation2 + $0x48] sm:$0xff]
        %1517 = vrot.lane.b32.xlu0 %v1497, 20
        %v1518 = vpop.permute.xlu0 %1517
        %1519 = vrot.lane.b32.xlu0 %v1498, 20
        %v1520 = vpop.permute.xlu0 %1519
        %1521 = vrot.lane.b32.xlu0 %v1499, 20
        %v1522 = vpop.permute.xlu0 %1521
        %1523 = vrot.lane.b32.xlu0 %v1500, 20
        %v1524 = vpop.permute.xlu0 %1523
        %1525 = vrot.lane.b32.xlu0 %v1501, 20
        %v1526 = vpop.permute.xlu0 %1525
        %1527 = vrot.lane.b32.xlu0 %v1502, 20
        %v1528 = vpop.permute.xlu0 %1527
        %1529 = vrot.lane.b32.xlu0 %v1503, 20
        %v1530 = vpop.permute.xlu0 %1529
        %1531 = vrot.lane.b32.xlu0 %v1504, 20
        %v1532 = vpop.permute.xlu0 %1531
        %1533 = vrot.lane.b32.xlu0 %v1505, 20
        %v1534 = vpop.permute.xlu0 %1533
        %1535 = vrot.lane.b32.xlu0 %v1506, 20
        %v1536 = vpop.permute.xlu0 %1535
        %v1537 = vsel %vm764, %v1518, %v1520
        %v1538 = vsel %vm764, %v1520, %v1522
        %v1539 = vsel %vm764, %v1522, %v1524
        %v1540 = vsel %vm764, %v1524, %v1526
        %v1541 = vsel %vm764, %v1526, %v1528
        %v1542 = vsel %vm764, %v1528, %v1530
        %v1543 = vsel %vm764, %v1530, %v1532
        %v1544 = vsel %vm764, %v1532, %v1534
        %v1545 = vsel %vm764, %v1534, %v1536
        %1555 = vst [vmem:[#allocation3 + $0x2d0] sm:$0xff] %v1537
        %1556 = vst [vmem:[#allocation3 + $0x2d8] sm:$0xff] %v1538
        %1557 = vst [vmem:[#allocation3 + $0x2e0] sm:$0xff] %v1539
        %1558 = vst [vmem:[#allocation3 + $0x2e8] sm:$0xff] %v1540
        %1559 = vst [vmem:[#allocation3 + $0x2f0] sm:$0xff] %v1541
        %1560 = vst [vmem:[#allocation3 + $0x2f8] sm:$0xff] %v1542
        %1561 = vst [vmem:[#allocation3 + $0x300] sm:$0xff] %v1543
        %1562 = vst [vmem:[#allocation3 + $0x308] sm:$0xff] %v1544
        %1563 = vst [vmem:[#allocation3 + $0x310] sm:$0xff] %v1545
        %v1564 = vld [vmem:[#allocation2] sm:$0xff]
        %v1565 = vld [vmem:[#allocation2 + $0x8] sm:$0xff]
        %v1566 = vld [vmem:[#allocation2 + $0x10] sm:$0xff]
        %v1567 = vld [vmem:[#allocation2 + $0x18] sm:$0xff]
        %v1568 = vld [vmem:[#allocation2 + $0x20] sm:$0xff]
        %v1569 = vld [vmem:[#allocation2 + $0x28] sm:$0xff]
        %v1570 = vld [vmem:[#allocation2 + $0x30] sm:$0xff]
        %v1571 = vld [vmem:[#allocation2 + $0x38] sm:$0xff]
        %v1572 = vld [vmem:[#allocation2 + $0x40] sm:$0xff]
        %v1573 = vld [vmem:[#allocation2 + $0x48] sm:$0xff]
        %1584 = vrot.lane.b32.xlu0 %v1564, 18
        %v1585 = vpop.permute.xlu0 %1584
        %1586 = vrot.lane.b32.xlu0 %v1565, 18
        %v1587 = vpop.permute.xlu0 %1586
        %1588 = vrot.lane.b32.xlu0 %v1566, 18
        %v1589 = vpop.permute.xlu0 %1588
        %1590 = vrot.lane.b32.xlu0 %v1567, 18
        %v1591 = vpop.permute.xlu0 %1590
        %1592 = vrot.lane.b32.xlu0 %v1568, 18
        %v1593 = vpop.permute.xlu0 %1592
        %1594 = vrot.lane.b32.xlu0 %v1569, 18
        %v1595 = vpop.permute.xlu0 %1594
        %1596 = vrot.lane.b32.xlu0 %v1570, 18
        %v1597 = vpop.permute.xlu0 %1596
        %1598 = vrot.lane.b32.xlu0 %v1571, 18
        %v1599 = vpop.permute.xlu0 %1598
        %1600 = vrot.lane.b32.xlu0 %v1572, 18
        %v1601 = vpop.permute.xlu0 %1600
        %1602 = vrot.lane.b32.xlu0 %v1573, 18
        %v1603 = vpop.permute.xlu0 %1602
        %vm1604 = vcmask 146432
        %v1605 = vsel %vm1604, %v1585, %v1587
        %v1606 = vsel %vm1604, %v1587, %v1589
        %v1607 = vsel %vm1604, %v1589, %v1591
        %v1608 = vsel %vm1604, %v1591, %v1593
        %v1609 = vsel %vm1604, %v1593, %v1595
        %v1610 = vsel %vm1604, %v1595, %v1597
        %v1611 = vsel %vm1604, %v1597, %v1599
        %v1612 = vsel %vm1604, %v1599, %v1601
        %v1613 = vsel %vm1604, %v1601, %v1603
        %1623 = vst [vmem:[#allocation3 + $0x318] sm:$0xff] %v1605
        %1624 = vst [vmem:[#allocation3 + $0x320] sm:$0xff] %v1606
        %1625 = vst [vmem:[#allocation3 + $0x328] sm:$0xff] %v1607
        %1626 = vst [vmem:[#allocation3 + $0x330] sm:$0xff] %v1608
        %1627 = vst [vmem:[#allocation3 + $0x338] sm:$0xff] %v1609
        %1628 = vst [vmem:[#allocation3 + $0x340] sm:$0xff] %v1610
        %1629 = vst [vmem:[#allocation3 + $0x348] sm:$0xff] %v1611
        %1630 = vst [vmem:[#allocation3 + $0x350] sm:$0xff] %v1612
        %1631 = vst [vmem:[#allocation3 + $0x358] sm:$0xff] %v1613
        %v1632 = vld [vmem:[#allocation2] sm:$0xff]
        %v1633 = vld [vmem:[#allocation2 + $0x8] sm:$0xff]
        %v1634 = vld [vmem:[#allocation2 + $0x10] sm:$0xff]
        %v1635 = vld [vmem:[#allocation2 + $0x18] sm:$0xff]
        %v1636 = vld [vmem:[#allocation2 + $0x20] sm:$0xff]
        %v1637 = vld [vmem:[#allocation2 + $0x28] sm:$0xff]
        %v1638 = vld [vmem:[#allocation2 + $0x30] sm:$0xff]
        %v1639 = vld [vmem:[#allocation2 + $0x38] sm:$0xff]
        %v1640 = vld [vmem:[#allocation2 + $0x40] sm:$0xff]
        %v1641 = vld [vmem:[#allocation2 + $0x48] sm:$0xff]
        %1652 = vrot.lane.b32.xlu0 %v1632, 91
        %v1653 = vpop.permute.xlu0 %1652
        %1654 = vrot.lane.b32.xlu0 %v1633, 91
        %v1655 = vpop.permute.xlu0 %1654
        %1656 = vrot.lane.b32.xlu0 %v1634, 91
        %v1657 = vpop.permute.xlu0 %1656
        %1658 = vrot.lane.b32.xlu0 %v1635, 91
        %v1659 = vpop.permute.xlu0 %1658
        %1660 = vrot.lane.b32.xlu0 %v1636, 91
        %v1661 = vpop.permute.xlu0 %1660
        %1662 = vrot.lane.b32.xlu0 %v1637, 91
        %v1663 = vpop.permute.xlu0 %1662
        %1664 = vrot.lane.b32.xlu0 %v1638, 91
        %v1665 = vpop.permute.xlu0 %1664
        %1666 = vrot.lane.b32.xlu0 %v1639, 91
        %v1667 = vpop.permute.xlu0 %1666
        %1668 = vrot.lane.b32.xlu0 %v1640, 91
        %v1669 = vpop.permute.xlu0 %1668
        %1670 = vrot.lane.b32.xlu0 %v1641, 91
        %v1671 = vpop.permute.xlu0 %1670
        %vm1672 = vcmask 744448
        %v1673 = vsel %vm1672, %v1653, %v1655
        %v1674 = vsel %vm1672, %v1655, %v1657
        %v1675 = vsel %vm1672, %v1657, %v1659
        %v1676 = vsel %vm1672, %v1659, %v1661
        %v1677 = vsel %vm1672, %v1661, %v1663
        %v1678 = vsel %vm1672, %v1663, %v1665
        %v1679 = vsel %vm1672, %v1665, %v1667
        %v1680 = vsel %vm1672, %v1667, %v1669
        %v1681 = vsel %vm1672, %v1669, %v1671
        %1691 = vst [vmem:[#allocation3 + $0x360] sm:$0xff] %v1673
        %1692 = vst [vmem:[#allocation3 + $0x368] sm:$0xff] %v1674
        %1693 = vst [vmem:[#allocation3 + $0x370] sm:$0xff] %v1675
        %1694 = vst [vmem:[#allocation3 + $0x378] sm:$0xff] %v1676
        %1695 = vst [vmem:[#allocation3 + $0x380] sm:$0xff] %v1677
        %1696 = vst [vmem:[#allocation3 + $0x388] sm:$0xff] %v1678
        %1697 = vst [vmem:[#allocation3 + $0x390] sm:$0xff] %v1679
        %1698 = vst [vmem:[#allocation3 + $0x398] sm:$0xff] %v1680
        %1699 = vst [vmem:[#allocation3 + $0x3a0] sm:$0xff] %v1681
        %v1700 = vld [vmem:[#allocation2] sm:$0xff]
        %v1701 = vld [vmem:[#allocation2 + $0x8] sm:$0xff]
        %v1702 = vld [vmem:[#allocation2 + $0x10] sm:$0xff]
        %v1703 = vld [vmem:[#allocation2 + $0x18] sm:$0xff]
        %v1704 = vld [vmem:[#allocation2 + $0x20] sm:$0xff]
        %v1705 = vld [vmem:[#allocation2 + $0x28] sm:$0xff]
        %v1706 = vld [vmem:[#allocation2 + $0x30] sm:$0xff]
        %v1707 = vld [vmem:[#allocation2 + $0x38] sm:$0xff]
        %v1708 = vld [vmem:[#allocation2 + $0x40] sm:$0xff]
        %v1709 = vld [vmem:[#allocation2 + $0x48] sm:$0xff]
        %1720 = vrot.lane.b32.xlu0 %v1700, 89
        %v1721 = vpop.permute.xlu0 %1720
        %1722 = vrot.lane.b32.xlu0 %v1701, 89
        %v1723 = vpop.permute.xlu0 %1722
        %1724 = vrot.lane.b32.xlu0 %v1702, 89
        %v1725 = vpop.permute.xlu0 %1724
        %1726 = vrot.lane.b32.xlu0 %v1703, 89
        %v1727 = vpop.permute.xlu0 %1726
        %1728 = vrot.lane.b32.xlu0 %v1704, 89
        %v1729 = vpop.permute.xlu0 %1728
        %1730 = vrot.lane.b32.xlu0 %v1705, 89
        %v1731 = vpop.permute.xlu0 %1730
        %1732 = vrot.lane.b32.xlu0 %v1706, 89
        %v1733 = vpop.permute.xlu0 %1732
        %1734 = vrot.lane.b32.xlu0 %v1707, 89
        %v1735 = vpop.permute.xlu0 %1734
        %1736 = vrot.lane.b32.xlu0 %v1708, 89
        %v1737 = vpop.permute.xlu0 %1736
        %1738 = vrot.lane.b32.xlu0 %v1709, 89
        %v1739 = vpop.permute.xlu0 %1738
        %vm1740 = vcmask 728064
        %v1741 = vsel %vm1740, %v1721, %v1723
        %v1742 = vsel %vm1740, %v1723, %v1725
        %v1743 = vsel %vm1740, %v1725, %v1727
        %v1744 = vsel %vm1740, %v1727, %v1729
        %v1745 = vsel %vm1740, %v1729, %v1731
        %v1746 = vsel %vm1740, %v1731, %v1733
        %v1747 = vsel %vm1740, %v1733, %v1735
        %v1748 = vsel %vm1740, %v1735, %v1737
        %v1749 = vsel %vm1740, %v1737, %v1739
        %1759 = vst [vmem:[#allocation3 + $0x3a8] sm:$0xff] %v1741
        %1760 = vst [vmem:[#allocation3 + $0x3b0] sm:$0xff] %v1742
        %1761 = vst [vmem:[#allocation3 + $0x3b8] sm:$0xff] %v1743
        %1762 = vst [vmem:[#allocation3 + $0x3c0] sm:$0xff] %v1744
        %1763 = vst [vmem:[#allocation3 + $0x3c8] sm:$0xff] %v1745
        %1764 = vst [vmem:[#allocation3 + $0x3d0] sm:$0xff] %v1746
        %1765 = vst [vmem:[#allocation3 + $0x3d8] sm:$0xff] %v1747
        %1766 = vst [vmem:[#allocation3 + $0x3e0] sm:$0xff] %v1748
        %1767 = vst [vmem:[#allocation3 + $0x3e8] sm:$0xff] %v1749
        %v1768 = vld [vmem:[#allocation2] sm:$0xff]
        %v1769 = vld [vmem:[#allocation2 + $0x8] sm:$0xff]
        %v1770 = vld [vmem:[#allocation2 + $0x10] sm:$0xff]
        %v1771 = vld [vmem:[#allocation2 + $0x18] sm:$0xff]
        %v1772 = vld [vmem:[#allocation2 + $0x20] sm:$0xff]
        %v1773 = vld [vmem:[#allocation2 + $0x28] sm:$0xff]
        %v1774 = vld [vmem:[#allocation2 + $0x30] sm:$0xff]
        %v1775 = vld [vmem:[#allocation2 + $0x38] sm:$0xff]
        %v1776 = vld [vmem:[#allocation2 + $0x40] sm:$0xff]
        %v1777 = vld [vmem:[#allocation2 + $0x48] sm:$0xff]
        %1788 = vrot.lane.b32.xlu0 %v1768, 19
        %v1789 = vpop.permute.xlu0 %1788
        %1790 = vrot.lane.b32.xlu0 %v1769, 19
        %v1791 = vpop.permute.xlu0 %1790
        %1792 = vrot.lane.b32.xlu0 %v1770, 19
        %v1793 = vpop.permute.xlu0 %1792
        %1794 = vrot.lane.b32.xlu0 %v1771, 19
        %v1795 = vpop.permute.xlu0 %1794
        %1796 = vrot.lane.b32.xlu0 %v1772, 19
        %v1797 = vpop.permute.xlu0 %1796
        %1798 = vrot.lane.b32.xlu0 %v1773, 19
        %v1799 = vpop.permute.xlu0 %1798
        %1800 = vrot.lane.b32.xlu0 %v1774, 19
        %v1801 = vpop.permute.xlu0 %1800
        %1802 = vrot.lane.b32.xlu0 %v1775, 19
        %v1803 = vpop.permute.xlu0 %1802
        %1804 = vrot.lane.b32.xlu0 %v1776, 19
        %v1805 = vpop.permute.xlu0 %1804
        %1806 = vrot.lane.b32.xlu0 %v1777, 19
        %v1807 = vpop.permute.xlu0 %1806
        %vm1808 = vcmask 154624
        %v1809 = vsel %vm1808, %v1789, %v1791
        %v1810 = vsel %vm1808, %v1791, %v1793
        %v1811 = vsel %vm1808, %v1793, %v1795
        %v1812 = vsel %vm1808, %v1795, %v1797
        %v1813 = vsel %vm1808, %v1797, %v1799
        %v1814 = vsel %vm1808, %v1799, %v1801
        %v1815 = vsel %vm1808, %v1801, %v1803
        %v1816 = vsel %vm1808, %v1803, %v1805
        %v1817 = vsel %vm1808, %v1805, %v1807
        %1827 = vst [vmem:[#allocation3 + $0x3f0] sm:$0xff] %v1809
        %1828 = vst [vmem:[#allocation3 + $0x3f8] sm:$0xff] %v1810
        %1829 = vst [vmem:[#allocation3 + $0x400] sm:$0xff] %v1811
        %1830 = vst [vmem:[#allocation3 + $0x408] sm:$0xff] %v1812
        %1831 = vst [vmem:[#allocation3 + $0x410] sm:$0xff] %v1813
        %1832 = vst [vmem:[#allocation3 + $0x418] sm:$0xff] %v1814
        %1833 = vst [vmem:[#allocation3 + $0x420] sm:$0xff] %v1815
        %1834 = vst [vmem:[#allocation3 + $0x428] sm:$0xff] %v1816
        %1835 = vst [vmem:[#allocation3 + $0x430] sm:$0xff] %v1817
        %v1836 = vld [vmem:[#allocation2] sm:$0xff]
        %v1837 = vld [vmem:[#allocation2 + $0x8] sm:$0xff]
        %v1838 = vld [vmem:[#allocation2 + $0x10] sm:$0xff]
        %v1839 = vld [vmem:[#allocation2 + $0x18] sm:$0xff]
        %v1840 = vld [vmem:[#allocation2 + $0x20] sm:$0xff]
        %v1841 = vld [vmem:[#allocation2 + $0x28] sm:$0xff]
        %v1842 = vld [vmem:[#allocation2 + $0x30] sm:$0xff]
        %v1843 = vld [vmem:[#allocation2 + $0x38] sm:$0xff]
        %v1844 = vld [vmem:[#allocation2 + $0x40] sm:$0xff]
        %v1845 = vld [vmem:[#allocation2 + $0x48] sm:$0xff]
        %1856 = vrot.lane.b32.xlu0 %v1836, 17
        %v1857 = vpop.permute.xlu0 %1856
        %1858 = vrot.lane.b32.xlu0 %v1837, 17
        %v1859 = vpop.permute.xlu0 %1858
        %1860 = vrot.lane.b32.xlu0 %v1838, 17
        %v1861 = vpop.permute.xlu0 %1860
        %1862 = vrot.lane.b32.xlu0 %v1839, 17
        %v1863 = vpop.permute.xlu0 %1862
        %1864 = vrot.lane.b32.xlu0 %v1840, 17
        %v1865 = vpop.permute.xlu0 %1864
        %1866 = vrot.lane.b32.xlu0 %v1841, 17
        %v1867 = vpop.permute.xlu0 %1866
        %1868 = vrot.lane.b32.xlu0 %v1842, 17
        %v1869 = vpop.permute.xlu0 %1868
        %1870 = vrot.lane.b32.xlu0 %v1843, 17
        %v1871 = vpop.permute.xlu0 %1870
        %1872 = vrot.lane.b32.xlu0 %v1844, 17
        %v1873 = vpop.permute.xlu0 %1872
        %1874 = vrot.lane.b32.xlu0 %v1845, 17
        %v1875 = vpop.permute.xlu0 %1874
        %vm1876 = vcmask 138240
        %v1877 = vsel %vm1876, %v1857, %v1859
        %v1878 = vsel %vm1876, %v1859, %v1861
        %v1879 = vsel %vm1876, %v1861, %v1863
        %v1880 = vsel %vm1876, %v1863, %v1865
        %v1881 = vsel %vm1876, %v1865, %v1867
        %v1882 = vsel %vm1876, %v1867, %v1869
        %v1883 = vsel %vm1876, %v1869, %v1871
        %v1884 = vsel %vm1876, %v1871, %v1873
        %v1885 = vsel %vm1876, %v1873, %v1875
        %1895 = vst [vmem:[#allocation3 + $0x438] sm:$0xff] %v1877
        %1896 = vst [vmem:[#allocation3 + $0x440] sm:$0xff] %v1878
        %1897 = vst [vmem:[#allocation3 + $0x448] sm:$0xff] %v1879
        %1898 = vst [vmem:[#allocation3 + $0x450] sm:$0xff] %v1880
        %1899 = vst [vmem:[#allocation3 + $0x458] sm:$0xff] %v1881
        %1900 = vst [vmem:[#allocation3 + $0x460] sm:$0xff] %v1882
        %1901 = vst [vmem:[#allocation3 + $0x468] sm:$0xff] %v1883
        %1902 = vst [vmem:[#allocation3 + $0x470] sm:$0xff] %v1884
        %1903 = vst [vmem:[#allocation3 + $0x478] sm:$0xff] %v1885
        %v1904 = vld [vmem:[%s1] sm:$0xff]
        %v1905 = vld [vmem:[#allocation3] sm:$0xff]
        %v1906 = vld [vmem:[#allocation3 + $0x8] sm:$0xff]
        %v1907 = vld [vmem:[#allocation3 + $0x10] sm:$0xff]
        %v1908 = vld [vmem:[#allocation3 + $0x18] sm:$0xff]
        %v1909 = vld [vmem:[#allocation3 + $0x20] sm:$0xff]
        %v1910 = vld [vmem:[#allocation3 + $0x28] sm:$0xff]
        %v1911 = vld [vmem:[#allocation3 + $0x30] sm:$0xff]
        %v1912 = vld [vmem:[#allocation3 + $0x38] sm:$0xff]
        %v1913 = vld [vmem:[#allocation3 + $0x40] sm:$0xff]
        %v1914 = vld [vmem:[#allocation3 + $0x48] sm:$0xff]
        %v1915 = vld [vmem:[#allocation3 + $0x50] sm:$0xff]
        %v1916 = vld [vmem:[#allocation3 + $0x58] sm:$0xff]
        %v1917 = vld [vmem:[#allocation3 + $0x60] sm:$0xff]
        %v1918 = vld [vmem:[#allocation3 + $0x68] sm:$0xff]
        %v1919 = vld [vmem:[#allocation3 + $0x70] sm:$0xff]
        %v1920 = vld [vmem:[#allocation3 + $0x78] sm:$0xff]
        %v1921 = vld [vmem:[#allocation3 + $0x80] sm:$0xff]
        %v1922 = vld [vmem:[#allocation3 + $0x88] sm:$0xff]
        %v1923 = vld [vmem:[#allocation3 + $0x90] sm:$0xff]
        %v1924 = vld [vmem:[#allocation3 + $0x98] sm:$0xff]
        %v1925 = vld [vmem:[#allocation3 + $0xa0] sm:$0xff]
        %v1926 = vld [vmem:[#allocation3 + $0xa8] sm:$0xff]
        %v1927 = vld [vmem:[#allocation3 + $0xb0] sm:$0xff]
        %v1928 = vld [vmem:[#allocation3 + $0xb8] sm:$0xff]
        %v1929 = vld [vmem:[#allocation3 + $0xc0] sm:$0xff]
        %v1930 = vld [vmem:[#allocation3 + $0xc8] sm:$0xff]
        %v1931 = vld [vmem:[#allocation3 + $0xd0] sm:$0xff]
        %v1932 = vld [vmem:[#allocation3 + $0xd8] sm:$0xff]
        %v1933 = vld [vmem:[#allocation3 + $0xe0] sm:$0xff]
        %v1934 = vld [vmem:[#allocation3 + $0xe8] sm:$0xff]
        %v1935 = vld [vmem:[#allocation3 + $0xf0] sm:$0xff]
        %v1936 = vld [vmem:[#allocation3 + $0xf8] sm:$0xff]
        %v1937 = vld [vmem:[#allocation3 + $0x100] sm:$0xff]
        %v1938 = vld [vmem:[#allocation3 + $0x108] sm:$0xff]
        %v1939 = vld [vmem:[#allocation3 + $0x110] sm:$0xff]
        %v1940 = vld [vmem:[#allocation3 + $0x118] sm:$0xff]
        %v1941 = vld [vmem:[#allocation3 + $0x120] sm:$0xff]
        %v1942 = vld [vmem:[#allocation3 + $0x128] sm:$0xff]
        %v1943 = vld [vmem:[#allocation3 + $0x130] sm:$0xff]
        %v1944 = vld [vmem:[#allocation3 + $0x138] sm:$0xff]
        %v1945 = vld [vmem:[#allocation3 + $0x140] sm:$0xff]
        %v1946 = vld [vmem:[#allocation3 + $0x148] sm:$0xff]
        %v1947 = vld [vmem:[#allocation3 + $0x150] sm:$0xff]
        %v1948 = vld [vmem:[#allocation3 + $0x158] sm:$0xff]
        %v1949 = vld [vmem:[#allocation3 + $0x160] sm:$0xff]
        %v1950 = vld [vmem:[#allocation3 + $0x168] sm:$0xff]
        %v1951 = vld [vmem:[#allocation3 + $0x170] sm:$0xff]
        %v1952 = vld [vmem:[#allocation3 + $0x178] sm:$0xff]
        %v1953 = vld [vmem:[#allocation3 + $0x180] sm:$0xff]
        %v1954 = vld [vmem:[#allocation3 + $0x188] sm:$0xff]
        %v1955 = vld [vmem:[#allocation3 + $0x190] sm:$0xff]
        %v1956 = vld [vmem:[#allocation3 + $0x198] sm:$0xff]
        %v1957 = vld [vmem:[#allocation3 + $0x1a0] sm:$0xff]
        %v1958 = vld [vmem:[#allocation3 + $0x1a8] sm:$0xff]
        %v1959 = vld [vmem:[#allocation3 + $0x1b0] sm:$0xff]
        %v1960 = vld [vmem:[#allocation3 + $0x1b8] sm:$0xff]
        %v1961 = vld [vmem:[#allocation3 + $0x1c0] sm:$0xff]
        %v1962 = vld [vmem:[#allocation3 + $0x1c8] sm:$0xff]
        %v1963 = vld [vmem:[#allocation3 + $0x1d0] sm:$0xff]
        %v1964 = vld [vmem:[#allocation3 + $0x1d8] sm:$0xff]
        %v1965 = vld [vmem:[#allocation3 + $0x1e0] sm:$0xff]
        %v1966 = vld [vmem:[#allocation3 + $0x1e8] sm:$0xff]
        %v1967 = vld [vmem:[#allocation3 + $0x1f0] sm:$0xff]
        %v1968 = vld [vmem:[#allocation3 + $0x1f8] sm:$0xff]
        %v1969 = vld [vmem:[#allocation3 + $0x200] sm:$0xff]
        %v1970 = vld [vmem:[#allocation3 + $0x208] sm:$0xff]
        %v1971 = vld [vmem:[#allocation3 + $0x210] sm:$0xff]
        %v1972 = vld [vmem:[#allocation3 + $0x218] sm:$0xff]
        %v1973 = vld [vmem:[#allocation3 + $0x220] sm:$0xff]
        %v1974 = vld [vmem:[#allocation3 + $0x228] sm:$0xff]
        %v1975 = vld [vmem:[#allocation3 + $0x230] sm:$0xff]
        %v1976 = vld [vmem:[#allocation3 + $0x238] sm:$0xff]
        %v1977 = vld [vmem:[#allocation3 + $0x240] sm:$0xff]
        %v1978 = vld [vmem:[#allocation3 + $0x248] sm:$0xff]
        %v1979 = vld [vmem:[#allocation3 + $0x250] sm:$0xff]
        %v1980 = vld [vmem:[#allocation3 + $0x258] sm:$0xff]
        %v1981 = vld [vmem:[#allocation3 + $0x260] sm:$0xff]
        %v1982 = vld [vmem:[#allocation3 + $0x268] sm:$0xff]
        %v1983 = vld [vmem:[#allocation3 + $0x270] sm:$0xff]
        %v1984 = vld [vmem:[#allocation3 + $0x278] sm:$0xff]
        %v1985 = vld [vmem:[#allocation3 + $0x280] sm:$0xff]
        %v1986 = vld [vmem:[#allocation3 + $0x288] sm:$0xff]
        %v1987 = vld [vmem:[#allocation3 + $0x290] sm:$0xff]
        %v1988 = vld [vmem:[#allocation3 + $0x298] sm:$0xff]
        %v1989 = vld [vmem:[#allocation3 + $0x2a0] sm:$0xff]
        %v1990 = vld [vmem:[#allocation3 + $0x2a8] sm:$0xff]
        %v1991 = vld [vmem:[#allocation3 + $0x2b0] sm:$0xff]
        %v1992 = vld [vmem:[#allocation3 + $0x2b8] sm:$0xff]
        %v1993 = vld [vmem:[#allocation3 + $0x2c0] sm:$0xff]
        %v1994 = vld [vmem:[#allocation3 + $0x2c8] sm:$0xff]
        %v1995 = vld [vmem:[#allocation3 + $0x2d0] sm:$0xff]
        %v1996 = vld [vmem:[#allocation3 + $0x2d8] sm:$0xff]
        %v1997 = vld [vmem:[#allocation3 + $0x2e0] sm:$0xff]
        %v1998 = vld [vmem:[#allocation3 + $0x2e8] sm:$0xff]
        %v1999 = vld [vmem:[#allocation3 + $0x2f0] sm:$0xff]
        %v2000 = vld [vmem:[#allocation3 + $0x2f8] sm:$0xff]
        %v2001 = vld [vmem:[#allocation3 + $0x300] sm:$0xff]
        %v2002 = vld [vmem:[#allocation3 + $0x308] sm:$0xff]
        %v2003 = vld [vmem:[#allocation3 + $0x310] sm:$0xff]
        %v2004 = vld [vmem:[#allocation3 + $0x318] sm:$0xff]
        %v2005 = vld [vmem:[#allocation3 + $0x320] sm:$0xff]
        %v2006 = vld [vmem:[#allocation3 + $0x328] sm:$0xff]
        %v2007 = vld [vmem:[#allocation3 + $0x330] sm:$0xff]
        %v2008 = vld [vmem:[#allocation3 + $0x338] sm:$0xff]
        %v2009 = vld [vmem:[#allocation3 + $0x340] sm:$0xff]
        %v2010 = vld [vmem:[#allocation3 + $0x348] sm:$0xff]
        %v2011 = vld [vmem:[#allocation3 + $0x350] sm:$0xff]
        %v2012 = vld [vmem:[#allocation3 + $0x358] sm:$0xff]
        %v2013 = vld [vmem:[#allocation3 + $0x360] sm:$0xff]
        %v2014 = vld [vmem:[#allocation3 + $0x368] sm:$0xff]
        %v2015 = vld [vmem:[#allocation3 + $0x370] sm:$0xff]
        %v2016 = vld [vmem:[#allocation3 + $0x378] sm:$0xff]
        %v2017 = vld [vmem:[#allocation3 + $0x380] sm:$0xff]
        %v2018 = vld [vmem:[#allocation3 + $0x388] sm:$0xff]
        %v2019 = vld [vmem:[#allocation3 + $0x390] sm:$0xff]
        %v2020 = vld [vmem:[#allocation3 + $0x398] sm:$0xff]
        %v2021 = vld [vmem:[#allocation3 + $0x3a0] sm:$0xff]
        %v2022 = vld [vmem:[#allocation3 + $0x3a8] sm:$0xff]
        %v2023 = vld [vmem:[#allocation3 + $0x3b0] sm:$0xff]
        %v2024 = vld [vmem:[#allocation3 + $0x3b8] sm:$0xff]
        %v2025 = vld [vmem:[#allocation3 + $0x3c0] sm:$0xff]
        %v2026 = vld [vmem:[#allocation3 + $0x3c8] sm:$0xff]
        %v2027 = vld [vmem:[#allocation3 + $0x3d0] sm:$0xff]
        %v2028 = vld [vmem:[#allocation3 + $0x3d8] sm:$0xff]
        %v2029 = vld [vmem:[#allocation3 + $0x3e0] sm:$0xff]
        %v2030 = vld [vmem:[#allocation3 + $0x3e8] sm:$0xff]
        %v2031 = vld [vmem:[#allocation3 + $0x3f0] sm:$0xff]
        %v2032 = vld [vmem:[#allocation3 + $0x3f8] sm:$0xff]
        %v2033 = vld [vmem:[#allocation3 + $0x400] sm:$0xff]
        %v2034 = vld [vmem:[#allocation3 + $0x408] sm:$0xff]
        %v2035 = vld [vmem:[#allocation3 + $0x410] sm:$0xff]
        %v2036 = vld [vmem:[#allocation3 + $0x418] sm:$0xff]
        %v2037 = vld [vmem:[#allocation3 + $0x420] sm:$0xff]
        %v2038 = vld [vmem:[#allocation3 + $0x428] sm:$0xff]
        %v2039 = vld [vmem:[#allocation3 + $0x430] sm:$0xff]
        %v2040 = vld [vmem:[#allocation3 + $0x438] sm:$0xff]
        %v2041 = vld [vmem:[#allocation3 + $0x440] sm:$0xff]
        %v2042 = vld [vmem:[#allocation3 + $0x448] sm:$0xff]
        %v2043 = vld [vmem:[#allocation3 + $0x450] sm:$0xff]
        %v2044 = vld [vmem:[#allocation3 + $0x458] sm:$0xff]
        %v2045 = vld [vmem:[#allocation3 + $0x460] sm:$0xff]
        %v2046 = vld [vmem:[#allocation3 + $0x468] sm:$0xff]
        %v2047 = vld [vmem:[#allocation3 + $0x470] sm:$0xff]
        %v2048 = vld [vmem:[#allocation3 + $0x478] sm:$0xff]
        %2049 = vmatpush.msra.mxu0 %v2040
        %2050 = vmatpush.msra.mxu0 %v2031
        %2051 = vmatpush.msra.mxu0 %v2022
        %2052 = vmatpush.msra.mxu0 %v2013
        %2053 = vmatpush.msra.mxu0 %v2004
        %2054 = vmatpush.msra.mxu0 %v1995
        %2055 = vmatpush.msra.mxu0 %v1986
        %2056 = vmatpush.msra.mxu0 %v1977
        %2057 = vmatpush.msra.mxu0 %v1968
        %2058 = vmatpush.msra.mxu0 %v1959
        %2059 = vmatpush.msra.mxu0 %v1950
        %2060 = vmatpush.msra.mxu0 %v1941
        %2061 = vmatpush.msra.mxu0 %v1932
        %2062 = vmatpush.msra.mxu0 %v1923
        %2063 = vmatpush.msra.mxu0 %v1914
        %2064 = vmatpush.msra.mxu0 %v1905
        %2065 = vmatmul.f32.gmra.mxu0 %v1904
        %v2066 = vpop.f32.mrf.mxu0
        %v2067 = vadd.f32 0.0, %v2066
        %2068 = vdwg.mxu0
        %2069 = vmatpush.msra.mxu0 %v2041
        %2070 = vmatpush.msra.mxu0 %v2032
        %2071 = vmatpush.msra.mxu0 %v2023
        %2072 = vmatpush.msra.mxu0 %v2014
        %2073 = vmatpush.msra.mxu0 %v2005
        %2074 = vmatpush.msra.mxu0 %v1996
        %2075 = vmatpush.msra.mxu0 %v1987
        %2076 = vmatpush.msra.mxu0 %v1978
        %2077 = vmatpush.msra.mxu0 %v1969
        %2078 = vmatpush.msra.mxu0 %v1960
        %2079 = vmatpush.msra.mxu0 %v1951
        %2080 = vmatpush.msra.mxu0 %v1942
        %2081 = vmatpush.msra.mxu0 %v1933
        %2082 = vmatpush.msra.mxu0 %v1924
        %2083 = vmatpush.msra.mxu0 %v1915
        %2084 = vmatpush.msra.mxu0 %v1906
        %2085 = vmatmul.f32.gmra.mxu0 %v1904
        %v2086 = vpop.f32.mrf.mxu0
        %v2087 = vadd.f32 0.0, %v2086
        %2088 = vdwg.mxu0
        %2089 = vmatpush.msra.mxu0 %v2042
        %2090 = vmatpush.msra.mxu0 %v2033
        %2091 = vmatpush.msra.mxu0 %v2024
        %2092 = vmatpush.msra.mxu0 %v2015
        %2093 = vmatpush.msra.mxu0 %v2006
        %2094 = vmatpush.msra.mxu0 %v1997
        %2095 = vmatpush.msra.mxu0 %v1988
        %2096 = vmatpush.msra.mxu0 %v1979
        %2097 = vmatpush.msra.mxu0 %v1970
        %2098 = vmatpush.msra.mxu0 %v1961
        %2099 = vmatpush.msra.mxu0 %v1952
        %2100 = vmatpush.msra.mxu0 %v1943
        %2101 = vmatpush.msra.mxu0 %v1934
        %2102 = vmatpush.msra.mxu0 %v1925
        %2103 = vmatpush.msra.mxu0 %v1916
        %2104 = vmatpush.msra.mxu0 %v1907
        %2105 = vmatmul.f32.gmra.mxu0 %v1904
        %v2106 = vpop.f32.mrf.mxu0
        %v2107 = vadd.f32 0.0, %v2106
        %2108 = vdwg.mxu0
        %2109 = vmatpush.msra.mxu0 %v2043
        %2110 = vmatpush.msra.mxu0 %v2034
        %2111 = vmatpush.msra.mxu0 %v2025
        %2112 = vmatpush.msra.mxu0 %v2016
        %2113 = vmatpush.msra.mxu0 %v2007
        %2114 = vmatpush.msra.mxu0 %v1998
        %2115 = vmatpush.msra.mxu0 %v1989
        %2116 = vmatpush.msra.mxu0 %v1980
        %2117 = vmatpush.msra.mxu0 %v1971
        %2118 = vmatpush.msra.mxu0 %v1962
        %2119 = vmatpush.msra.mxu0 %v1953
        %2120 = vmatpush.msra.mxu0 %v1944
        %2121 = vmatpush.msra.mxu0 %v1935
        %2122 = vmatpush.msra.mxu0 %v1926
        %2123 = vmatpush.msra.mxu0 %v1917
        %2124 = vmatpush.msra.mxu0 %v1908
        %2125 = vmatmul.f32.gmra.mxu0 %v1904
        %v2126 = vpop.f32.mrf.mxu0
        %v2127 = vadd.f32 0.0, %v2126
        %2128 = vdwg.mxu0
        %2129 = vmatpush.msra.mxu0 %v2044
        %2130 = vmatpush.msra.mxu0 %v2035
        %2131 = vmatpush.msra.mxu0 %v2026
        %2132 = vmatpush.msra.mxu0 %v2017
        %2133 = vmatpush.msra.mxu0 %v2008
        %2134 = vmatpush.msra.mxu0 %v1999
        %2135 = vmatpush.msra.mxu0 %v1990
        %2136 = vmatpush.msra.mxu0 %v1981
        %2137 = vmatpush.msra.mxu0 %v1972
        %2138 = vmatpush.msra.mxu0 %v1963
        %2139 = vmatpush.msra.mxu0 %v1954
        %2140 = vmatpush.msra.mxu0 %v1945
        %2141 = vmatpush.msra.mxu0 %v1936
        %2142 = vmatpush.msra.mxu0 %v1927
        %2143 = vmatpush.msra.mxu0 %v1918
        %2144 = vmatpush.msra.mxu0 %v1909
        %2145 = vmatmul.f32.gmra.mxu0 %v1904
        %v2146 = vpop.f32.mrf.mxu0
        %v2147 = vadd.f32 0.0, %v2146
        %2148 = vdwg.mxu0
        %2149 = vmatpush.msra.mxu0 %v2045
        %2150 = vmatpush.msra.mxu0 %v2036
        %2151 = vmatpush.msra.mxu0 %v2027
        %2152 = vmatpush.msra.mxu0 %v2018
        %2153 = vmatpush.msra.mxu0 %v2009
        %2154 = vmatpush.msra.mxu0 %v2000
        %2155 = vmatpush.msra.mxu0 %v1991
        %2156 = vmatpush.msra.mxu0 %v1982
        %2157 = vmatpush.msra.mxu0 %v1973
        %2158 = vmatpush.msra.mxu0 %v1964
        %2159 = vmatpush.msra.mxu0 %v1955
        %2160 = vmatpush.msra.mxu0 %v1946
        %2161 = vmatpush.msra.mxu0 %v1937
        %2162 = vmatpush.msra.mxu0 %v1928
        %2163 = vmatpush.msra.mxu0 %v1919
        %2164 = vmatpush.msra.mxu0 %v1910
        %2165 = vmatmul.f32.gmra.mxu0 %v1904
        %v2166 = vpop.f32.mrf.mxu0
        %v2167 = vadd.f32 0.0, %v2166
        %2168 = vdwg.mxu0
        %2169 = vmatpush.msra.mxu0 %v2046
        %2170 = vmatpush.msra.mxu0 %v2037
        %2171 = vmatpush.msra.mxu0 %v2028
        %2172 = vmatpush.msra.mxu0 %v2019
        %2173 = vmatpush.msra.mxu0 %v2010
        %2174 = vmatpush.msra.mxu0 %v2001
        %2175 = vmatpush.msra.mxu0 %v1992
        %2176 = vmatpush.msra.mxu0 %v1983
        %2177 = vmatpush.msra.mxu0 %v1974
        %2178 = vmatpush.msra.mxu0 %v1965
        %2179 = vmatpush.msra.mxu0 %v1956
        %2180 = vmatpush.msra.mxu0 %v1947
        %2181 = vmatpush.msra.mxu0 %v1938
        %2182 = vmatpush.msra.mxu0 %v1929
        %2183 = vmatpush.msra.mxu0 %v1920
        %2184 = vmatpush.msra.mxu0 %v1911
        %2185 = vmatmul.f32.gmra.mxu0 %v1904
        %v2186 = vpop.f32.mrf.mxu0
        %v2187 = vadd.f32 0.0, %v2186
        %2188 = vdwg.mxu0
        %2189 = vmatpush.msra.mxu0 %v2047
        %2190 = vmatpush.msra.mxu0 %v2038
        %2191 = vmatpush.msra.mxu0 %v2029
        %2192 = vmatpush.msra.mxu0 %v2020
        %2193 = vmatpush.msra.mxu0 %v2011
        %2194 = vmatpush.msra.mxu0 %v2002
        %2195 = vmatpush.msra.mxu0 %v1993
        %2196 = vmatpush.msra.mxu0 %v1984
        %2197 = vmatpush.msra.mxu0 %v1975
        %2198 = vmatpush.msra.mxu0 %v1966
        %2199 = vmatpush.msra.mxu0 %v1957
        %2200 = vmatpush.msra.mxu0 %v1948
        %2201 = vmatpush.msra.mxu0 %v1939
        %2202 = vmatpush.msra.mxu0 %v1930
        %2203 = vmatpush.msra.mxu0 %v1921
        %2204 = vmatpush.msra.mxu0 %v1912
        %2205 = vmatmul.f32.gmra.mxu0 %v1904
        %v2206 = vpop.f32.mrf.mxu0
        %v2207 = vadd.f32 0.0, %v2206
        %2208 = vdwg.mxu0
        %2209 = vmatpush.msra.mxu0 %v2048
        %2210 = vmatpush.msra.mxu0 %v2039
        %2211 = vmatpush.msra.mxu0 %v2030
        %2212 = vmatpush.msra.mxu0 %v2021
        %2213 = vmatpush.msra.mxu0 %v2012
        %2214 = vmatpush.msra.mxu0 %v2003
        %2215 = vmatpush.msra.mxu0 %v1994
        %2216 = vmatpush.msra.mxu0 %v1985
        %2217 = vmatpush.msra.mxu0 %v1976
        %2218 = vmatpush.msra.mxu0 %v1967
        %2219 = vmatpush.msra.mxu0 %v1958
        %2220 = vmatpush.msra.mxu0 %v1949
        %2221 = vmatpush.msra.mxu0 %v1940
        %2222 = vmatpush.msra.mxu0 %v1931
        %2223 = vmatpush.msra.mxu0 %v1922
        %2224 = vmatpush.msra.mxu0 %v1913
        %2225 = vmatmul.f32.gmra.mxu0 %v1904
        %v2226 = vpop.f32.mrf.mxu0
        %v2227 = vadd.f32 0.0, %v2226
        %2228 = vdwg.mxu0
        %v2229 = vld [vmem:[%s2] sm:$0xff]
        %v2230 = vld [vmem:[%s2 + $0x8] sm:$0x1]
        %v2233 = vperm.slane %v2229, 0
        %v2234 = vperm.slane %v2229, 1
        %v2235 = vperm.slane %v2229, 2
        %v2236 = vperm.slane %v2229, 3
        %v2237 = vperm.slane %v2229, 4
        %v2238 = vperm.slane %v2229, 5
        %v2239 = vperm.slane %v2229, 6
        %v2240 = vperm.slane %v2229, 7
        %v2241 = vperm.slane %v2230, 0
        %v2251 = vmul.f32 %v2067, %v2233
        %v2252 = vmul.f32 %v2087, %v2234
        %v2253 = vmul.f32 %v2107, %v2235
        %v2254 = vmul.f32 %v2127, %v2236
        %v2255 = vmul.f32 %v2147, %v2237
        %v2256 = vmul.f32 %v2167, %v2238
        %v2257 = vmul.f32 %v2187, %v2239
        %v2258 = vmul.f32 %v2207, %v2240
        %v2259 = vmul.f32 %v2227, %v2241
        %v2260 = vadd.f32 %v2251, %v2252
        %v2261 = vadd.f32 %v2260, %v2253
        %v2262 = vadd.f32 %v2261, %v2254
        %v2263 = vadd.f32 %v2262, %v2255
        %v2264 = vadd.f32 %v2263, %v2256
        %v2265 = vadd.f32 %v2264, %v2257
        %v2266 = vadd.f32 %v2265, %v2258
        %v2267 = vadd.f32 %v2266, %v2259
        %2268 = vadd.xlane.f32.xlu0 %v2267
        %v2269 = vpop.xlane.xlu0 %2268
        %v2270 = vmul.f32 %v2269, 0.0009765625
        %v2271 = vsub.f32 %v2067, %v2270
        %v2272 = vsub.f32 %v2087, %v2270
        %v2273 = vsub.f32 %v2107, %v2270
        %v2274 = vsub.f32 %v2127, %v2270
        %v2275 = vsub.f32 %v2147, %v2270
        %v2276 = vsub.f32 %v2167, %v2270
        %v2277 = vsub.f32 %v2187, %v2270
        %v2278 = vsub.f32 %v2207, %v2270
        %v2279 = vsub.f32 %v2227, %v2270
        %v2280 = vmul.f32 %v2271, %v2233
        %v2281 = vmul.f32 %v2272, %v2234
        %v2282 = vmul.f32 %v2273, %v2235
        %v2283 = vmul.f32 %v2274, %v2236
        %v2284 = vmul.f32 %v2275, %v2237
        %v2285 = vmul.f32 %v2276, %v2238
        %v2286 = vmul.f32 %v2277, %v2239
        %v2287 = vmul.f32 %v2278, %v2240
        %v2288 = vmul.f32 %v2279, %v2241
        %v2289 = vmul.f32 %v2280, %v2280
        %v2290 = vmul.f32 %v2281, %v2281
        %v2291 = vmul.f32 %v2282, %v2282
        %v2292 = vmul.f32 %v2283, %v2283
        %v2293 = vmul.f32 %v2284, %v2284
        %v2294 = vmul.f32 %v2285, %v2285
        %v2295 = vmul.f32 %v2286, %v2286
        %v2296 = vmul.f32 %v2287, %v2287
        %v2297 = vmul.f32 %v2288, %v2288
        %v2298 = vadd.f32 %v2289, %v2290
        %v2299 = vadd.f32 %v2298, %v2291
        %v2300 = vadd.f32 %v2299, %v2292
        %v2301 = vadd.f32 %v2300, %v2293
        %v2302 = vadd.f32 %v2301, %v2294
        %v2303 = vadd.f32 %v2302, %v2295
        %v2304 = vadd.f32 %v2303, %v2296
        %v2305 = vadd.f32 %v2304, %v2297
        %2306 = vadd.xlane.f32.xlu0 %v2305
        %v2307 = vpop.xlane.xlu0 %2306
        %v2308 = vmul.f32 %v2307, 0.0009765625
        %v2309 = vadd.f32 %v2308, 1e-05
        %v2310 = vrsqrt.pop %v2309
        %v2311 = vmul.f32 %v2310, %v2309
        %v2312 = vmul.f32 %v2311, %v2310
        %v2313 = vmul.f32 0.5, %v2312
        %v2314 = vsub.f32 1.5, %v2313
        %v2315 = vmul.f32 %v2310, %v2314
        %vm2316 = vweird.f32 %v2309
        %vm2317 = vweird.f32 %v2310
        %vm2318 = vmor %vm2316, %vm2317
        %v2319 = vsel %vm2318, %v2310, %v2315
        %v2320 = vmul.f32 %v2271, %v2319
        %v2321 = vmul.f32 %v2272, %v2319
        %v2322 = vmul.f32 %v2273, %v2319
        %v2323 = vmul.f32 %v2274, %v2319
        %v2324 = vmul.f32 %v2275, %v2319
        %v2325 = vmul.f32 %v2276, %v2319
        %v2326 = vmul.f32 %v2277, %v2319
        %v2327 = vmul.f32 %v2278, %v2319
        %v2328 = vmul.f32 %v2279, %v2319
        %v2329 = vmax.f32 %v2320, 0.0
        %v2330 = vmax.f32 %v2321, 0.0
        %v2331 = vmax.f32 %v2322, 0.0
        %v2332 = vmax.f32 %v2323, 0.0
        %v2333 = vmax.f32 %v2324, 0.0
        %v2334 = vmax.f32 %v2325, 0.0
        %v2335 = vmax.f32 %v2326, 0.0
        %v2336 = vmax.f32 %v2327, 0.0
        %v2337 = vmax.f32 %v2328, 0.0
        %2338 = vst [vmem:[#allocation4] sm:$0xff] %v2329
        %2339 = vst [vmem:[#allocation4 + $0x8] sm:$0xff] %v2330
        %2340 = vst [vmem:[#allocation4 + $0x10] sm:$0xff] %v2331
        %2341 = vst [vmem:[#allocation4 + $0x18] sm:$0xff] %v2332
        %2342 = vst [vmem:[#allocation4 + $0x20] sm:$0xff] %v2333
        %2343 = vst [vmem:[#allocation4 + $0x28] sm:$0xff] %v2334
        %2344 = vst [vmem:[#allocation4 + $0x30] sm:$0xff] %v2335
        %2345 = vst [vmem:[#allocation4 + $0x38] sm:$0xff] %v2336
        %2346 = vst [vmem:[#allocation4 + $0x40] sm:$0xff] %v2337
        %v2347 = vld [vmem:[#allocation4] sm:$0xff]
        %v2349 = vrot.slane %v2347, 1
        %v2350 = vrot.slane %v2347, 2
        %v2351 = vrot.slane %v2347, 3
        %v2352 = vrot.slane %v2347, 4
        %v2353 = vrot.slane %v2347, 5
        %v2354 = vrot.slane %v2347, 6
        %v2355 = vrot.slane %v2347, 7
        %vm2363 = vcmask 253952
        %2364 = vst.msk [vmem:[%s205] sm:$0x1] %vm2363, %v2347
        %2365 = vst.msk [vmem:[%s205 + $0x20] sm:$0x1] %vm2363, %v2349
        %2366 = vst.msk [vmem:[%s205 + $0x40] sm:$0x1] %vm2363, %v2350
        %2367 = vst.msk [vmem:[%s205 + $0x60] sm:$0x1] %vm2363, %v2351
        %2368 = vst.msk [vmem:[%s205 + $0x80] sm:$0x1] %vm2363, %v2352
        %2369 = vst.msk [vmem:[%s205 + $0xa0] sm:$0x1] %vm2363, %v2353
        %2370 = vst.msk [vmem:[%s205 + $0xc0] sm:$0x1] %vm2363, %v2354
        %2371 = vst.msk [vmem:[%s205 + $0xe0] sm:$0x1] %vm2363, %v2355
        %v2372 = vld [vmem:[#allocation4] sm:$0xff]
        %v2374 = vrot.slane %v2372, 1
        %v2375 = vrot.slane %v2372, 2
        %v2376 = vrot.slane %v2372, 3
        %v2377 = vrot.slane %v2372, 4
        %v2378 = vrot.slane %v2372, 5
        %v2379 = vrot.slane %v2372, 6
        %v2380 = vrot.slane %v2372, 7
        %v2381 = vperm.slane %v2372, 0
        %v2382 = vperm.slane %v2374, 0
        %v2383 = vperm.slane %v2375, 0
        %v2384 = vperm.slane %v2376, 0
        %v2385 = vperm.slane %v2377, 0
        %v2386 = vperm.slane %v2378, 0
        %v2387 = vperm.slane %v2379, 0
        %v2388 = vperm.slane %v2380, 0
        %2389 = vrot.lane.b32.xlu0 %v2381, 92
        %v2390 = vpop.permute.xlu0 %2389
        %2391 = vrot.lane.b32.xlu0 %v2382, 92
        %v2392 = vpop.permute.xlu0 %2391
        %2393 = vrot.lane.b32.xlu0 %v2383, 92
        %v2394 = vpop.permute.xlu0 %2393
        %2395 = vrot.lane.b32.xlu0 %v2384, 92
        %v2396 = vpop.permute.xlu0 %2395
        %2397 = vrot.lane.b32.xlu0 %v2385, 92
        %v2398 = vpop.permute.xlu0 %2397
        %2399 = vrot.lane.b32.xlu0 %v2386, 92
        %v2400 = vpop.permute.xlu0 %2399
        %2401 = vrot.lane.b32.xlu0 %v2387, 92
        %v2402 = vpop.permute.xlu0 %2401
        %2403 = vrot.lane.b32.xlu0 %v2388, 92
        %v2404 = vpop.permute.xlu0 %2403
        %2413 = vst.msk [vmem:[%s205 + $0x1] sm:$0x1] %vm2363, %v2390
        %2414 = vst.msk [vmem:[%s205 + $0x21] sm:$0x1] %vm2363, %v2392
        %2415 = vst.msk [vmem:[%s205 + $0x41] sm:$0x1] %vm2363, %v2394
        %2416 = vst.msk [vmem:[%s205 + $0x61] sm:$0x1] %vm2363, %v2396
        %2417 = vst.msk [vmem:[%s205 + $0x81] sm:$0x1] %vm2363, %v2398
        %2418 = vst.msk [vmem:[%s205 + $0xa1] sm:$0x1] %vm2363, %v2400
        %2419 = vst.msk [vmem:[%s205 + $0xc1] sm:$0x1] %vm2363, %v2402
        %2420 = vst.msk [vmem:[%s205 + $0xe1] sm:$0x1] %vm2363, %v2404
        %v2421 = vld [vmem:[#allocation4] sm:$0xff]
        %v2423 = vrot.slane %v2421, 1
        %v2424 = vrot.slane %v2421, 2
        %v2425 = vrot.slane %v2421, 3
        %v2426 = vrot.slane %v2421, 4
        %v2427 = vrot.slane %v2421, 5
        %v2428 = vrot.slane %v2421, 6
        %v2429 = vrot.slane %v2421, 7
        %v2430 = vperm.slane %v2421, 0
        %v2431 = vperm.slane %v2423, 0
        %v2432 = vperm.slane %v2424, 0
        %v2433 = vperm.slane %v2425, 0
        %v2434 = vperm.slane %v2426, 0
        %v2435 = vperm.slane %v2427, 0
        %v2436 = vperm.slane %v2428, 0
        %v2437 = vperm.slane %v2429, 0
        %2438 = vrot.lane.b32.xlu0 %v2430, 56
        %v2439 = vpop.permute.xlu0 %2438
        %2440 = vrot.lane.b32.xlu0 %v2431, 56
        %v2441 = vpop.permute.xlu0 %2440
        %2442 = vrot.lane.b32.xlu0 %v2432, 56
        %v2443 = vpop.permute.xlu0 %2442
        %2444 = vrot.lane.b32.xlu0 %v2433, 56
        %v2445 = vpop.permute.xlu0 %2444
        %2446 = vrot.lane.b32.xlu0 %v2434, 56
        %v2447 = vpop.permute.xlu0 %2446
        %2448 = vrot.lane.b32.xlu0 %v2435, 56
        %v2449 = vpop.permute.xlu0 %2448
        %2450 = vrot.lane.b32.xlu0 %v2436, 56
        %v2451 = vpop.permute.xlu0 %2450
        %2452 = vrot.lane.b32.xlu0 %v2437, 56
        %v2453 = vpop.permute.xlu0 %2452
        %2462 = vst.msk [vmem:[%s205 + $0x2] sm:$0x1] %vm2363, %v2439
        %2463 = vst.msk [vmem:[%s205 + $0x22] sm:$0x1] %vm2363, %v2441
        %2464 = vst.msk [vmem:[%s205 + $0x42] sm:$0x1] %vm2363, %v2443
        %2465 = vst.msk [vmem:[%s205 + $0x62] sm:$0x1] %vm2363, %v2445
        %2466 = vst.msk [vmem:[%s205 + $0x82] sm:$0x1] %vm2363, %v2447
        %2467 = vst.msk [vmem:[%s205 + $0xa2] sm:$0x1] %vm2363, %v2449
        %2468 = vst.msk [vmem:[%s205 + $0xc2] sm:$0x1] %vm2363, %v2451
        %2469 = vst.msk [vmem:[%s205 + $0xe2] sm:$0x1] %vm2363, %v2453
        %v2470 = vld [vmem:[#allocation4] sm:$0xff]
        %v2471 = vld [vmem:[#allocation4 + $0x8] sm:$0xff]
        %v2474 = vrot.slane %v2471, 7
        %vm2475 = vcmask 1040384
        %v2476 = vsel %vm2475, %v2470, %v2474
        %v2477 = vsel %vm245, %v2470, %v2474
        %v2478 = vrot.slane %v2477, 1
        %v2479 = vsel %vm248, %v2470, %v2474
        %v2480 = vrot.slane %v2479, 2
        %v2481 = vsel %vm251, %v2470, %v2474
        %v2482 = vrot.slane %v2481, 3
        %v2483 = vsel %vm254, %v2470, %v2474
        %v2484 = vrot.slane %v2483, 4
        %v2485 = vsel %vm257, %v2470, %v2474
        %v2486 = vrot.slane %v2485, 5
        %v2487 = vsel %vm260, %v2470, %v2474
        %v2488 = vrot.slane %v2487, 6
        %vm2489 = vcmask 1046528
        %v2490 = vsel %vm2489, %v2474, %v2470
        %v2491 = vrot.slane %v2490, 7
        %v2492 = vperm.slane %v2476, 0
        %v2493 = vperm.slane %v2476, 1
        %v2494 = vperm.slane %v2478, 0
        %v2495 = vperm.slane %v2478, 1
        %v2496 = vperm.slane %v2480, 0
        %v2497 = vperm.slane %v2480, 1
        %v2498 = vperm.slane %v2482, 0
        %v2499 = vperm.slane %v2482, 1
        %v2500 = vperm.slane %v2484, 0
        %v2501 = vperm.slane %v2484, 1
        %v2502 = vperm.slane %v2486, 0
        %v2503 = vperm.slane %v2486, 1
        %v2504 = vperm.slane %v2488, 0
        %v2505 = vperm.slane %v2488, 1
        %v2506 = vperm.slane %v2491, 0
        %v2507 = vperm.slane %v2491, 1
        %2508 = vrot.lane.b32.xlu0 %v2492, 20
        %v2509 = vpop.permute.xlu0 %2508
        %2510 = vrot.lane.b32.xlu0 %v2493, 20
        %v2511 = vpop.permute.xlu0 %2510
        %2512 = vrot.lane.b32.xlu0 %v2494, 20
        %v2513 = vpop.permute.xlu0 %2512
        %2514 = vrot.lane.b32.xlu0 %v2495, 20
        %v2515 = vpop.permute.xlu0 %2514
        %2516 = vrot.lane.b32.xlu0 %v2496, 20
        %v2517 = vpop.permute.xlu0 %2516
        %2518 = vrot.lane.b32.xlu0 %v2497, 20
        %v2519 = vpop.permute.xlu0 %2518
        %2520 = vrot.lane.b32.xlu0 %v2498, 20
        %v2521 = vpop.permute.xlu0 %2520
        %2522 = vrot.lane.b32.xlu0 %v2499, 20
        %v2523 = vpop.permute.xlu0 %2522
        %2524 = vrot.lane.b32.xlu0 %v2500, 20
        %v2525 = vpop.permute.xlu0 %2524
        %2526 = vrot.lane.b32.xlu0 %v2501, 20
        %v2527 = vpop.permute.xlu0 %2526
        %2528 = vrot.lane.b32.xlu0 %v2502, 20
        %v2529 = vpop.permute.xlu0 %2528
        %2530 = vrot.lane.b32.xlu0 %v2503, 20
        %v2531 = vpop.permute.xlu0 %2530
        %2532 = vrot.lane.b32.xlu0 %v2504, 20
        %v2533 = vpop.permute.xlu0 %2532
        %2534 = vrot.lane.b32.xlu0 %v2505, 20
        %v2535 = vpop.permute.xlu0 %2534
        %2536 = vrot.lane.b32.xlu0 %v2506, 20
        %v2537 = vpop.permute.xlu0 %2536
        %2538 = vrot.lane.b32.xlu0 %v2507, 20
        %v2539 = vpop.permute.xlu0 %2538
        %v2540 = vsel %vm764, %v2509, %v2511
        %v2541 = vsel %vm764, %v2513, %v2515
        %v2542 = vsel %vm764, %v2517, %v2519
        %v2543 = vsel %vm764, %v2521, %v2523
        %v2544 = vsel %vm764, %v2525, %v2527
        %v2545 = vsel %vm764, %v2529, %v2531
        %v2546 = vsel %vm764, %v2533, %v2535
        %v2547 = vsel %vm764, %v2537, %v2539
        %2556 = vst.msk [vmem:[%s205 + $0x3] sm:$0x1] %vm2363, %v2540
        %2557 = vst.msk [vmem:[%s205 + $0x23] sm:$0x1] %vm2363, %v2541
        %2558 = vst.msk [vmem:[%s205 + $0x43] sm:$0x1] %vm2363, %v2542
        %2559 = vst.msk [vmem:[%s205 + $0x63] sm:$0x1] %vm2363, %v2543
        %2560 = vst.msk [vmem:[%s205 + $0x83] sm:$0x1] %vm2363, %v2544
        %2561 = vst.msk [vmem:[%s205 + $0xa3] sm:$0x1] %vm2363, %v2545
        %2562 = vst.msk [vmem:[%s205 + $0xc3] sm:$0x1] %vm2363, %v2546
        %2563 = vst.msk [vmem:[%s205 + $0xe3] sm:$0x1] %vm2363, %v2547
        %v2564 = vld [vmem:[#allocation4 + $0x8] sm:$0xff]
        %v2566 = vrot.slane %v2564, 1
        %v2567 = vrot.slane %v2564, 2
        %v2568 = vrot.slane %v2564, 3
        %v2569 = vrot.slane %v2564, 4
        %v2570 = vrot.slane %v2564, 5
        %v2571 = vrot.slane %v2564, 6
        %v2572 = vrot.slane %v2564, 7
        %v2573 = vperm.slane %v2564, 0
        %v2574 = vperm.slane %v2566, 0
        %v2575 = vperm.slane %v2567, 0
        %v2576 = vperm.slane %v2568, 0
        %v2577 = vperm.slane %v2569, 0
        %v2578 = vperm.slane %v2570, 0
        %v2579 = vperm.slane %v2571, 0
        %v2580 = vperm.slane %v2572, 0
        %2581 = vrot.lane.b32.xlu0 %v2573, 112
        %v2582 = vpop.permute.xlu0 %2581
        %2583 = vrot.lane.b32.xlu0 %v2574, 112
        %v2584 = vpop.permute.xlu0 %2583
        %2585 = vrot.lane.b32.xlu0 %v2575, 112
        %v2586 = vpop.permute.xlu0 %2585
        %2587 = vrot.lane.b32.xlu0 %v2576, 112
        %v2588 = vpop.permute.xlu0 %2587
        %2589 = vrot.lane.b32.xlu0 %v2577, 112
        %v2590 = vpop.permute.xlu0 %2589
        %2591 = vrot.lane.b32.xlu0 %v2578, 112
        %v2592 = vpop.permute.xlu0 %2591
        %2593 = vrot.lane.b32.xlu0 %v2579, 112
        %v2594 = vpop.permute.xlu0 %2593
        %2595 = vrot.lane.b32.xlu0 %v2580, 112
        %v2596 = vpop.permute.xlu0 %2595
        %2605 = vst.msk [vmem:[%s205 + $0x4] sm:$0x1] %vm2363, %v2582
        %2606 = vst.msk [vmem:[%s205 + $0x24] sm:$0x1] %vm2363, %v2584
        %2607 = vst.msk [vmem:[%s205 + $0x44] sm:$0x1] %vm2363, %v2586
        %2608 = vst.msk [vmem:[%s205 + $0x64] sm:$0x1] %vm2363, %v2588
        %2609 = vst.msk [vmem:[%s205 + $0x84] sm:$0x1] %vm2363, %v2590
        %2610 = vst.msk [vmem:[%s205 + $0xa4] sm:$0x1] %vm2363, %v2592
        %2611 = vst.msk [vmem:[%s205 + $0xc4] sm:$0x1] %vm2363, %v2594
        %2612 = vst.msk [vmem:[%s205 + $0xe4] sm:$0x1] %vm2363, %v2596
        %v2613 = vld [vmem:[#allocation4 + $0x8] sm:$0xff]
        %v2615 = vrot.slane %v2613, 1
        %v2616 = vrot.slane %v2613, 2
        %v2617 = vrot.slane %v2613, 3
        %v2618 = vrot.slane %v2613, 4
        %v2619 = vrot.slane %v2613, 5
        %v2620 = vrot.slane %v2613, 6
        %v2621 = vrot.slane %v2613, 7
        %v2622 = vperm.slane %v2613, 0
        %v2623 = vperm.slane %v2615, 0
        %v2624 = vperm.slane %v2616, 0
        %v2625 = vperm.slane %v2617, 0
        %v2626 = vperm.slane %v2618, 0
        %v2627 = vperm.slane %v2619, 0
        %v2628 = vperm.slane %v2620, 0
        %v2629 = vperm.slane %v2621, 0
        %2630 = vrot.lane.b32.xlu0 %v2622, 76
        %v2631 = vpop.permute.xlu0 %2630
        %2632 = vrot.lane.b32.xlu0 %v2623, 76
        %v2633 = vpop.permute.xlu0 %2632
        %2634 = vrot.lane.b32.xlu0 %v2624, 76
        %v2635 = vpop.permute.xlu0 %2634
        %2636 = vrot.lane.b32.xlu0 %v2625, 76
        %v2637 = vpop.permute.xlu0 %2636
        %2638 = vrot.lane.b32.xlu0 %v2626, 76
        %v2639 = vpop.permute.xlu0 %2638
        %2640 = vrot.lane.b32.xlu0 %v2627, 76
        %v2641 = vpop.permute.xlu0 %2640
        %2642 = vrot.lane.b32.xlu0 %v2628, 76
        %v2643 = vpop.permute.xlu0 %2642
        %2644 = vrot.lane.b32.xlu0 %v2629, 76
        %v2645 = vpop.permute.xlu0 %2644
        %2654 = vst.msk [vmem:[%s205 + $0x5] sm:$0x1] %vm2363, %v2631
        %2655 = vst.msk [vmem:[%s205 + $0x25] sm:$0x1] %vm2363, %v2633
        %2656 = vst.msk [vmem:[%s205 + $0x45] sm:$0x1] %vm2363, %v2635
        %2657 = vst.msk [vmem:[%s205 + $0x65] sm:$0x1] %vm2363, %v2637
        %2658 = vst.msk [vmem:[%s205 + $0x85] sm:$0x1] %vm2363, %v2639
        %2659 = vst.msk [vmem:[%s205 + $0xa5] sm:$0x1] %vm2363, %v2641
        %2660 = vst.msk [vmem:[%s205 + $0xc5] sm:$0x1] %vm2363, %v2643
        %2661 = vst.msk [vmem:[%s205 + $0xe5] sm:$0x1] %vm2363, %v2645
        %v2662 = vld [vmem:[#allocation4 + $0x8] sm:$0xff]
        %v2664 = vrot.slane %v2662, 1
        %v2665 = vrot.slane %v2662, 2
        %v2666 = vrot.slane %v2662, 3
        %v2667 = vrot.slane %v2662, 4
        %v2668 = vrot.slane %v2662, 5
        %v2669 = vrot.slane %v2662, 6
        %v2670 = vrot.slane %v2662, 7
        %v2671 = vperm.slane %v2662, 0
        %v2672 = vperm.slane %v2664, 0
        %v2673 = vperm.slane %v2665, 0
        %v2674 = vperm.slane %v2666, 0
        %v2675 = vperm.slane %v2667, 0
        %v2676 = vperm.slane %v2668, 0
        %v2677 = vperm.slane %v2669, 0
        %v2678 = vperm.slane %v2670, 0
        %2679 = vrot.lane.b32.xlu0 %v2671, 40
        %v2680 = vpop.permute.xlu0 %2679
        %2681 = vrot.lane.b32.xlu0 %v2672, 40
        %v2682 = vpop.permute.xlu0 %2681
        %2683 = vrot.lane.b32.xlu0 %v2673, 40
        %v2684 = vpop.permute.xlu0 %2683
        %2685 = vrot.lane.b32.xlu0 %v2674, 40
        %v2686 = vpop.permute.xlu0 %2685
        %2687 = vrot.lane.b32.xlu0 %v2675, 40
        %v2688 = vpop.permute.xlu0 %2687
        %2689 = vrot.lane.b32.xlu0 %v2676, 40
        %v2690 = vpop.permute.xlu0 %2689
        %2691 = vrot.lane.b32.xlu0 %v2677, 40
        %v2692 = vpop.permute.xlu0 %2691
        %2693 = vrot.lane.b32.xlu0 %v2678, 40
        %v2694 = vpop.permute.xlu0 %2693
        %2703 = vst.msk [vmem:[%s205 + $0x6] sm:$0x1] %vm2363, %v2680
        %2704 = vst.msk [vmem:[%s205 + $0x26] sm:$0x1] %vm2363, %v2682
        %2705 = vst.msk [vmem:[%s205 + $0x46] sm:$0x1] %vm2363, %v2684
        %2706 = vst.msk [vmem:[%s205 + $0x66] sm:$0x1] %vm2363, %v2686
        %2707 = vst.msk [vmem:[%s205 + $0x86] sm:$0x1] %vm2363, %v2688
        %2708 = vst.msk [vmem:[%s205 + $0xa6] sm:$0x1] %vm2363, %v2690
        %2709 = vst.msk [vmem:[%s205 + $0xc6] sm:$0x1] %vm2363, %v2692
        %2710 = vst.msk [vmem:[%s205 + $0xe6] sm:$0x1] %vm2363, %v2694
        %v2711 = vld [vmem:[#allocation4 + $0x8] sm:$0xff]
        %v2712 = vld [vmem:[#allocation4 + $0x10] sm:$0xff]
        %v2715 = vrot.slane %v2712, 7
        %v2716 = vsel %vm2475, %v2711, %v2715
        %v2717 = vsel %vm245, %v2711, %v2715
        %v2718 = vrot.slane %v2717, 1
        %v2719 = vsel %vm248, %v2711, %v2715
        %v2720 = vrot.slane %v2719, 2
        %v2721 = vsel %vm251, %v2711, %v2715
        %v2722 = vrot.slane %v2721, 3
        %v2723 = vsel %vm254, %v2711, %v2715
        %v2724 = vrot.slane %v2723, 4
        %v2725 = vsel %vm257, %v2711, %v2715
        %v2726 = vrot.slane %v2725, 5
        %v2727 = vsel %vm260, %v2711, %v2715
        %v2728 = vrot.slane %v2727, 6
        %v2729 = vsel %vm2489, %v2715, %v2711
        %v2730 = vrot.slane %v2729, 7
        %v2731 = vperm.slane %v2716, 0
        %v2732 = vperm.slane %v2716, 1
        %v2733 = vperm.slane %v2718, 0
        %v2734 = vperm.slane %v2718, 1
        %v2735 = vperm.slane %v2720, 0
        %v2736 = vperm.slane %v2720, 1
        %v2737 = vperm.slane %v2722, 0
        %v2738 = vperm.slane %v2722, 1
        %v2739 = vperm.slane %v2724, 0
        %v2740 = vperm.slane %v2724, 1
        %v2741 = vperm.slane %v2726, 0
        %v2742 = vperm.slane %v2726, 1
        %v2743 = vperm.slane %v2728, 0
        %v2744 = vperm.slane %v2728, 1
        %v2745 = vperm.slane %v2730, 0
        %v2746 = vperm.slane %v2730, 1
        %2747 = vrot.lane.b32.xlu0 %v2731, 4
        %v2748 = vpop.permute.xlu0 %2747
        %2749 = vrot.lane.b32.xlu0 %v2732, 4
        %v2750 = vpop.permute.xlu0 %2749
        %2751 = vrot.lane.b32.xlu0 %v2733, 4
        %v2752 = vpop.permute.xlu0 %2751
        %2753 = vrot.lane.b32.xlu0 %v2734, 4
        %v2754 = vpop.permute.xlu0 %2753
        %2755 = vrot.lane.b32.xlu0 %v2735, 4
        %v2756 = vpop.permute.xlu0 %2755
        %2757 = vrot.lane.b32.xlu0 %v2736, 4
        %v2758 = vpop.permute.xlu0 %2757
        %2759 = vrot.lane.b32.xlu0 %v2737, 4
        %v2760 = vpop.permute.xlu0 %2759
        %2761 = vrot.lane.b32.xlu0 %v2738, 4
        %v2762 = vpop.permute.xlu0 %2761
        %2763 = vrot.lane.b32.xlu0 %v2739, 4
        %v2764 = vpop.permute.xlu0 %2763
        %2765 = vrot.lane.b32.xlu0 %v2740, 4
        %v2766 = vpop.permute.xlu0 %2765
        %2767 = vrot.lane.b32.xlu0 %v2741, 4
        %v2768 = vpop.permute.xlu0 %2767
        %2769 = vrot.lane.b32.xlu0 %v2742, 4
        %v2770 = vpop.permute.xlu0 %2769
        %2771 = vrot.lane.b32.xlu0 %v2743, 4
        %v2772 = vpop.permute.xlu0 %2771
        %2773 = vrot.lane.b32.xlu0 %v2744, 4
        %v2774 = vpop.permute.xlu0 %2773
        %2775 = vrot.lane.b32.xlu0 %v2745, 4
        %v2776 = vpop.permute.xlu0 %2775
        %2777 = vrot.lane.b32.xlu0 %v2746, 4
        %v2778 = vpop.permute.xlu0 %2777
        %v2779 = vsel %vm692, %v2748, %v2750
        %v2780 = vsel %vm692, %v2752, %v2754
        %v2781 = vsel %vm692, %v2756, %v2758
        %v2782 = vsel %vm692, %v2760, %v2762
        %v2783 = vsel %vm692, %v2764, %v2766
        %v2784 = vsel %vm692, %v2768, %v2770
        %v2785 = vsel %vm692, %v2772, %v2774
        %v2786 = vsel %vm692, %v2776, %v2778
        %2795 = vst.msk [vmem:[%s205 + $0x7] sm:$0x1] %vm2363, %v2779
        %2796 = vst.msk [vmem:[%s205 + $0x27] sm:$0x1] %vm2363, %v2780
        %2797 = vst.msk [vmem:[%s205 + $0x47] sm:$0x1] %vm2363, %v2781
        %2798 = vst.msk [vmem:[%s205 + $0x67] sm:$0x1] %vm2363, %v2782
        %2799 = vst.msk [vmem:[%s205 + $0x87] sm:$0x1] %vm2363, %v2783
        %2800 = vst.msk [vmem:[%s205 + $0xa7] sm:$0x1] %vm2363, %v2784
        %2801 = vst.msk [vmem:[%s205 + $0xc7] sm:$0x1] %vm2363, %v2785
        %2802 = vst.msk [vmem:[%s205 + $0xe7] sm:$0x1] %vm2363, %v2786
        %v2803 = vld [vmem:[#allocation4 + $0x10] sm:$0xff]
        %v2805 = vrot.slane %v2803, 1
        %v2806 = vrot.slane %v2803, 2
        %v2807 = vrot.slane %v2803, 3
        %v2808 = vrot.slane %v2803, 4
        %v2809 = vrot.slane %v2803, 5
        %v2810 = vrot.slane %v2803, 6
        %v2811 = vrot.slane %v2803, 7
        %v2812 = vperm.slane %v2803, 0
        %v2813 = vperm.slane %v2805, 0
        %v2814 = vperm.slane %v2806, 0
        %v2815 = vperm.slane %v2807, 0
        %v2816 = vperm.slane %v2808, 0
        %v2817 = vperm.slane %v2809, 0
        %v2818 = vperm.slane %v2810, 0
        %v2819 = vperm.slane %v2811, 0
        %2820 = vrot.lane.b32.xlu0 %v2812, 96
        %v2821 = vpop.permute.xlu0 %2820
        %2822 = vrot.lane.b32.xlu0 %v2813, 96
        %v2823 = vpop.permute.xlu0 %2822
        %2824 = vrot.lane.b32.xlu0 %v2814, 96
        %v2825 = vpop.permute.xlu0 %2824
        %2826 = vrot.lane.b32.xlu0 %v2815, 96
        %v2827 = vpop.permute.xlu0 %2826
        %2828 = vrot.lane.b32.xlu0 %v2816, 96
        %v2829 = vpop.permute.xlu0 %2828
        %2830 = vrot.lane.b32.xlu0 %v2817, 96
        %v2831 = vpop.permute.xlu0 %2830
        %2832 = vrot.lane.b32.xlu0 %v2818, 96
        %v2833 = vpop.permute.xlu0 %2832
        %2834 = vrot.lane.b32.xlu0 %v2819, 96
        %v2835 = vpop.permute.xlu0 %2834
        %2844 = vst.msk [vmem:[%s205 + $0x8] sm:$0x1] %vm2363, %v2821
        %2845 = vst.msk [vmem:[%s205 + $0x28] sm:$0x1] %vm2363, %v2823
        %2846 = vst.msk [vmem:[%s205 + $0x48] sm:$0x1] %vm2363, %v2825
        %2847 = vst.msk [vmem:[%s205 + $0x68] sm:$0x1] %vm2363, %v2827
        %2848 = vst.msk [vmem:[%s205 + $0x88] sm:$0x1] %vm2363, %v2829
        %2849 = vst.msk [vmem:[%s205 + $0xa8] sm:$0x1] %vm2363, %v2831
        %2850 = vst.msk [vmem:[%s205 + $0xc8] sm:$0x1] %vm2363, %v2833
        %2851 = vst.msk [vmem:[%s205 + $0xe8] sm:$0x1] %vm2363, %v2835
        %v2852 = vld [vmem:[#allocation4 + $0x10] sm:$0xff]
        %v2854 = vrot.slane %v2852, 1
        %v2855 = vrot.slane %v2852, 2
        %v2856 = vrot.slane %v2852, 3
        %v2857 = vrot.slane %v2852, 4
        %v2858 = vrot.slane %v2852, 5
        %v2859 = vrot.slane %v2852, 6
        %v2860 = vrot.slane %v2852, 7
        %v2861 = vperm.slane %v2852, 0
        %v2862 = vperm.slane %v2854, 0
        %v2863 = vperm.slane %v2855, 0
        %v2864 = vperm.slane %v2856, 0
        %v2865 = vperm.slane %v2857, 0
        %v2866 = vperm.slane %v2858, 0
        %v2867 = vperm.slane %v2859, 0
        %v2868 = vperm.slane %v2860, 0
        %2869 = vrot.lane.b32.xlu0 %v2861, 60
        %v2870 = vpop.permute.xlu0 %2869
        %2871 = vrot.lane.b32.xlu0 %v2862, 60
        %v2872 = vpop.permute.xlu0 %2871
        %2873 = vrot.lane.b32.xlu0 %v2863, 60
        %v2874 = vpop.permute.xlu0 %2873
        %2875 = vrot.lane.b32.xlu0 %v2864, 60
        %v2876 = vpop.permute.xlu0 %2875
        %2877 = vrot.lane.b32.xlu0 %v2865, 60
        %v2878 = vpop.permute.xlu0 %2877
        %2879 = vrot.lane.b32.xlu0 %v2866, 60
        %v2880 = vpop.permute.xlu0 %2879
        %2881 = vrot.lane.b32.xlu0 %v2867, 60
        %v2882 = vpop.permute.xlu0 %2881
        %2883 = vrot.lane.b32.xlu0 %v2868, 60
        %v2884 = vpop.permute.xlu0 %2883
        %2893 = vst.msk [vmem:[%s205 + $0x9] sm:$0x1] %vm2363, %v2870
        %2894 = vst.msk [vmem:[%s205 + $0x29] sm:$0x1] %vm2363, %v2872
        %2895 = vst.msk [vmem:[%s205 + $0x49] sm:$0x1] %vm2363, %v2874
        %2896 = vst.msk [vmem:[%s205 + $0x69] sm:$0x1] %vm2363, %v2876
        %2897 = vst.msk [vmem:[%s205 + $0x89] sm:$0x1] %vm2363, %v2878
        %2898 = vst.msk [vmem:[%s205 + $0xa9] sm:$0x1] %vm2363, %v2880
        %2899 = vst.msk [vmem:[%s205 + $0xc9] sm:$0x1] %vm2363, %v2882
        %2900 = vst.msk [vmem:[%s205 + $0xe9] sm:$0x1] %vm2363, %v2884
        %v2901 = vld [vmem:[#allocation4 + $0x10] sm:$0xff]
        %v2902 = vld [vmem:[#allocation4 + $0x18] sm:$0xff]
        %v2905 = vrot.slane %v2902, 7
        %v2906 = vsel %vm2475, %v2901, %v2905
        %v2907 = vsel %vm245, %v2901, %v2905
        %v2908 = vrot.slane %v2907, 1
        %v2909 = vsel %vm248, %v2901, %v2905
        %v2910 = vrot.slane %v2909, 2
        %v2911 = vsel %vm251, %v2901, %v2905
        %v2912 = vrot.slane %v2911, 3
        %v2913 = vsel %vm254, %v2901, %v2905
        %v2914 = vrot.slane %v2913, 4
        %v2915 = vsel %vm257, %v2901, %v2905
        %v2916 = vrot.slane %v2915, 5
        %v2917 = vsel %vm260, %v2901, %v2905
        %v2918 = vrot.slane %v2917, 6
        %v2919 = vsel %vm2489, %v2905, %v2901
        %v2920 = vrot.slane %v2919, 7
        %v2921 = vperm.slane %v2906, 0
        %v2922 = vperm.slane %v2906, 1
        %v2923 = vperm.slane %v2908, 0
        %v2924 = vperm.slane %v2908, 1
        %v2925 = vperm.slane %v2910, 0
        %v2926 = vperm.slane %v2910, 1
        %v2927 = vperm.slane %v2912, 0
        %v2928 = vperm.slane %v2912, 1
        %v2929 = vperm.slane %v2914, 0
        %v2930 = vperm.slane %v2914, 1
        %v2931 = vperm.slane %v2916, 0
        %v2932 = vperm.slane %v2916, 1
        %v2933 = vperm.slane %v2918, 0
        %v2934 = vperm.slane %v2918, 1
        %v2935 = vperm.slane %v2920, 0
        %v2936 = vperm.slane %v2920, 1
        %2937 = vrot.lane.b32.xlu0 %v2921, 24
        %v2938 = vpop.permute.xlu0 %2937
        %2939 = vrot.lane.b32.xlu0 %v2922, 24
        %v2940 = vpop.permute.xlu0 %2939
        %2941 = vrot.lane.b32.xlu0 %v2923, 24
        %v2942 = vpop.permute.xlu0 %2941
        %2943 = vrot.lane.b32.xlu0 %v2924, 24
        %v2944 = vpop.permute.xlu0 %2943
        %2945 = vrot.lane.b32.xlu0 %v2925, 24
        %v2946 = vpop.permute.xlu0 %2945
        %2947 = vrot.lane.b32.xlu0 %v2926, 24
        %v2948 = vpop.permute.xlu0 %2947
        %2949 = vrot.lane.b32.xlu0 %v2927, 24
        %v2950 = vpop.permute.xlu0 %2949
        %2951 = vrot.lane.b32.xlu0 %v2928, 24
        %v2952 = vpop.permute.xlu0 %2951
        %2953 = vrot.lane.b32.xlu0 %v2929, 24
        %v2954 = vpop.permute.xlu0 %2953
        %2955 = vrot.lane.b32.xlu0 %v2930, 24
        %v2956 = vpop.permute.xlu0 %2955
        %2957 = vrot.lane.b32.xlu0 %v2931, 24
        %v2958 = vpop.permute.xlu0 %2957
        %2959 = vrot.lane.b32.xlu0 %v2932, 24
        %v2960 = vpop.permute.xlu0 %2959
        %2961 = vrot.lane.b32.xlu0 %v2933, 24
        %v2962 = vpop.permute.xlu0 %2961
        %2963 = vrot.lane.b32.xlu0 %v2934, 24
        %v2964 = vpop.permute.xlu0 %2963
        %2965 = vrot.lane.b32.xlu0 %v2935, 24
        %v2966 = vpop.permute.xlu0 %2965
        %2967 = vrot.lane.b32.xlu0 %v2936, 24
        %v2968 = vpop.permute.xlu0 %2967
        %vm2969 = vcmask 195584
        %v2970 = vsel %vm2969, %v2938, %v2940
        %v2971 = vsel %vm2969, %v2942, %v2944
        %v2972 = vsel %vm2969, %v2946, %v2948
        %v2973 = vsel %vm2969, %v2950, %v2952
        %v2974 = vsel %vm2969, %v2954, %v2956
        %v2975 = vsel %vm2969, %v2958, %v2960
        %v2976 = vsel %vm2969, %v2962, %v2964
        %v2977 = vsel %vm2969, %v2966, %v2968
        %2986 = vst.msk [vmem:[%s205 + $0xa] sm:$0x1] %vm2363, %v2970
        %2987 = vst.msk [vmem:[%s205 + $0x2a] sm:$0x1] %vm2363, %v2971
        %2988 = vst.msk [vmem:[%s205 + $0x4a] sm:$0x1] %vm2363, %v2972
        %2989 = vst.msk [vmem:[%s205 + $0x6a] sm:$0x1] %vm2363, %v2973
        %2990 = vst.msk [vmem:[%s205 + $0x8a] sm:$0x1] %vm2363, %v2974
        %2991 = vst.msk [vmem:[%s205 + $0xaa] sm:$0x1] %vm2363, %v2975
        %2992 = vst.msk [vmem:[%s205 + $0xca] sm:$0x1] %vm2363, %v2976
        %2993 = vst.msk [vmem:[%s205 + $0xea] sm:$0x1] %vm2363, %v2977
        %v2994 = vld [vmem:[#allocation4 + $0x18] sm:$0xff]
        %v2996 = vrot.slane %v2994, 1
        %v2997 = vrot.slane %v2994, 2
        %v2998 = vrot.slane %v2994, 3
        %v2999 = vrot.slane %v2994, 4
        %v3000 = vrot.slane %v2994, 5
        %v3001 = vrot.slane %v2994, 6
        %v3002 = vrot.slane %v2994, 7
        %v3003 = vperm.slane %v2994, 0
        %v3004 = vperm.slane %v2996, 0
        %v3005 = vperm.slane %v2997, 0
        %v3006 = vperm.slane %v2998, 0
        %v3007 = vperm.slane %v2999, 0
        %v3008 = vperm.slane %v3000, 0
        %v3009 = vperm.slane %v3001, 0
        %v3010 = vperm.slane %v3002, 0
        %3011 = vrot.lane.b32.xlu0 %v3003, 116
        %v3012 = vpop.permute.xlu0 %3011
        %3013 = vrot.lane.b32.xlu0 %v3004, 116
        %v3014 = vpop.permute.xlu0 %3013
        %3015 = vrot.lane.b32.xlu0 %v3005, 116
        %v3016 = vpop.permute.xlu0 %3015
        %3017 = vrot.lane.b32.xlu0 %v3006, 116
        %v3018 = vpop.permute.xlu0 %3017
        %3019 = vrot.lane.b32.xlu0 %v3007, 116
        %v3020 = vpop.permute.xlu0 %3019
        %3021 = vrot.lane.b32.xlu0 %v3008, 116
        %v3022 = vpop.permute.xlu0 %3021
        %3023 = vrot.lane.b32.xlu0 %v3009, 116
        %v3024 = vpop.permute.xlu0 %3023
        %3025 = vrot.lane.b32.xlu0 %v3010, 116
        %v3026 = vpop.permute.xlu0 %3025
        %3035 = vst.msk [vmem:[%s205 + $0xb] sm:$0x1] %vm2363, %v3012
        %3036 = vst.msk [vmem:[%s205 + $0x2b] sm:$0x1] %vm2363, %v3014
        %3037 = vst.msk [vmem:[%s205 + $0x4b] sm:$0x1] %vm2363, %v3016
        %3038 = vst.msk [vmem:[%s205 + $0x6b] sm:$0x1] %vm2363, %v3018
        %3039 = vst.msk [vmem:[%s205 + $0x8b] sm:$0x1] %vm2363, %v3020
        %3040 = vst.msk [vmem:[%s205 + $0xab] sm:$0x1] %vm2363, %v3022
        %3041 = vst.msk [vmem:[%s205 + $0xcb] sm:$0x1] %vm2363, %v3024
        %3042 = vst.msk [vmem:[%s205 + $0xeb] sm:$0x1] %vm2363, %v3026
        %v3043 = vld [vmem:[#allocation4 + $0x18] sm:$0xff]
        %v3045 = vrot.slane %v3043, 1
        %v3046 = vrot.slane %v3043, 2
        %v3047 = vrot.slane %v3043, 3
        %v3048 = vrot.slane %v3043, 4
        %v3049 = vrot.slane %v3043, 5
        %v3050 = vrot.slane %v3043, 6
        %v3051 = vrot.slane %v3043, 7
        %v3052 = vperm.slane %v3043, 0
        %v3053 = vperm.slane %v3045, 0
        %v3054 = vperm.slane %v3046, 0
        %v3055 = vperm.slane %v3047, 0
        %v3056 = vperm.slane %v3048, 0
        %v3057 = vperm.slane %v3049, 0
        %v3058 = vperm.slane %v3050, 0
        %v3059 = vperm.slane %v3051, 0
        %3060 = vrot.lane.b32.xlu0 %v3052, 80
        %v3061 = vpop.permute.xlu0 %3060
        %3062 = vrot.lane.b32.xlu0 %v3053, 80
        %v3063 = vpop.permute.xlu0 %3062
        %3064 = vrot.lane.b32.xlu0 %v3054, 80
        %v3065 = vpop.permute.xlu0 %3064
        %3066 = vrot.lane.b32.xlu0 %v3055, 80
        %v3067 = vpop.permute.xlu0 %3066
        %3068 = vrot.lane.b32.xlu0 %v3056, 80
        %v3069 = vpop.permute.xlu0 %3068
        %3070 = vrot.lane.b32.xlu0 %v3057, 80
        %v3071 = vpop.permute.xlu0 %3070
        %3072 = vrot.lane.b32.xlu0 %v3058, 80
        %v3073 = vpop.permute.xlu0 %3072
        %3074 = vrot.lane.b32.xlu0 %v3059, 80
        %v3075 = vpop.permute.xlu0 %3074
        %3084 = vst.msk [vmem:[%s205 + $0xc] sm:$0x1] %vm2363, %v3061
        %3085 = vst.msk [vmem:[%s205 + $0x2c] sm:$0x1] %vm2363, %v3063
        %3086 = vst.msk [vmem:[%s205 + $0x4c] sm:$0x1] %vm2363, %v3065
        %3087 = vst.msk [vmem:[%s205 + $0x6c] sm:$0x1] %vm2363, %v3067
        %3088 = vst.msk [vmem:[%s205 + $0x8c] sm:$0x1] %vm2363, %v3069
        %3089 = vst.msk [vmem:[%s205 + $0xac] sm:$0x1] %vm2363, %v3071
        %3090 = vst.msk [vmem:[%s205 + $0xcc] sm:$0x1] %vm2363, %v3073
        %3091 = vst.msk [vmem:[%s205 + $0xec] sm:$0x1] %vm2363, %v3075
        %v3092 = vld [vmem:[#allocation4 + $0x18] sm:$0xff]
        %v3094 = vrot.slane %v3092, 1
        %v3095 = vrot.slane %v3092, 2
        %v3096 = vrot.slane %v3092, 3
        %v3097 = vrot.slane %v3092, 4
        %v3098 = vrot.slane %v3092, 5
        %v3099 = vrot.slane %v3092, 6
        %v3100 = vrot.slane %v3092, 7
        %v3101 = vperm.slane %v3092, 0
        %v3102 = vperm.slane %v3094, 0
        %v3103 = vperm.slane %v3095, 0
        %v3104 = vperm.slane %v3096, 0
        %v3105 = vperm.slane %v3097, 0
        %v3106 = vperm.slane %v3098, 0
        %v3107 = vperm.slane %v3099, 0
        %v3108 = vperm.slane %v3100, 0
        %3109 = vrot.lane.b32.xlu0 %v3101, 44
        %v3110 = vpop.permute.xlu0 %3109
        %3111 = vrot.lane.b32.xlu0 %v3102, 44
        %v3112 = vpop.permute.xlu0 %3111
        %3113 = vrot.lane.b32.xlu0 %v3103, 44
        %v3114 = vpop.permute.xlu0 %3113
        %3115 = vrot.lane.b32.xlu0 %v3104, 44
        %v3116 = vpop.permute.xlu0 %3115
        %3117 = vrot.lane.b32.xlu0 %v3105, 44
        %v3118 = vpop.permute.xlu0 %3117
        %3119 = vrot.lane.b32.xlu0 %v3106, 44
        %v3120 = vpop.permute.xlu0 %3119
        %3121 = vrot.lane.b32.xlu0 %v3107, 44
        %v3122 = vpop.permute.xlu0 %3121
        %3123 = vrot.lane.b32.xlu0 %v3108, 44
        %v3124 = vpop.permute.xlu0 %3123
        %3133 = vst.msk [vmem:[%s205 + $0xd] sm:$0x1] %vm2363, %v3110
        %3134 = vst.msk [vmem:[%s205 + $0x2d] sm:$0x1] %vm2363, %v3112
        %3135 = vst.msk [vmem:[%s205 + $0x4d] sm:$0x1] %vm2363, %v3114
        %3136 = vst.msk [vmem:[%s205 + $0x6d] sm:$0x1] %vm2363, %v3116
        %3137 = vst.msk [vmem:[%s205 + $0x8d] sm:$0x1] %vm2363, %v3118
        %3138 = vst.msk [vmem:[%s205 + $0xad] sm:$0x1] %vm2363, %v3120
        %3139 = vst.msk [vmem:[%s205 + $0xcd] sm:$0x1] %vm2363, %v3122
        %3140 = vst.msk [vmem:[%s205 + $0xed] sm:$0x1] %vm2363, %v3124
        %v3141 = vld [vmem:[#allocation4 + $0x18] sm:$0xff]
        %v3142 = vld [vmem:[#allocation4 + $0x20] sm:$0xff]
        %v3145 = vrot.slane %v3142, 7
        %v3146 = vsel %vm2475, %v3141, %v3145
        %v3147 = vsel %vm245, %v3141, %v3145
        %v3148 = vrot.slane %v3147, 1
        %v3149 = vsel %vm248, %v3141, %v3145
        %v3150 = vrot.slane %v3149, 2
        %v3151 = vsel %vm251, %v3141, %v3145
        %v3152 = vrot.slane %v3151, 3
        %v3153 = vsel %vm254, %v3141, %v3145
        %v3154 = vrot.slane %v3153, 4
        %v3155 = vsel %vm257, %v3141, %v3145
        %v3156 = vrot.slane %v3155, 5
        %v3157 = vsel %vm260, %v3141, %v3145
        %v3158 = vrot.slane %v3157, 6
        %v3159 = vsel %vm2489, %v3145, %v3141
        %v3160 = vrot.slane %v3159, 7
        %v3161 = vperm.slane %v3146, 0
        %v3162 = vperm.slane %v3146, 1
        %v3163 = vperm.slane %v3148, 0
        %v3164 = vperm.slane %v3148, 1
        %v3165 = vperm.slane %v3150, 0
        %v3166 = vperm.slane %v3150, 1
        %v3167 = vperm.slane %v3152, 0
        %v3168 = vperm.slane %v3152, 1
        %v3169 = vperm.slane %v3154, 0
        %v3170 = vperm.slane %v3154, 1
        %v3171 = vperm.slane %v3156, 0
        %v3172 = vperm.slane %v3156, 1
        %v3173 = vperm.slane %v3158, 0
        %v3174 = vperm.slane %v3158, 1
        %v3175 = vperm.slane %v3160, 0
        %v3176 = vperm.slane %v3160, 1
        %3177 = vrot.lane.b32.xlu0 %v3161, 8
        %v3178 = vpop.permute.xlu0 %3177
        %3179 = vrot.lane.b32.xlu0 %v3162, 8
        %v3180 = vpop.permute.xlu0 %3179
        %3181 = vrot.lane.b32.xlu0 %v3163, 8
        %v3182 = vpop.permute.xlu0 %3181
        %3183 = vrot.lane.b32.xlu0 %v3164, 8
        %v3184 = vpop.permute.xlu0 %3183
        %3185 = vrot.lane.b32.xlu0 %v3165, 8
        %v3186 = vpop.permute.xlu0 %3185
        %3187 = vrot.lane.b32.xlu0 %v3166, 8
        %v3188 = vpop.permute.xlu0 %3187
        %3189 = vrot.lane.b32.xlu0 %v3167, 8
        %v3190 = vpop.permute.xlu0 %3189
        %3191 = vrot.lane.b32.xlu0 %v3168, 8
        %v3192 = vpop.permute.xlu0 %3191
        %3193 = vrot.lane.b32.xlu0 %v3169, 8
        %v3194 = vpop.permute.xlu0 %3193
        %3195 = vrot.lane.b32.xlu0 %v3170, 8
        %v3196 = vpop.permute.xlu0 %3195
        %3197 = vrot.lane.b32.xlu0 %v3171, 8
        %v3198 = vpop.permute.xlu0 %3197
        %3199 = vrot.lane.b32.xlu0 %v3172, 8
        %v3200 = vpop.permute.xlu0 %3199
        %3201 = vrot.lane.b32.xlu0 %v3173, 8
        %v3202 = vpop.permute.xlu0 %3201
        %3203 = vrot.lane.b32.xlu0 %v3174, 8
        %v3204 = vpop.permute.xlu0 %3203
        %3205 = vrot.lane.b32.xlu0 %v3175, 8
        %v3206 = vpop.permute.xlu0 %3205
        %3207 = vrot.lane.b32.xlu0 %v3176, 8
        %v3208 = vpop.permute.xlu0 %3207
        %vm3209 = vcmask 64512
        %v3210 = vsel %vm3209, %v3178, %v3180
        %v3211 = vsel %vm3209, %v3182, %v3184
        %v3212 = vsel %vm3209, %v3186, %v3188
        %v3213 = vsel %vm3209, %v3190, %v3192
        %v3214 = vsel %vm3209, %v3194, %v3196
        %v3215 = vsel %vm3209, %v3198, %v3200
        %v3216 = vsel %vm3209, %v3202, %v3204
        %v3217 = vsel %vm3209, %v3206, %v3208
        %3226 = vst.msk [vmem:[%s205 + $0xe] sm:$0x1] %vm2363, %v3210
        %3227 = vst.msk [vmem:[%s205 + $0x2e] sm:$0x1] %vm2363, %v3211
        %3228 = vst.msk [vmem:[%s205 + $0x4e] sm:$0x1] %vm2363, %v3212
        %3229 = vst.msk [vmem:[%s205 + $0x6e] sm:$0x1] %vm2363, %v3213
        %3230 = vst.msk [vmem:[%s205 + $0x8e] sm:$0x1] %vm2363, %v3214
        %3231 = vst.msk [vmem:[%s205 + $0xae] sm:$0x1] %vm2363, %v3215
        %3232 = vst.msk [vmem:[%s205 + $0xce] sm:$0x1] %vm2363, %v3216
        %3233 = vst.msk [vmem:[%s205 + $0xee] sm:$0x1] %vm2363, %v3217
        %v3234 = vld [vmem:[#allocation4 + $0x20] sm:$0xff]
        %v3236 = vrot.slane %v3234, 1
        %v3237 = vrot.slane %v3234, 2
        %v3238 = vrot.slane %v3234, 3
        %v3239 = vrot.slane %v3234, 4
        %v3240 = vrot.slane %v3234, 5
        %v3241 = vrot.slane %v3234, 6
        %v3242 = vrot.slane %v3234, 7
        %v3243 = vperm.slane %v3234, 0
        %v3244 = vperm.slane %v3236, 0
        %v3245 = vperm.slane %v3237, 0
        %v3246 = vperm.slane %v3238, 0
        %v3247 = vperm.slane %v3239, 0
        %v3248 = vperm.slane %v3240, 0
        %v3249 = vperm.slane %v3241, 0
        %v3250 = vperm.slane %v3242, 0
        %3251 = vrot.lane.b32.xlu0 %v3243, 100
        %v3252 = vpop.permute.xlu0 %3251
        %3253 = vrot.lane.b32.xlu0 %v3244, 100
        %v3254 = vpop.permute.xlu0 %3253
        %3255 = vrot.lane.b32.xlu0 %v3245, 100
        %v3256 = vpop.permute.xlu0 %3255
        %3257 = vrot.lane.b32.xlu0 %v3246, 100
        %v3258 = vpop.permute.xlu0 %3257
        %3259 = vrot.lane.b32.xlu0 %v3247, 100
        %v3260 = vpop.permute.xlu0 %3259
        %3261 = vrot.lane.b32.xlu0 %v3248, 100
        %v3262 = vpop.permute.xlu0 %3261
        %3263 = vrot.lane.b32.xlu0 %v3249, 100
        %v3264 = vpop.permute.xlu0 %3263
        %3265 = vrot.lane.b32.xlu0 %v3250, 100
        %v3266 = vpop.permute.xlu0 %3265
        %3275 = vst.msk [vmem:[%s205 + $0xf] sm:$0x1] %vm2363, %v3252
        %3276 = vst.msk [vmem:[%s205 + $0x2f] sm:$0x1] %vm2363, %v3254
        %3277 = vst.msk [vmem:[%s205 + $0x4f] sm:$0x1] %vm2363, %v3256
        %3278 = vst.msk [vmem:[%s205 + $0x6f] sm:$0x1] %vm2363, %v3258
        %3279 = vst.msk [vmem:[%s205 + $0x8f] sm:$0x1] %vm2363, %v3260
        %3280 = vst.msk [vmem:[%s205 + $0xaf] sm:$0x1] %vm2363, %v3262
        %3281 = vst.msk [vmem:[%s205 + $0xcf] sm:$0x1] %vm2363, %v3264
        %3282 = vst.msk [vmem:[%s205 + $0xef] sm:$0x1] %vm2363, %v3266
        %v3283 = vld [vmem:[#allocation4 + $0x20] sm:$0xff]
        %v3285 = vrot.slane %v3283, 1
        %v3286 = vrot.slane %v3283, 2
        %v3287 = vrot.slane %v3283, 3
        %v3288 = vrot.slane %v3283, 4
        %v3289 = vrot.slane %v3283, 5
        %v3290 = vrot.slane %v3283, 6
        %v3291 = vrot.slane %v3283, 7
        %v3292 = vperm.slane %v3283, 0
        %v3293 = vperm.slane %v3285, 0
        %v3294 = vperm.slane %v3286, 0
        %v3295 = vperm.slane %v3287, 0
        %v3296 = vperm.slane %v3288, 0
        %v3297 = vperm.slane %v3289, 0
        %v3298 = vperm.slane %v3290, 0
        %v3299 = vperm.slane %v3291, 0
        %3300 = vrot.lane.b32.xlu0 %v3292, 64
        %v3301 = vpop.permute.xlu0 %3300
        %3302 = vrot.lane.b32.xlu0 %v3293, 64
        %v3303 = vpop.permute.xlu0 %3302
        %3304 = vrot.lane.b32.xlu0 %v3294, 64
        %v3305 = vpop.permute.xlu0 %3304
        %3306 = vrot.lane.b32.xlu0 %v3295, 64
        %v3307 = vpop.permute.xlu0 %3306
        %3308 = vrot.lane.b32.xlu0 %v3296, 64
        %v3309 = vpop.permute.xlu0 %3308
        %3310 = vrot.lane.b32.xlu0 %v3297, 64
        %v3311 = vpop.permute.xlu0 %3310
        %3312 = vrot.lane.b32.xlu0 %v3298, 64
        %v3313 = vpop.permute.xlu0 %3312
        %3314 = vrot.lane.b32.xlu0 %v3299, 64
        %v3315 = vpop.permute.xlu0 %3314
        %3324 = vst.msk [vmem:[%s205 + $0x10] sm:$0x1] %vm2363, %v3301
        %3325 = vst.msk [vmem:[%s205 + $0x30] sm:$0x1] %vm2363, %v3303
        %3326 = vst.msk [vmem:[%s205 + $0x50] sm:$0x1] %vm2363, %v3305
        %3327 = vst.msk [vmem:[%s205 + $0x70] sm:$0x1] %vm2363, %v3307
        %3328 = vst.msk [vmem:[%s205 + $0x90] sm:$0x1] %vm2363, %v3309
        %3329 = vst.msk [vmem:[%s205 + $0xb0] sm:$0x1] %vm2363, %v3311
        %3330 = vst.msk [vmem:[%s205 + $0xd0] sm:$0x1] %vm2363, %v3313
        %3331 = vst.msk [vmem:[%s205 + $0xf0] sm:$0x1] %vm2363, %v3315
        %v3332 = vld [vmem:[#allocation4 + $0x20] sm:$0xff]
        %v3333 = vld [vmem:[#allocation4 + $0x28] sm:$0xff]
        %v3336 = vrot.slane %v3333, 7
        %v3337 = vsel %vm2475, %v3332, %v3336
        %v3338 = vsel %vm245, %v3332, %v3336
        %v3339 = vrot.slane %v3338, 1
        %v3340 = vsel %vm248, %v3332, %v3336
        %v3341 = vrot.slane %v3340, 2
        %v3342 = vsel %vm251, %v3332, %v3336
        %v3343 = vrot.slane %v3342, 3
        %v3344 = vsel %vm254, %v3332, %v3336
        %v3345 = vrot.slane %v3344, 4
        %v3346 = vsel %vm257, %v3332, %v3336
        %v3347 = vrot.slane %v3346, 5
        %v3348 = vsel %vm260, %v3332, %v3336
        %v3349 = vrot.slane %v3348, 6
        %v3350 = vsel %vm2489, %v3336, %v3332
        %v3351 = vrot.slane %v3350, 7
        %v3352 = vperm.slane %v3337, 0
        %v3353 = vperm.slane %v3337, 1
        %v3354 = vperm.slane %v3339, 0
        %v3355 = vperm.slane %v3339, 1
        %v3356 = vperm.slane %v3341, 0
        %v3357 = vperm.slane %v3341, 1
        %v3358 = vperm.slane %v3343, 0
        %v3359 = vperm.slane %v3343, 1
        %v3360 = vperm.slane %v3345, 0
        %v3361 = vperm.slane %v3345, 1
        %v3362 = vperm.slane %v3347, 0
        %v3363 = vperm.slane %v3347, 1
        %v3364 = vperm.slane %v3349, 0
        %v3365 = vperm.slane %v3349, 1
        %v3366 = vperm.slane %v3351, 0
        %v3367 = vperm.slane %v3351, 1
        %3368 = vrot.lane.b32.xlu0 %v3352, 28
        %v3369 = vpop.permute.xlu0 %3368
        %3370 = vrot.lane.b32.xlu0 %v3353, 28
        %v3371 = vpop.permute.xlu0 %3370
        %3372 = vrot.lane.b32.xlu0 %v3354, 28
        %v3373 = vpop.permute.xlu0 %3372
        %3374 = vrot.lane.b32.xlu0 %v3355, 28
        %v3375 = vpop.permute.xlu0 %3374
        %3376 = vrot.lane.b32.xlu0 %v3356, 28
        %v3377 = vpop.permute.xlu0 %3376
        %3378 = vrot.lane.b32.xlu0 %v3357, 28
        %v3379 = vpop.permute.xlu0 %3378
        %3380 = vrot.lane.b32.xlu0 %v3358, 28
        %v3381 = vpop.permute.xlu0 %3380
        %3382 = vrot.lane.b32.xlu0 %v3359, 28
        %v3383 = vpop.permute.xlu0 %3382
        %3384 = vrot.lane.b32.xlu0 %v3360, 28
        %v3385 = vpop.permute.xlu0 %3384
        %3386 = vrot.lane.b32.xlu0 %v3361, 28
        %v3387 = vpop.permute.xlu0 %3386
        %3388 = vrot.lane.b32.xlu0 %v3362, 28
        %v3389 = vpop.permute.xlu0 %3388
        %3390 = vrot.lane.b32.xlu0 %v3363, 28
        %v3391 = vpop.permute.xlu0 %3390
        %3392 = vrot.lane.b32.xlu0 %v3364, 28
        %v3393 = vpop.permute.xlu0 %3392
        %3394 = vrot.lane.b32.xlu0 %v3365, 28
        %v3395 = vpop.permute.xlu0 %3394
        %3396 = vrot.lane.b32.xlu0 %v3366, 28
        %v3397 = vpop.permute.xlu0 %3396
        %3398 = vrot.lane.b32.xlu0 %v3367, 28
        %v3399 = vpop.permute.xlu0 %3398
        %v3400 = vsel %vm515, %v3369, %v3371
        %v3401 = vsel %vm515, %v3373, %v3375
        %v3402 = vsel %vm515, %v3377, %v3379
        %v3403 = vsel %vm515, %v3381, %v3383
        %v3404 = vsel %vm515, %v3385, %v3387
        %v3405 = vsel %vm515, %v3389, %v3391
        %v3406 = vsel %vm515, %v3393, %v3395
        %v3407 = vsel %vm515, %v3397, %v3399
        %3416 = vst.msk [vmem:[%s205 + $0x11] sm:$0x1] %vm2363, %v3400
        %3417 = vst.msk [vmem:[%s205 + $0x31] sm:$0x1] %vm2363, %v3401
        %3418 = vst.msk [vmem:[%s205 + $0x51] sm:$0x1] %vm2363, %v3402
        %3419 = vst.msk [vmem:[%s205 + $0x71] sm:$0x1] %vm2363, %v3403
        %3420 = vst.msk [vmem:[%s205 + $0x91] sm:$0x1] %vm2363, %v3404
        %3421 = vst.msk [vmem:[%s205 + $0xb1] sm:$0x1] %vm2363, %v3405
        %3422 = vst.msk [vmem:[%s205 + $0xd1] sm:$0x1] %vm2363, %v3406
        %3423 = vst.msk [vmem:[%s205 + $0xf1] sm:$0x1] %vm2363, %v3407
        %v3424 = vld [vmem:[#allocation4 + $0x28] sm:$0xff]
        %v3426 = vrot.slane %v3424, 1
        %v3427 = vrot.slane %v3424, 2
        %v3428 = vrot.slane %v3424, 3
        %v3429 = vrot.slane %v3424, 4
        %v3430 = vrot.slane %v3424, 5
        %v3431 = vrot.slane %v3424, 6
        %v3432 = vrot.slane %v3424, 7
        %v3433 = vperm.slane %v3424, 0
        %v3434 = vperm.slane %v3426, 0
        %v3435 = vperm.slane %v3427, 0
        %v3436 = vperm.slane %v3428, 0
        %v3437 = vperm.slane %v3429, 0
        %v3438 = vperm.slane %v3430, 0
        %v3439 = vperm.slane %v3431, 0
        %v3440 = vperm.slane %v3432, 0
        %3441 = vrot.lane.b32.xlu0 %v3433, 120
        %v3442 = vpop.permute.xlu0 %3441
        %3443 = vrot.lane.b32.xlu0 %v3434, 120
        %v3444 = vpop.permute.xlu0 %3443
        %3445 = vrot.lane.b32.xlu0 %v3435, 120
        %v3446 = vpop.permute.xlu0 %3445
        %3447 = vrot.lane.b32.xlu0 %v3436, 120
        %v3448 = vpop.permute.xlu0 %3447
        %3449 = vrot.lane.b32.xlu0 %v3437, 120
        %v3450 = vpop.permute.xlu0 %3449
        %3451 = vrot.lane.b32.xlu0 %v3438, 120
        %v3452 = vpop.permute.xlu0 %3451
        %3453 = vrot.lane.b32.xlu0 %v3439, 120
        %v3454 = vpop.permute.xlu0 %3453
        %3455 = vrot.lane.b32.xlu0 %v3440, 120
        %v3456 = vpop.permute.xlu0 %3455
        %3465 = vst.msk [vmem:[%s205 + $0x12] sm:$0x1] %vm2363, %v3442
        %3466 = vst.msk [vmem:[%s205 + $0x32] sm:$0x1] %vm2363, %v3444
        %3467 = vst.msk [vmem:[%s205 + $0x52] sm:$0x1] %vm2363, %v3446
        %3468 = vst.msk [vmem:[%s205 + $0x72] sm:$0x1] %vm2363, %v3448
        %3469 = vst.msk [vmem:[%s205 + $0x92] sm:$0x1] %vm2363, %v3450
        %3470 = vst.msk [vmem:[%s205 + $0xb2] sm:$0x1] %vm2363, %v3452
        %3471 = vst.msk [vmem:[%s205 + $0xd2] sm:$0x1] %vm2363, %v3454
        %3472 = vst.msk [vmem:[%s205 + $0xf2] sm:$0x1] %vm2363, %v3456
        %v3473 = vld [vmem:[#allocation4 + $0x28] sm:$0xff]
        %v3475 = vrot.slane %v3473, 1
        %v3476 = vrot.slane %v3473, 2
        %v3477 = vrot.slane %v3473, 3
        %v3478 = vrot.slane %v3473, 4
        %v3479 = vrot.slane %v3473, 5
        %v3480 = vrot.slane %v3473, 6
        %v3481 = vrot.slane %v3473, 7
        %v3482 = vperm.slane %v3473, 0
        %v3483 = vperm.slane %v3475, 0
        %v3484 = vperm.slane %v3476, 0
        %v3485 = vperm.slane %v3477, 0
        %v3486 = vperm.slane %v3478, 0
        %v3487 = vperm.slane %v3479, 0
        %v3488 = vperm.slane %v3480, 0
        %v3489 = vperm.slane %v3481, 0
        %3490 = vrot.lane.b32.xlu0 %v3482, 84
        %v3491 = vpop.permute.xlu0 %3490
        %3492 = vrot.lane.b32.xlu0 %v3483, 84
        %v3493 = vpop.permute.xlu0 %3492
        %3494 = vrot.lane.b32.xlu0 %v3484, 84
        %v3495 = vpop.permute.xlu0 %3494
        %3496 = vrot.lane.b32.xlu0 %v3485, 84
        %v3497 = vpop.permute.xlu0 %3496
        %3498 = vrot.lane.b32.xlu0 %v3486, 84
        %v3499 = vpop.permute.xlu0 %3498
        %3500 = vrot.lane.b32.xlu0 %v3487, 84
        %v3501 = vpop.permute.xlu0 %3500
        %3502 = vrot.lane.b32.xlu0 %v3488, 84
        %v3503 = vpop.permute.xlu0 %3502
        %3504 = vrot.lane.b32.xlu0 %v3489, 84
        %v3505 = vpop.permute.xlu0 %3504
        %3514 = vst.msk [vmem:[%s205 + $0x13] sm:$0x1] %vm2363, %v3491
        %3515 = vst.msk [vmem:[%s205 + $0x33] sm:$0x1] %vm2363, %v3493
        %3516 = vst.msk [vmem:[%s205 + $0x53] sm:$0x1] %vm2363, %v3495
        %3517 = vst.msk [vmem:[%s205 + $0x73] sm:$0x1] %vm2363, %v3497
        %3518 = vst.msk [vmem:[%s205 + $0x93] sm:$0x1] %vm2363, %v3499
        %3519 = vst.msk [vmem:[%s205 + $0xb3] sm:$0x1] %vm2363, %v3501
        %3520 = vst.msk [vmem:[%s205 + $0xd3] sm:$0x1] %vm2363, %v3503
        %3521 = vst.msk [vmem:[%s205 + $0xf3] sm:$0x1] %vm2363, %v3505
        %v3522 = vld [vmem:[#allocation4 + $0x28] sm:$0xff]
        %v3524 = vrot.slane %v3522, 1
        %v3525 = vrot.slane %v3522, 2
        %v3526 = vrot.slane %v3522, 3
        %v3527 = vrot.slane %v3522, 4
        %v3528 = vrot.slane %v3522, 5
        %v3529 = vrot.slane %v3522, 6
        %v3530 = vrot.slane %v3522, 7
        %v3531 = vperm.slane %v3522, 0
        %v3532 = vperm.slane %v3524, 0
        %v3533 = vperm.slane %v3525, 0
        %v3534 = vperm.slane %v3526, 0
        %v3535 = vperm.slane %v3527, 0
        %v3536 = vperm.slane %v3528, 0
        %v3537 = vperm.slane %v3529, 0
        %v3538 = vperm.slane %v3530, 0
        %3539 = vrot.lane.b32.xlu0 %v3531, 48
        %v3540 = vpop.permute.xlu0 %3539
        %3541 = vrot.lane.b32.xlu0 %v3532, 48
        %v3542 = vpop.permute.xlu0 %3541
        %3543 = vrot.lane.b32.xlu0 %v3533, 48
        %v3544 = vpop.permute.xlu0 %3543
        %3545 = vrot.lane.b32.xlu0 %v3534, 48
        %v3546 = vpop.permute.xlu0 %3545
        %3547 = vrot.lane.b32.xlu0 %v3535, 48
        %v3548 = vpop.permute.xlu0 %3547
        %3549 = vrot.lane.b32.xlu0 %v3536, 48
        %v3550 = vpop.permute.xlu0 %3549
        %3551 = vrot.lane.b32.xlu0 %v3537, 48
        %v3552 = vpop.permute.xlu0 %3551
        %3553 = vrot.lane.b32.xlu0 %v3538, 48
        %v3554 = vpop.permute.xlu0 %3553
        %3563 = vst.msk [vmem:[%s205 + $0x14] sm:$0x1] %vm2363, %v3540
        %3564 = vst.msk [vmem:[%s205 + $0x34] sm:$0x1] %vm2363, %v3542
        %3565 = vst.msk [vmem:[%s205 + $0x54] sm:$0x1] %vm2363, %v3544
        %3566 = vst.msk [vmem:[%s205 + $0x74] sm:$0x1] %vm2363, %v3546
        %3567 = vst.msk [vmem:[%s205 + $0x94] sm:$0x1] %vm2363, %v3548
        %3568 = vst.msk [vmem:[%s205 + $0xb4] sm:$0x1] %vm2363, %v3550
        %3569 = vst.msk [vmem:[%s205 + $0xd4] sm:$0x1] %vm2363, %v3552
        %3570 = vst.msk [vmem:[%s205 + $0xf4] sm:$0x1] %vm2363, %v3554
        %v3571 = vld [vmem:[#allocation4 + $0x28] sm:$0xff]
        %v3572 = vld [vmem:[#allocation4 + $0x30] sm:$0xff]
        %v3575 = vrot.slane %v3572, 7
        %v3576 = vsel %vm2475, %v3571, %v3575
        %v3577 = vsel %vm245, %v3571, %v3575
        %v3578 = vrot.slane %v3577, 1
        %v3579 = vsel %vm248, %v3571, %v3575
        %v3580 = vrot.slane %v3579, 2
        %v3581 = vsel %vm251, %v3571, %v3575
        %v3582 = vrot.slane %v3581, 3
        %v3583 = vsel %vm254, %v3571, %v3575
        %v3584 = vrot.slane %v3583, 4
        %v3585 = vsel %vm257, %v3571, %v3575
        %v3586 = vrot.slane %v3585, 5
        %v3587 = vsel %vm260, %v3571, %v3575
        %v3588 = vrot.slane %v3587, 6
        %v3589 = vsel %vm2489, %v3575, %v3571
        %v3590 = vrot.slane %v3589, 7
        %v3591 = vperm.slane %v3576, 0
        %v3592 = vperm.slane %v3576, 1
        %v3593 = vperm.slane %v3578, 0
        %v3594 = vperm.slane %v3578, 1
        %v3595 = vperm.slane %v3580, 0
        %v3596 = vperm.slane %v3580, 1
        %v3597 = vperm.slane %v3582, 0
        %v3598 = vperm.slane %v3582, 1
        %v3599 = vperm.slane %v3584, 0
        %v3600 = vperm.slane %v3584, 1
        %v3601 = vperm.slane %v3586, 0
        %v3602 = vperm.slane %v3586, 1
        %v3603 = vperm.slane %v3588, 0
        %v3604 = vperm.slane %v3588, 1
        %v3605 = vperm.slane %v3590, 0
        %v3606 = vperm.slane %v3590, 1
        %3607 = vrot.lane.b32.xlu0 %v3591, 12
        %v3608 = vpop.permute.xlu0 %3607
        %3609 = vrot.lane.b32.xlu0 %v3592, 12
        %v3610 = vpop.permute.xlu0 %3609
        %3611 = vrot.lane.b32.xlu0 %v3593, 12
        %v3612 = vpop.permute.xlu0 %3611
        %3613 = vrot.lane.b32.xlu0 %v3594, 12
        %v3614 = vpop.permute.xlu0 %3613
        %3615 = vrot.lane.b32.xlu0 %v3595, 12
        %v3616 = vpop.permute.xlu0 %3615
        %3617 = vrot.lane.b32.xlu0 %v3596, 12
        %v3618 = vpop.permute.xlu0 %3617
        %3619 = vrot.lane.b32.xlu0 %v3597, 12
        %v3620 = vpop.permute.xlu0 %3619
        %3621 = vrot.lane.b32.xlu0 %v3598, 12
        %v3622 = vpop.permute.xlu0 %3621
        %3623 = vrot.lane.b32.xlu0 %v3599, 12
        %v3624 = vpop.permute.xlu0 %3623
        %3625 = vrot.lane.b32.xlu0 %v3600, 12
        %v3626 = vpop.permute.xlu0 %3625
        %3627 = vrot.lane.b32.xlu0 %v3601, 12
        %v3628 = vpop.permute.xlu0 %3627
        %3629 = vrot.lane.b32.xlu0 %v3602, 12
        %v3630 = vpop.permute.xlu0 %3629
        %3631 = vrot.lane.b32.xlu0 %v3603, 12
        %v3632 = vpop.permute.xlu0 %3631
        %3633 = vrot.lane.b32.xlu0 %v3604, 12
        %v3634 = vpop.permute.xlu0 %3633
        %3635 = vrot.lane.b32.xlu0 %v3605, 12
        %v3636 = vpop.permute.xlu0 %3635
        %3637 = vrot.lane.b32.xlu0 %v3606, 12
        %v3638 = vpop.permute.xlu0 %3637
        %v3639 = vsel %vm443, %v3608, %v3610
        %v3640 = vsel %vm443, %v3612, %v3614
        %v3641 = vsel %vm443, %v3616, %v3618
        %v3642 = vsel %vm443, %v3620, %v3622
        %v3643 = vsel %vm443, %v3624, %v3626
        %v3644 = vsel %vm443, %v3628, %v3630
        %v3645 = vsel %vm443, %v3632, %v3634
        %v3646 = vsel %vm443, %v3636, %v3638
        %3655 = vst.msk [vmem:[%s205 + $0x15] sm:$0x1] %vm2363, %v3639
        %3656 = vst.msk [vmem:[%s205 + $0x35] sm:$0x1] %vm2363, %v3640
        %3657 = vst.msk [vmem:[%s205 + $0x55] sm:$0x1] %vm2363, %v3641
        %3658 = vst.msk [vmem:[%s205 + $0x75] sm:$0x1] %vm2363, %v3642
        %3659 = vst.msk [vmem:[%s205 + $0x95] sm:$0x1] %vm2363, %v3643
        %3660 = vst.msk [vmem:[%s205 + $0xb5] sm:$0x1] %vm2363, %v3644
        %3661 = vst.msk [vmem:[%s205 + $0xd5] sm:$0x1] %vm2363, %v3645
        %3662 = vst.msk [vmem:[%s205 + $0xf5] sm:$0x1] %vm2363, %v3646
        %v3663 = vld [vmem:[#allocation4 + $0x30] sm:$0xff]
        %v3665 = vrot.slane %v3663, 1
        %v3666 = vrot.slane %v3663, 2
        %v3667 = vrot.slane %v3663, 3
        %v3668 = vrot.slane %v3663, 4
        %v3669 = vrot.slane %v3663, 5
        %v3670 = vrot.slane %v3663, 6
        %v3671 = vrot.slane %v3663, 7
        %v3672 = vperm.slane %v3663, 0
        %v3673 = vperm.slane %v3665, 0
        %v3674 = vperm.slane %v3666, 0
        %v3675 = vperm.slane %v3667, 0
        %v3676 = vperm.slane %v3668, 0
        %v3677 = vperm.slane %v3669, 0
        %v3678 = vperm.slane %v3670, 0
        %v3679 = vperm.slane %v3671, 0
        %3680 = vrot.lane.b32.xlu0 %v3672, 104
        %v3681 = vpop.permute.xlu0 %3680
        %3682 = vrot.lane.b32.xlu0 %v3673, 104
        %v3683 = vpop.permute.xlu0 %3682
        %3684 = vrot.lane.b32.xlu0 %v3674, 104
        %v3685 = vpop.permute.xlu0 %3684
        %3686 = vrot.lane.b32.xlu0 %v3675, 104
        %v3687 = vpop.permute.xlu0 %3686
        %3688 = vrot.lane.b32.xlu0 %v3676, 104
        %v3689 = vpop.permute.xlu0 %3688
        %3690 = vrot.lane.b32.xlu0 %v3677, 104
        %v3691 = vpop.permute.xlu0 %3690
        %3692 = vrot.lane.b32.xlu0 %v3678, 104
        %v3693 = vpop.permute.xlu0 %3692
        %3694 = vrot.lane.b32.xlu0 %v3679, 104
        %v3695 = vpop.permute.xlu0 %3694
        %3704 = vst.msk [vmem:[%s205 + $0x16] sm:$0x1] %vm2363, %v3681
        %3705 = vst.msk [vmem:[%s205 + $0x36] sm:$0x1] %vm2363, %v3683
        %3706 = vst.msk [vmem:[%s205 + $0x56] sm:$0x1] %vm2363, %v3685
        %3707 = vst.msk [vmem:[%s205 + $0x76] sm:$0x1] %vm2363, %v3687
        %3708 = vst.msk [vmem:[%s205 + $0x96] sm:$0x1] %vm2363, %v3689
        %3709 = vst.msk [vmem:[%s205 + $0xb6] sm:$0x1] %vm2363, %v3691
        %3710 = vst.msk [vmem:[%s205 + $0xd6] sm:$0x1] %vm2363, %v3693
        %3711 = vst.msk [vmem:[%s205 + $0xf6] sm:$0x1] %vm2363, %v3695
        %v3712 = vld [vmem:[#allocation4 + $0x30] sm:$0xff]
        %v3714 = vrot.slane %v3712, 1
        %v3715 = vrot.slane %v3712, 2
        %v3716 = vrot.slane %v3712, 3
        %v3717 = vrot.slane %v3712, 4
        %v3718 = vrot.slane %v3712, 5
        %v3719 = vrot.slane %v3712, 6
        %v3720 = vrot.slane %v3712, 7
        %v3721 = vperm.slane %v3712, 0
        %v3722 = vperm.slane %v3714, 0
        %v3723 = vperm.slane %v3715, 0
        %v3724 = vperm.slane %v3716, 0
        %v3725 = vperm.slane %v3717, 0
        %v3726 = vperm.slane %v3718, 0
        %v3727 = vperm.slane %v3719, 0
        %v3728 = vperm.slane %v3720, 0
        %3729 = vrot.lane.b32.xlu0 %v3721, 68
        %v3730 = vpop.permute.xlu0 %3729
        %3731 = vrot.lane.b32.xlu0 %v3722, 68
        %v3732 = vpop.permute.xlu0 %3731
        %3733 = vrot.lane.b32.xlu0 %v3723, 68
        %v3734 = vpop.permute.xlu0 %3733
        %3735 = vrot.lane.b32.xlu0 %v3724, 68
        %v3736 = vpop.permute.xlu0 %3735
        %3737 = vrot.lane.b32.xlu0 %v3725, 68
        %v3738 = vpop.permute.xlu0 %3737
        %3739 = vrot.lane.b32.xlu0 %v3726, 68
        %v3740 = vpop.permute.xlu0 %3739
        %3741 = vrot.lane.b32.xlu0 %v3727, 68
        %v3742 = vpop.permute.xlu0 %3741
        %3743 = vrot.lane.b32.xlu0 %v3728, 68
        %v3744 = vpop.permute.xlu0 %3743
        %3753 = vst.msk [vmem:[%s205 + $0x17] sm:$0x1] %vm2363, %v3730
        %3754 = vst.msk [vmem:[%s205 + $0x37] sm:$0x1] %vm2363, %v3732
        %3755 = vst.msk [vmem:[%s205 + $0x57] sm:$0x1] %vm2363, %v3734
        %3756 = vst.msk [vmem:[%s205 + $0x77] sm:$0x1] %vm2363, %v3736
        %3757 = vst.msk [vmem:[%s205 + $0x97] sm:$0x1] %vm2363, %v3738
        %3758 = vst.msk [vmem:[%s205 + $0xb7] sm:$0x1] %vm2363, %v3740
        %3759 = vst.msk [vmem:[%s205 + $0xd7] sm:$0x1] %vm2363, %v3742
        %3760 = vst.msk [vmem:[%s205 + $0xf7] sm:$0x1] %vm2363, %v3744
        %v3761 = vld [vmem:[#allocation4 + $0x30] sm:$0xff]
        %v3763 = vrot.slane %v3761, 1
        %v3764 = vrot.slane %v3761, 2
        %v3765 = vrot.slane %v3761, 3
        %v3766 = vrot.slane %v3761, 4
        %v3767 = vrot.slane %v3761, 5
        %v3768 = vrot.slane %v3761, 6
        %v3769 = vrot.slane %v3761, 7
        %v3770 = vperm.slane %v3761, 0
        %v3771 = vperm.slane %v3763, 0
        %v3772 = vperm.slane %v3764, 0
        %v3773 = vperm.slane %v3765, 0
        %v3774 = vperm.slane %v3766, 0
        %v3775 = vperm.slane %v3767, 0
        %v3776 = vperm.slane %v3768, 0
        %v3777 = vperm.slane %v3769, 0
        %3778 = vrot.lane.b32.xlu0 %v3770, 32
        %v3779 = vpop.permute.xlu0 %3778
        %3780 = vrot.lane.b32.xlu0 %v3771, 32
        %v3781 = vpop.permute.xlu0 %3780
        %3782 = vrot.lane.b32.xlu0 %v3772, 32
        %v3783 = vpop.permute.xlu0 %3782
        %3784 = vrot.lane.b32.xlu0 %v3773, 32
        %v3785 = vpop.permute.xlu0 %3784
        %3786 = vrot.lane.b32.xlu0 %v3774, 32
        %v3787 = vpop.permute.xlu0 %3786
        %3788 = vrot.lane.b32.xlu0 %v3775, 32
        %v3789 = vpop.permute.xlu0 %3788
        %3790 = vrot.lane.b32.xlu0 %v3776, 32
        %v3791 = vpop.permute.xlu0 %3790
        %3792 = vrot.lane.b32.xlu0 %v3777, 32
        %v3793 = vpop.permute.xlu0 %3792
        %3802 = vst.msk [vmem:[%s205 + $0x18] sm:$0x1] %vm2363, %v3779
        %3803 = vst.msk [vmem:[%s205 + $0x38] sm:$0x1] %vm2363, %v3781
        %3804 = vst.msk [vmem:[%s205 + $0x58] sm:$0x1] %vm2363, %v3783
        %3805 = vst.msk [vmem:[%s205 + $0x78] sm:$0x1] %vm2363, %v3785
        %3806 = vst.msk [vmem:[%s205 + $0x98] sm:$0x1] %vm2363, %v3787
        %3807 = vst.msk [vmem:[%s205 + $0xb8] sm:$0x1] %vm2363, %v3789
        %3808 = vst.msk [vmem:[%s205 + $0xd8] sm:$0x1] %vm2363, %v3791
        %3809 = vst.msk [vmem:[%s205 + $0xf8] sm:$0x1] %vm2363, %v3793
        %v3810 = vld [vmem:[#allocation4 + $0x38] sm:$0xff]
        %v3812 = vrot.slane %v3810, 1
        %v3813 = vrot.slane %v3810, 2
        %v3814 = vrot.slane %v3810, 3
        %v3815 = vrot.slane %v3810, 4
        %v3816 = vrot.slane %v3810, 5
        %v3817 = vrot.slane %v3810, 6
        %v3818 = vrot.slane %v3810, 7
        %v3819 = vperm.slane %v3810, 0
        %v3820 = vperm.slane %v3812, 0
        %v3821 = vperm.slane %v3813, 0
        %v3822 = vperm.slane %v3814, 0
        %v3823 = vperm.slane %v3815, 0
        %v3824 = vperm.slane %v3816, 0
        %v3825 = vperm.slane %v3817, 0
        %v3826 = vperm.slane %v3818, 0
        %3827 = vrot.lane.b32.xlu0 %v3819, 124
        %v3828 = vpop.permute.xlu0 %3827
        %3829 = vrot.lane.b32.xlu0 %v3820, 124
        %v3830 = vpop.permute.xlu0 %3829
        %3831 = vrot.lane.b32.xlu0 %v3821, 124
        %v3832 = vpop.permute.xlu0 %3831
        %3833 = vrot.lane.b32.xlu0 %v3822, 124
        %v3834 = vpop.permute.xlu0 %3833
        %3835 = vrot.lane.b32.xlu0 %v3823, 124
        %v3836 = vpop.permute.xlu0 %3835
        %3837 = vrot.lane.b32.xlu0 %v3824, 124
        %v3838 = vpop.permute.xlu0 %3837
        %3839 = vrot.lane.b32.xlu0 %v3825, 124
        %v3840 = vpop.permute.xlu0 %3839
        %3841 = vrot.lane.b32.xlu0 %v3826, 124
        %v3842 = vpop.permute.xlu0 %3841
        %3851 = vst.msk [vmem:[%s205 + $0x19] sm:$0x1] %vm2363, %v3828
        %3852 = vst.msk [vmem:[%s205 + $0x39] sm:$0x1] %vm2363, %v3830
        %3853 = vst.msk [vmem:[%s205 + $0x59] sm:$0x1] %vm2363, %v3832
        %3854 = vst.msk [vmem:[%s205 + $0x79] sm:$0x1] %vm2363, %v3834
        %3855 = vst.msk [vmem:[%s205 + $0x99] sm:$0x1] %vm2363, %v3836
        %3856 = vst.msk [vmem:[%s205 + $0xb9] sm:$0x1] %vm2363, %v3838
        %3857 = vst.msk [vmem:[%s205 + $0xd9] sm:$0x1] %vm2363, %v3840
        %3858 = vst.msk [vmem:[%s205 + $0xf9] sm:$0x1] %vm2363, %v3842
        %v3859 = vld [vmem:[#allocation4 + $0x38] sm:$0xff]
        %v3861 = vrot.slane %v3859, 1
        %v3862 = vrot.slane %v3859, 2
        %v3863 = vrot.slane %v3859, 3
        %v3864 = vrot.slane %v3859, 4
        %v3865 = vrot.slane %v3859, 5
        %v3866 = vrot.slane %v3859, 6
        %v3867 = vrot.slane %v3859, 7
        %v3868 = vperm.slane %v3859, 0
        %v3869 = vperm.slane %v3861, 0
        %v3870 = vperm.slane %v3862, 0
        %v3871 = vperm.slane %v3863, 0
        %v3872 = vperm.slane %v3864, 0
        %v3873 = vperm.slane %v3865, 0
        %v3874 = vperm.slane %v3866, 0
        %v3875 = vperm.slane %v3867, 0
        %3876 = vrot.lane.b32.xlu0 %v3868, 88
        %v3877 = vpop.permute.xlu0 %3876
        %3878 = vrot.lane.b32.xlu0 %v3869, 88
        %v3879 = vpop.permute.xlu0 %3878
        %3880 = vrot.lane.b32.xlu0 %v3870, 88
        %v3881 = vpop.permute.xlu0 %3880
        %3882 = vrot.lane.b32.xlu0 %v3871, 88
        %v3883 = vpop.permute.xlu0 %3882
        %3884 = vrot.lane.b32.xlu0 %v3872, 88
        %v3885 = vpop.permute.xlu0 %3884
        %3886 = vrot.lane.b32.xlu0 %v3873, 88
        %v3887 = vpop.permute.xlu0 %3886
        %3888 = vrot.lane.b32.xlu0 %v3874, 88
        %v3889 = vpop.permute.xlu0 %3888
        %3890 = vrot.lane.b32.xlu0 %v3875, 88
        %v3891 = vpop.permute.xlu0 %3890
        %3900 = vst.msk [vmem:[%s205 + $0x1a] sm:$0x1] %vm2363, %v3877
        %3901 = vst.msk [vmem:[%s205 + $0x3a] sm:$0x1] %vm2363, %v3879
        %3902 = vst.msk [vmem:[%s205 + $0x5a] sm:$0x1] %vm2363, %v3881
        %3903 = vst.msk [vmem:[%s205 + $0x7a] sm:$0x1] %vm2363, %v3883
        %3904 = vst.msk [vmem:[%s205 + $0x9a] sm:$0x1] %vm2363, %v3885
        %3905 = vst.msk [vmem:[%s205 + $0xba] sm:$0x1] %vm2363, %v3887
        %3906 = vst.msk [vmem:[%s205 + $0xda] sm:$0x1] %vm2363, %v3889
        %3907 = vst.msk [vmem:[%s205 + $0xfa] sm:$0x1] %vm2363, %v3891
        %v3908 = vld [vmem:[#allocation4 + $0x38] sm:$0xff]
        %v3910 = vrot.slane %v3908, 1
        %v3911 = vrot.slane %v3908, 2
        %v3912 = vrot.slane %v3908, 3
        %v3913 = vrot.slane %v3908, 4
        %v3914 = vrot.slane %v3908, 5
        %v3915 = vrot.slane %v3908, 6
        %v3916 = vrot.slane %v3908, 7
        %v3917 = vperm.slane %v3908, 0
        %v3918 = vperm.slane %v3910, 0
        %v3919 = vperm.slane %v3911, 0
        %v3920 = vperm.slane %v3912, 0
        %v3921 = vperm.slane %v3913, 0
        %v3922 = vperm.slane %v3914, 0
        %v3923 = vperm.slane %v3915, 0
        %v3924 = vperm.slane %v3916, 0
        %3925 = vrot.lane.b32.xlu0 %v3917, 52
        %v3926 = vpop.permute.xlu0 %3925
        %3927 = vrot.lane.b32.xlu0 %v3918, 52
        %v3928 = vpop.permute.xlu0 %3927
        %3929 = vrot.lane.b32.xlu0 %v3919, 52
        %v3930 = vpop.permute.xlu0 %3929
        %3931 = vrot.lane.b32.xlu0 %v3920, 52
        %v3932 = vpop.permute.xlu0 %3931
        %3933 = vrot.lane.b32.xlu0 %v3921, 52
        %v3934 = vpop.permute.xlu0 %3933
        %3935 = vrot.lane.b32.xlu0 %v3922, 52
        %v3936 = vpop.permute.xlu0 %3935
        %3937 = vrot.lane.b32.xlu0 %v3923, 52
        %v3938 = vpop.permute.xlu0 %3937
        %3939 = vrot.lane.b32.xlu0 %v3924, 52
        %v3940 = vpop.permute.xlu0 %3939
        %3949 = vst.msk [vmem:[%s205 + $0x1b] sm:$0x1] %vm2363, %v3926
        %3950 = vst.msk [vmem:[%s205 + $0x3b] sm:$0x1] %vm2363, %v3928
        %3951 = vst.msk [vmem:[%s205 + $0x5b] sm:$0x1] %vm2363, %v3930
        %3952 = vst.msk [vmem:[%s205 + $0x7b] sm:$0x1] %vm2363, %v3932
        %3953 = vst.msk [vmem:[%s205 + $0x9b] sm:$0x1] %vm2363, %v3934
        %3954 = vst.msk [vmem:[%s205 + $0xbb] sm:$0x1] %vm2363, %v3936
        %3955 = vst.msk [vmem:[%s205 + $0xdb] sm:$0x1] %vm2363, %v3938
        %3956 = vst.msk [vmem:[%s205 + $0xfb] sm:$0x1] %vm2363, %v3940
        %v3957 = vld [vmem:[#allocation4 + $0x38] sm:$0xff]
        %v3958 = vld [vmem:[#allocation4 + $0x40] sm:$0xff]
        %v3961 = vrot.slane %v3958, 7
        %v3962 = vsel %vm2475, %v3957, %v3961
        %v3963 = vsel %vm245, %v3957, %v3961
        %v3964 = vrot.slane %v3963, 1
        %v3965 = vsel %vm248, %v3957, %v3961
        %v3966 = vrot.slane %v3965, 2
        %v3967 = vsel %vm251, %v3957, %v3961
        %v3968 = vrot.slane %v3967, 3
        %v3969 = vsel %vm254, %v3957, %v3961
        %v3970 = vrot.slane %v3969, 4
        %v3971 = vsel %vm257, %v3957, %v3961
        %v3972 = vrot.slane %v3971, 5
        %v3973 = vsel %vm260, %v3957, %v3961
        %v3974 = vrot.slane %v3973, 6
        %v3975 = vsel %vm2489, %v3961, %v3957
        %v3976 = vrot.slane %v3975, 7
        %v3977 = vperm.slane %v3962, 0
        %v3978 = vperm.slane %v3962, 1
        %v3979 = vperm.slane %v3964, 0
        %v3980 = vperm.slane %v3964, 1
        %v3981 = vperm.slane %v3966, 0
        %v3982 = vperm.slane %v3966, 1
        %v3983 = vperm.slane %v3968, 0
        %v3984 = vperm.slane %v3968, 1
        %v3985 = vperm.slane %v3970, 0
        %v3986 = vperm.slane %v3970, 1
        %v3987 = vperm.slane %v3972, 0
        %v3988 = vperm.slane %v3972, 1
        %v3989 = vperm.slane %v3974, 0
        %v3990 = vperm.slane %v3974, 1
        %v3991 = vperm.slane %v3976, 0
        %v3992 = vperm.slane %v3976, 1
        %3993 = vrot.lane.b32.xlu0 %v3977, 16
        %v3994 = vpop.permute.xlu0 %3993
        %3995 = vrot.lane.b32.xlu0 %v3978, 16
        %v3996 = vpop.permute.xlu0 %3995
        %3997 = vrot.lane.b32.xlu0 %v3979, 16
        %v3998 = vpop.permute.xlu0 %3997
        %3999 = vrot.lane.b32.xlu0 %v3980, 16
        %v4000 = vpop.permute.xlu0 %3999
        %4001 = vrot.lane.b32.xlu0 %v3981, 16
        %v4002 = vpop.permute.xlu0 %4001
        %4003 = vrot.lane.b32.xlu0 %v3982, 16
        %v4004 = vpop.permute.xlu0 %4003
        %4005 = vrot.lane.b32.xlu0 %v3983, 16
        %v4006 = vpop.permute.xlu0 %4005
        %4007 = vrot.lane.b32.xlu0 %v3984, 16
        %v4008 = vpop.permute.xlu0 %4007
        %4009 = vrot.lane.b32.xlu0 %v3985, 16
        %v4010 = vpop.permute.xlu0 %4009
        %4011 = vrot.lane.b32.xlu0 %v3986, 16
        %v4012 = vpop.permute.xlu0 %4011
        %4013 = vrot.lane.b32.xlu0 %v3987, 16
        %v4014 = vpop.permute.xlu0 %4013
        %4015 = vrot.lane.b32.xlu0 %v3988, 16
        %v4016 = vpop.permute.xlu0 %4015
        %4017 = vrot.lane.b32.xlu0 %v3989, 16
        %v4018 = vpop.permute.xlu0 %4017
        %4019 = vrot.lane.b32.xlu0 %v3990, 16
        %v4020 = vpop.permute.xlu0 %4019
        %4021 = vrot.lane.b32.xlu0 %v3991, 16
        %v4022 = vpop.permute.xlu0 %4021
        %4023 = vrot.lane.b32.xlu0 %v3992, 16
        %v4024 = vpop.permute.xlu0 %4023
        %v4025 = vsel %vm226, %v3994, %v3996
        %v4026 = vsel %vm226, %v3998, %v4000
        %v4027 = vsel %vm226, %v4002, %v4004
        %v4028 = vsel %vm226, %v4006, %v4008
        %v4029 = vsel %vm226, %v4010, %v4012
        %v4030 = vsel %vm226, %v4014, %v4016
        %v4031 = vsel %vm226, %v4018, %v4020
        %v4032 = vsel %vm226, %v4022, %v4024
        %4041 = vst.msk [vmem:[%s205 + $0x1c] sm:$0x1] %vm2363, %v4025
        %4042 = vst.msk [vmem:[%s205 + $0x3c] sm:$0x1] %vm2363, %v4026
        %4043 = vst.msk [vmem:[%s205 + $0x5c] sm:$0x1] %vm2363, %v4027
        %4044 = vst.msk [vmem:[%s205 + $0x7c] sm:$0x1] %vm2363, %v4028
        %4045 = vst.msk [vmem:[%s205 + $0x9c] sm:$0x1] %vm2363, %v4029
        %4046 = vst.msk [vmem:[%s205 + $0xbc] sm:$0x1] %vm2363, %v4030
        %4047 = vst.msk [vmem:[%s205 + $0xdc] sm:$0x1] %vm2363, %v4031
        %4048 = vst.msk [vmem:[%s205 + $0xfc] sm:$0x1] %vm2363, %v4032
        %v4049 = vld [vmem:[#allocation4 + $0x40] sm:$0xff]
        %v4051 = vrot.slane %v4049, 1
        %v4052 = vrot.slane %v4049, 2
        %v4053 = vrot.slane %v4049, 3
        %v4054 = vrot.slane %v4049, 4
        %v4055 = vrot.slane %v4049, 5
        %v4056 = vrot.slane %v4049, 6
        %v4057 = vrot.slane %v4049, 7
        %v4058 = vperm.slane %v4049, 0
        %v4059 = vperm.slane %v4051, 0
        %v4060 = vperm.slane %v4052, 0
        %v4061 = vperm.slane %v4053, 0
        %v4062 = vperm.slane %v4054, 0
        %v4063 = vperm.slane %v4055, 0
        %v4064 = vperm.slane %v4056, 0
        %v4065 = vperm.slane %v4057, 0
        %4066 = vrot.lane.b32.xlu0 %v4058, 108
        %v4067 = vpop.permute.xlu0 %4066
        %4068 = vrot.lane.b32.xlu0 %v4059, 108
        %v4069 = vpop.permute.xlu0 %4068
        %4070 = vrot.lane.b32.xlu0 %v4060, 108
        %v4071 = vpop.permute.xlu0 %4070
        %4072 = vrot.lane.b32.xlu0 %v4061, 108
        %v4073 = vpop.permute.xlu0 %4072
        %4074 = vrot.lane.b32.xlu0 %v4062, 108
        %v4075 = vpop.permute.xlu0 %4074
        %4076 = vrot.lane.b32.xlu0 %v4063, 108
        %v4077 = vpop.permute.xlu0 %4076
        %4078 = vrot.lane.b32.xlu0 %v4064, 108
        %v4079 = vpop.permute.xlu0 %4078
        %4080 = vrot.lane.b32.xlu0 %v4065, 108
        %v4081 = vpop.permute.xlu0 %4080
        %4090 = vst.msk [vmem:[%s205 + $0x1d] sm:$0x1] %vm2363, %v4067
        %4091 = vst.msk [vmem:[%s205 + $0x3d] sm:$0x1] %vm2363, %v4069
        %4092 = vst.msk [vmem:[%s205 + $0x5d] sm:$0x1] %vm2363, %v4071
        %4093 = vst.msk [vmem:[%s205 + $0x7d] sm:$0x1] %vm2363, %v4073
        %4094 = vst.msk [vmem:[%s205 + $0x9d] sm:$0x1] %vm2363, %v4075
        %4095 = vst.msk [vmem:[%s205 + $0xbd] sm:$0x1] %vm2363, %v4077
        %4096 = vst.msk [vmem:[%s205 + $0xdd] sm:$0x1] %vm2363, %v4079
        %4097 = vst.msk [vmem:[%s205 + $0xfd] sm:$0x1] %vm2363, %v4081
        %v4098 = vld [vmem:[#allocation4 + $0x40] sm:$0xff]
        %v4100 = vrot.slane %v4098, 1
        %v4101 = vrot.slane %v4098, 2
        %v4102 = vrot.slane %v4098, 3
        %v4103 = vrot.slane %v4098, 4
        %v4104 = vrot.slane %v4098, 5
        %v4105 = vrot.slane %v4098, 6
        %v4106 = vrot.slane %v4098, 7
        %v4107 = vperm.slane %v4098, 0
        %v4108 = vperm.slane %v4100, 0
        %v4109 = vperm.slane %v4101, 0
        %v4110 = vperm.slane %v4102, 0
        %v4111 = vperm.slane %v4103, 0
        %v4112 = vperm.slane %v4104, 0
        %v4113 = vperm.slane %v4105, 0
        %v4114 = vperm.slane %v4106, 0
        %4115 = vrot.lane.b32.xlu0 %v4107, 72
        %v4116 = vpop.permute.xlu0 %4115
        %4117 = vrot.lane.b32.xlu0 %v4108, 72
        %v4118 = vpop.permute.xlu0 %4117
        %4119 = vrot.lane.b32.xlu0 %v4109, 72
        %v4120 = vpop.permute.xlu0 %4119
        %4121 = vrot.lane.b32.xlu0 %v4110, 72
        %v4122 = vpop.permute.xlu0 %4121
        %4123 = vrot.lane.b32.xlu0 %v4111, 72
        %v4124 = vpop.permute.xlu0 %4123
        %4125 = vrot.lane.b32.xlu0 %v4112, 72
        %v4126 = vpop.permute.xlu0 %4125
        %4127 = vrot.lane.b32.xlu0 %v4113, 72
        %v4128 = vpop.permute.xlu0 %4127
        %4129 = vrot.lane.b32.xlu0 %v4114, 72
        %v4130 = vpop.permute.xlu0 %4129
        %4139 = vst.msk [vmem:[%s205 + $0x1e] sm:$0x1] %vm2363, %v4116
        %4140 = vst.msk [vmem:[%s205 + $0x3e] sm:$0x1] %vm2363, %v4118
        %4141 = vst.msk [vmem:[%s205 + $0x5e] sm:$0x1] %vm2363, %v4120
        %4142 = vst.msk [vmem:[%s205 + $0x7e] sm:$0x1] %vm2363, %v4122
        %4143 = vst.msk [vmem:[%s205 + $0x9e] sm:$0x1] %vm2363, %v4124
        %4144 = vst.msk [vmem:[%s205 + $0xbe] sm:$0x1] %vm2363, %v4126
        %4145 = vst.msk [vmem:[%s205 + $0xde] sm:$0x1] %vm2363, %v4128
        %4146 = vst.msk [vmem:[%s205 + $0xfe] sm:$0x1] %vm2363, %v4130
        %v4147 = vld [vmem:[#allocation4 + $0x40] sm:$0xff]
        %v4149 = vrot.slane %v4147, 1
        %v4150 = vrot.slane %v4147, 2
        %v4151 = vrot.slane %v4147, 3
        %v4152 = vrot.slane %v4147, 4
        %v4153 = vrot.slane %v4147, 5
        %v4154 = vrot.slane %v4147, 6
        %v4155 = vrot.slane %v4147, 7
        %v4156 = vperm.slane %v4147, 0
        %v4157 = vperm.slane %v4149, 0
        %v4158 = vperm.slane %v4150, 0
        %v4159 = vperm.slane %v4151, 0
        %v4160 = vperm.slane %v4152, 0
        %v4161 = vperm.slane %v4153, 0
        %v4162 = vperm.slane %v4154, 0
        %v4163 = vperm.slane %v4155, 0
        %4164 = vrot.lane.b32.xlu0 %v4156, 36
        %v4165 = vpop.permute.xlu0 %4164
        %4166 = vrot.lane.b32.xlu0 %v4157, 36
        %v4167 = vpop.permute.xlu0 %4166
        %4168 = vrot.lane.b32.xlu0 %v4158, 36
        %v4169 = vpop.permute.xlu0 %4168
        %4170 = vrot.lane.b32.xlu0 %v4159, 36
        %v4171 = vpop.permute.xlu0 %4170
        %4172 = vrot.lane.b32.xlu0 %v4160, 36
        %v4173 = vpop.permute.xlu0 %4172
        %4174 = vrot.lane.b32.xlu0 %v4161, 36
        %v4175 = vpop.permute.xlu0 %4174
        %4176 = vrot.lane.b32.xlu0 %v4162, 36
        %v4177 = vpop.permute.xlu0 %4176
        %4178 = vrot.lane.b32.xlu0 %v4163, 36
        %v4179 = vpop.permute.xlu0 %4178
        %4188 = vst.msk [vmem:[%s205 + $0x1f] sm:$0x1] %vm2363, %v4165
        %4189 = vst.msk [vmem:[%s205 + $0x3f] sm:$0x1] %vm2363, %v4167
        %4190 = vst.msk [vmem:[%s205 + $0x5f] sm:$0x1] %vm2363, %v4169
        %4191 = vst.msk [vmem:[%s205 + $0x7f] sm:$0x1] %vm2363, %v4171
        %4192 = vst.msk [vmem:[%s205 + $0x9f] sm:$0x1] %vm2363, %v4173
        %4193 = vst.msk [vmem:[%s205 + $0xbf] sm:$0x1] %vm2363, %v4175
        %4194 = vst.msk [vmem:[%s205 + $0xdf] sm:$0x1] %vm2363, %v4177
        %4195 = vst.msk [vmem:[%s205 + $0xff] sm:$0x1] %vm2363, %v4179
        %v4196 = vld [vmem:[%s215] sm:$0xff]
        %v4197 = vld [vmem:[%s215 + $0x8] sm:$0xff]
        %v4198 = vld [vmem:[%s215 + $0x10] sm:$0xff]
        %v4199 = vld [vmem:[%s215 + $0x18] sm:$0xff]
        %v4200 = vld [vmem:[%s215 + $0x20] sm:$0xff]
        %v4201 = vld [vmem:[%s215 + $0x28] sm:$0xff]
        %v4202 = vld [vmem:[%s215 + $0x30] sm:$0xff]
        %v4203 = vld [vmem:[%s215 + $0x38] sm:$0xff]
        %v4204 = vld [vmem:[%s215 + $0x40] sm:$0xff]
        %v4205 = vld [vmem:[%s215 + $0x48] sm:$0xff]
        %v4206 = vld [vmem:[%s215 + $0x50] sm:$0xff]
        %v4207 = vld [vmem:[%s215 + $0x58] sm:$0xff]
        %v4208 = vld [vmem:[%s215 + $0x60] sm:$0xff]
        %v4209 = vld [vmem:[%s215 + $0x68] sm:$0xff]
        %v4210 = vld [vmem:[%s215 + $0x70] sm:$0xff]
        %v4211 = vld [vmem:[%s215 + $0x78] sm:$0xff]
        %v4212 = vld [vmem:[%s215 + $0x80] sm:$0xff]
        %v4213 = vld [vmem:[%s215 + $0x88] sm:$0xff]
        %v4214 = vld [vmem:[%s215 + $0x90] sm:$0xff]
        %v4215 = vld [vmem:[%s215 + $0x98] sm:$0xff]
        %v4216 = vld [vmem:[%s215 + $0xa0] sm:$0xff]
        %v4217 = vld [vmem:[%s215 + $0xa8] sm:$0xff]
        %v4218 = vld [vmem:[%s215 + $0xb0] sm:$0xff]
        %v4219 = vld [vmem:[%s215 + $0xb8] sm:$0xff]
        %v4220 = vld [vmem:[%s215 + $0xc0] sm:$0xff]
        %v4221 = vld [vmem:[%s215 + $0xc8] sm:$0xff]
        %v4222 = vld [vmem:[%s215 + $0xd0] sm:$0xff]
        %v4223 = vld [vmem:[%s215 + $0xd8] sm:$0xff]
        %v4224 = vld [vmem:[%s215 + $0xe0] sm:$0xff]
        %v4225 = vld [vmem:[%s215 + $0xe8] sm:$0xff]
        %v4226 = vld [vmem:[%s215 + $0xf0] sm:$0xff]
        %v4227 = vld [vmem:[%s215 + $0xf8] sm:$0xff]
        %s4228 = scalar_lea.vmem %s205, 256 [#allocation5]
        %vm4229 = vcmask 261120
        %4230 = vst.msk [vmem:[%s4228] sm:$0xff] %vm4229, %v4196
        %4231 = vst.msk [vmem:[%s4228 + $0x8] sm:$0xff] %vm4229, %v4197
        %4232 = vst.msk [vmem:[%s4228 + $0x10] sm:$0xff] %vm4229, %v4198
        %4233 = vst.msk [vmem:[%s4228 + $0x18] sm:$0xff] %vm4229, %v4199
        %4234 = vst.msk [vmem:[%s4228 + $0x20] sm:$0xff] %vm4229, %v4200
        %4235 = vst.msk [vmem:[%s4228 + $0x28] sm:$0xff] %vm4229, %v4201
        %4236 = vst.msk [vmem:[%s4228 + $0x30] sm:$0xff] %vm4229, %v4202
        %4237 = vst.msk [vmem:[%s4228 + $0x38] sm:$0xff] %vm4229, %v4203
        %4238 = vst.msk [vmem:[%s4228 + $0x40] sm:$0xff] %vm4229, %v4204
        %4239 = vst.msk [vmem:[%s4228 + $0x48] sm:$0xff] %vm4229, %v4205
        %4240 = vst.msk [vmem:[%s4228 + $0x50] sm:$0xff] %vm4229, %v4206
        %4241 = vst.msk [vmem:[%s4228 + $0x58] sm:$0xff] %vm4229, %v4207
        %4242 = vst.msk [vmem:[%s4228 + $0x60] sm:$0xff] %vm4229, %v4208
        %4243 = vst.msk [vmem:[%s4228 + $0x68] sm:$0xff] %vm4229, %v4209
        %4244 = vst.msk [vmem:[%s4228 + $0x70] sm:$0xff] %vm4229, %v4210
        %4245 = vst.msk [vmem:[%s4228 + $0x78] sm:$0xff] %vm4229, %v4211
        %4246 = vst.msk [vmem:[%s4228 + $0x80] sm:$0xff] %vm4229, %v4212
        %4247 = vst.msk [vmem:[%s4228 + $0x88] sm:$0xff] %vm4229, %v4213
        %4248 = vst.msk [vmem:[%s4228 + $0x90] sm:$0xff] %vm4229, %v4214
        %4249 = vst.msk [vmem:[%s4228 + $0x98] sm:$0xff] %vm4229, %v4215
        %4250 = vst.msk [vmem:[%s4228 + $0xa0] sm:$0xff] %vm4229, %v4216
        %4251 = vst.msk [vmem:[%s4228 + $0xa8] sm:$0xff] %vm4229, %v4217
        %4252 = vst.msk [vmem:[%s4228 + $0xb0] sm:$0xff] %vm4229, %v4218
        %4253 = vst.msk [vmem:[%s4228 + $0xb8] sm:$0xff] %vm4229, %v4219
        %4254 = vst.msk [vmem:[%s4228 + $0xc0] sm:$0xff] %vm4229, %v4220
        %4255 = vst.msk [vmem:[%s4228 + $0xc8] sm:$0xff] %vm4229, %v4221
        %4256 = vst.msk [vmem:[%s4228 + $0xd0] sm:$0xff] %vm4229, %v4222
        %4257 = vst.msk [vmem:[%s4228 + $0xd8] sm:$0xff] %vm4229, %v4223
        %4258 = vst.msk [vmem:[%s4228 + $0xe0] sm:$0xff] %vm4229, %v4224
        %4259 = vst.msk [vmem:[%s4228 + $0xe8] sm:$0xff] %vm4229, %v4225
        %4260 = vst.msk [vmem:[%s4228 + $0xf0] sm:$0xff] %vm4229, %v4226
        %4261 = vst.msk [vmem:[%s4228 + $0xf8] sm:$0xff] %vm4229, %v4227
        %s4262 = sand.u32 %s120, 1
        %s4263 = scalar_lea.sflag [#allocation6], %s4262
        %s4264 = sand.u32 %s120, 1
        %s4265 = smul.addr %s4264, 512
        %s4266 = scalar_lea.vmem [#allocation5], %s4265
        // Predicated region
        $region37: #{tpu_custom_call.1} parent=35 // pred_check
          %p4267 = pneg %p130
        $region38: #{tpu_custom_call.1} parent=35 // pred_check_branch
          %4269 = sbr.rel (%p4267) target = $region40
        $region39: #{tpu_custom_call.1} parent=35 // pred_region
          %4271 = vsyncadd %s4263, 0
          %s4272 = smul.addr %s18, 64
          %s4273 = smul.addr %s4272, 8
          %s4274 = scalar_lea.hbm %s4, %s4273
          %s4275 = sshll.u32 %s4266, 4
          %s4276 = int_to_ptr.vmem [resolvable:$true] %s4275
          %s4277 = sshll.u32 %s4274, 4
          %s4278 = int_to_ptr.hbm [resolvable:$true] %s4277
          %4283 = dma.vmem_to_hbm [thread:$0]  %s4276, 8192, %s4278, %s4263, 128, 128, 8
        $region40: #{tpu_custom_call.1} parent=35 // pred_fallthru
          _
      $region36: #{tpu_custom_call.1} parent=5 // pred_fallthru
        _
      %p4284 = scmp.le.s32.totalorder 2, %s13
      // Predicated region
      $region41: #{tpu_custom_call.1} parent=5 // pred_check
        %p4285 = pneg %p4284
      $region42: #{tpu_custom_call.1} parent=5 // pred_check_branch
        %4287 = sbr.rel (%p4285) target = $region44
      $region43: #{tpu_custom_call.1} parent=5 // pred_region
        %s4288 = ssub.s32 %s13, 2
        // Predicated region
        $region45: #{tpu_custom_call.1} parent=43 // pred_check
          %p4289 = pneg %p136
        $region46: #{tpu_custom_call.1} parent=43 // pred_check_branch
          %4291 = sbr.rel (%p4289) target = $region48
        $region47: #{tpu_custom_call.1} parent=43 // pred_region
          %s4292 = sand.u32 %s121, 1
          %s4293 = scalar_lea.sflag [#allocation6], %s4292
          %s4294 = sand.u32 %s121, 1
          %s4295 = smul.addr %s4294, 512
          %s4296 = scalar_lea.vmem [#allocation5], %s4295
          %4298 = dma.done %s4293, 8192
        $region48: #{tpu_custom_call.1} parent=43 // pred_fallthru
          _
      $region44: #{tpu_custom_call.1} parent=5 // pred_fallthru
        _
    $region6: #{tpu_custom_call.1} parent=1 // loop_footer
      %s17 = sadd.s32 1, %s13
    $region7: #{tpu_custom_call.1} parent=1 // loop_footer_branch
      %12 = sbr.rel target = $region3
    $region8: #{tpu_custom_call.1} parent=1 // loop_exit
      _
    %4299 = vsyncpa [#allocation6], 1
    %s4300 = scalar_lea.sflag [#allocation6], 1
    %4301 = vsyncpa %s4300, 1

</llo_original>
